<compile_context>
chip_gen: v6e
topology: v6e:2x2x1
jax: 0.10.0
libtpu: 0.0.40
codegen_flags: <defaults>
</compile_context>

<pallas_src>
from functools import partial

import numpy as np
import jax
import jax.numpy as jnp
from jax.experimental import pallas as pl
from jax.experimental.pallas import tpu as pltpu


_SUB = 16  # batch-row quantum (bf16 sublane tile) -> clean in-kernel reshapes


# ------------------------------ fused kernel ------------------------------

def _cnn_kernel(xps_ref, a1_ref, b1_ref, a2_ref, b2_ref, g_ref, bf1_ref,
                w2_ref, bf2_ref, w3_ref, bf3_ref, o_ref,
                x1_scr, x2_scr, x3_scr, *, nb):
    f32 = jnp.float32
    cdt = x1_scr.dtype                      # MXU feed dtype (bfloat16)

    # ---- conv1 im2row, built fully in VMEM with static slices ------------
    #   xps_ref: (2, 10, nb, 60) = (h_pad%2, h_pad//2, n, w_pad*ci)
    #   x1 rows = (h%2, h//2, n); cols = (dy, w_pad, ci) -> (16*nb, 300)
    for a in range(2):                      # output row parity h % 2
        for dy in range(5):
            hp = a + dy                     # first padded input row of window
            x1_scr[a * 8:(a + 1) * 8, :, dy * 60:(dy + 1) * 60] = (
                xps_ref[hp % 2, hp // 2:hp // 2 + 8])
    x1 = x1_scr[...].reshape(16 * nb, 300)

    # ---- conv1 (5x5, pad 2): ONE MXU matmul (K=300) + bias + ReLU ---------
    y1 = jnp.dot(x1, a1_ref[...], preferred_element_type=f32) + b1_ref[...]
    y1 = jnp.maximum(y1, 0.0)               # (16*nb, 96), cols = (w%2, w//2, co)

    # ---- MaxPool2d(2,2) #1: max of 4 statically sliced quadrants ----------
    nh = 8 * nb
    h1 = jnp.maximum(jnp.maximum(y1[:nh, :48], y1[:nh, 48:]),
                     jnp.maximum(y1[nh:, :48], y1[nh:, 48:]))
    h1 = h1.astype(cdt).reshape(8, nb, 48)  # rows (i, n), cols (j, ci)

    # ---- conv2 im2row: rows (i2%2, i2//2, n); cols (dy, j_in, ci) ---------
    x2_scr[0, :, 0:48] = jnp.zeros((nb, 48), cdt)     # i_in = -1 (top pad)
    x2_scr[7, :, 96:144] = jnp.zeros((nb, 48), cdt)   # i_in =  8 (bottom pad)
    for p in range(2):
        for u in range(4):
            r = p * 4 + u
            for dy in range(3):
                i_in = 2 * u + p + dy - 1
                if 0 <= i_in < 8:
                    x2_scr[r, :, dy * 48:(dy + 1) * 48] = h1[i_in]
    x2 = x2_scr[...].reshape(8 * nb, 144)

    # ---- conv2 (3x3, pad 1): ONE MXU matmul (K=144) + bias + ReLU ---------
    y2 = jnp.dot(x2, a2_ref[...], preferred_element_type=f32) + b2_ref[...]
    y2 = jnp.maximum(y2, 0.0)               # (8*nb, 24), cols = (j2%2, j2//2, co)

    # ---- MaxPool2d(2,2) #2 -> rows (u, n), cols (v, co) -------------------
    nq = 4 * nb
    h2 = jnp.maximum(jnp.maximum(y2[:nq, :12], y2[:nq, 12:]),
                     jnp.maximum(y2[nq:, :12], y2[nq:, 12:]))
    h2 = h2.astype(cdt).reshape(4, nb, 12)

    # ---- flatten (torch NCHW order folded into G) + fc1 + ReLU ------------
    for u in range(4):
        x3_scr[:, u * 12:(u + 1) * 12] = h2[u]
    z1 = (jnp.dot(x3_scr[...], g_ref[...], preferred_element_type=f32)
          + bf1_ref[...])
    z1 = jnp.maximum(z1, 0.0).astype(cdt)   # (nb, 128), lane-dense
    # TODO(synk): Dropout(0.5) is inference-mode identity (no train-time mask).

    # ---- fc2 + ReLU --------------------------------------------------------
    z2 = (jnp.dot(z1, w2_ref[...], preferred_element_type=f32) + bf2_ref[...])
    z2 = jnp.maximum(z2, 0.0).astype(cdt)   # (nb, 32)

    # ---- fc3 + numerically stable sigmoid (exp + reciprocal on the EUP) ---
    z3 = jnp.dot(z2, w3_ref[...], preferred_element_type=f32) + bf3_ref[...]
    e = jnp.exp(-jnp.abs(z3))
    r = pl.reciprocal(1.0 + e, approx=True)
    sig = jnp.where(z3 >= 0.0, r, e * r)
    o_ref[...] = jnp.minimum(jnp.maximum(sig, 0.0), 1.0)


# ------------------------------- JAX glue ---------------------------------

def _build_xps(x_nchw, npad, dtype):
    """NCHW input -> (h_pad%2, h_pad//2, n, w_pad*ci) padded layout."""
    n = x_nchw.shape[0]
    x = jnp.pad(x_nchw, ((0, npad - n), (0, 0), (0, 0), (0, 0)))
    xh = jnp.transpose(x, (2, 0, 3, 1))                    # (16, Np, 16, 3)
    xp = jnp.pad(xh, ((2, 2), (0, 0), (2, 2), (0, 0)))     # (20, Np, 20, 3)
    xp = xp.reshape(20, npad, 60).reshape(10, 2, npad, 60)
    return jnp.transpose(xp, (1, 0, 2, 3)).astype(dtype)   # (2, 10, Np, 60)


def pack_params(params, compute_dtype=jnp.bfloat16):
    """One-time, batch-size-independent weight preprocessing."""
    w1, b1 = params["w1"], params["b1"]          # (5,5,3,6) HWIO, (6,)
    w2, b2 = params["w2"], params["b2"]          # (3,3,6,3) HWIO, (3,)
    wf1, bf1 = params["wf1"], params["bf1"]      # (48,128), (128,)
    wf2, bf2 = params["wf2"], params["bf2"]      # (128,32), (32,)
    wf3, bf3 = params["wf3"], params["bf3"]      # (32,2),  (2,)

    # conv1: fold dx taps + (w%2, w//2, co) col ordering; merge dy taps -> (300, 96)
    dx = np.arange(5).reshape(5, 1, 1, 1)
    wp = np.arange(20).reshape(1, 20, 1, 1)
    bb = np.arange(2).reshape(1, 1, 2, 1)
    jj = np.arange(8).reshape(1, 1, 1, 8)
    m1 = (wp == 2 * jj + bb + dx).astype(np.float32)         # (dx, w, b, j)
    a1 = jnp.einsum("xwbj,yxio->ywibjo", m1, w1).reshape(300, 96)
    b1r = jnp.tile(b1, 16).reshape(1, 96)

    # conv2: fold dx taps + (j2%2, j2//2, co) col ordering; merge dy taps -> (144, 24)
    dx3 = np.arange(3).reshape(3, 1, 1, 1)
    ji = np.arange(8).reshape(1, 8, 1, 1)
    qq = np.arange(2).reshape(1, 1, 2, 1)
    vv = np.arange(4).reshape(1, 1, 1, 4)
    m2 = (ji == 2 * vv + qq + dx3 - 1).astype(np.float32)    # (dx, j_in, q, v)
    a2 = jnp.einsum("xjqv,yxio->yjiqvo", m2, w2).reshape(144, 24)
    b2r = jnp.tile(b2, 8).reshape(1, 24)

    # fc1: permute rows so the kernel's (u, v, co) flatten order matches the
    # torch NCHW flatten index co*16 + u*4 + v.
    perm = np.array([co * 16 + u * 4 + v
                     for u in range(4) for v in range(4) for co in range(3)],
                    np.int32)
    g = wf1[perm, :]                                          # (48, 128)

    cd = compute_dtype
    return dict(
        A1=a1.astype(cd), b1r=b1r,
        A2=a2.astype(cd), b2r=b2r,
        G=g.astype(cd), bf1=bf1.reshape(1, 128),
        W2=wf2.astype(cd), bf2=bf2.reshape(1, 32),
        W3=wf3.astype(cd), bf3=bf3.reshape(1, 2),
    )


def cnn_forward(packed, x_nchw, *, block_n=64):
    n = x_nchw.shape[0]
    cd = packed["A1"].dtype

    # batch block size: multiple of 16 (clean bf16 sublane tiling / reshapes)
    if n <= block_n:
        nb = -(-n // _SUB) * _SUB
    else:
        nb = block_n
    npad = -(-n // nb) * nb

    xps = _build_xps(x_nchw, npad, cd)        # (2, 10, Np, 60)

    args = (xps, packed["A1"], packed["b1r"], packed["A2"], packed["b2r"],
            packed["G"], packed["bf1"], packed["W2"], packed["bf2"],
            packed["W3"], packed["bf3"])

    def resident(a):
        # Full-array block with a constant index map: stays VMEM-resident,
        # not re-DMA'd across grid steps.
        nd = a.ndim
        return pl.BlockSpec(a.shape, lambda i, _nd=nd: (0,) * _nd)

    out = pl.pallas_call(
        partial(_cnn_kernel, nb=nb),
        out_shape=jax.ShapeDtypeStruct((npad, 2), jnp.float32),
        grid=(npad // nb,),
        in_specs=[pl.BlockSpec((2, 10, nb, 60), lambda i: (0, 0, i, 0))]
                 + [resident(a) for a in args[1:]],
        out_specs=pl.BlockSpec((nb, 2), lambda i: (i, 0)),
        scratch_shapes=[pltpu.VMEM((16, nb, 300), cd),   # conv1 im2row
                        pltpu.VMEM((8, nb, 144), cd),    # conv2 im2row
                        pltpu.VMEM((nb, 48), cd)],       # flattened features
        compiler_params=pltpu.CompilerParams(
            dimension_semantics=("parallel",)),
    )(*args)
    return out[:n]


def init_params(key):
    ks = jax.random.split(key, 10)

    def u(k, shape, fan_in):
        lim = 1.0 / jnp.sqrt(float(fan_in))
        return jax.random.uniform(k, shape, jnp.float32, -lim, lim)

    return {
        # conv1: Conv2d(3, 6, 5, padding=2) -> HWIO (5,5,3,6)
        "w1": u(ks[0], (5, 5, 3, 6), 5 * 5 * 3),
        "b1": u(ks[1], (6,), 5 * 5 * 3),
        # conv2: Conv2d(6, 3, 3, padding=1) -> HWIO (3,3,6,3)
        "w2": u(ks[2], (3, 3, 6, 3), 3 * 3 * 6),
        "b2": u(ks[3], (3,), 3 * 3 * 6),
        # fc head: 48 -> 128 -> 32 -> 2
        "wf1": u(ks[4], (48, 128), 48), "bf1": u(ks[5], (128,), 48),
        "wf2": u(ks[6], (128, 32), 128), "bf2": u(ks[7], (32,), 128),
        "wf3": u(ks[8], (32, 2), 32), "bf3": u(ks[9], (2,), 32),
    }


if __name__ == "__main__":
    key = jax.random.PRNGKey(0)
    kp, kx = jax.random.split(key)
    params = init_params(kp)
    # Input matches torch NCHW: (batch=2, channels=3, 16, 16)
    x = jax.random.normal(kx, (2, 3, 16, 16), jnp.float32)

    packed = pack_params(params)              # one-time, batch-size independent
    out = jax.jit(cnn_forward)(packed, x)
    jax.block_until_ready(out)

    assert out.shape == (2, 2), out.shape
    assert bool(jnp.all((out >= 0.0) & (out <= 1.0)))
    print("KERNEL_OK")
</pallas_src>

<mosaic_0001>
module attributes {stable_mosaic.version = 11 : i64} {
  func.func @_cnn_kernel(%arg0: i32, %arg1: memref<2x10x16x60xbf16, #tpu.memory_space<vmem>>, %arg2: memref<300x96xbf16, #tpu.memory_space<vmem>>, %arg3: memref<1x96xf32, #tpu.memory_space<vmem>>, %arg4: memref<144x24xbf16, #tpu.memory_space<vmem>>, %arg5: memref<1x24xf32, #tpu.memory_space<vmem>>, %arg6: memref<48x128xbf16, #tpu.memory_space<vmem>>, %arg7: memref<1x128xf32, #tpu.memory_space<vmem>>, %arg8: memref<128x32xbf16, #tpu.memory_space<vmem>>, %arg9: memref<1x32xf32, #tpu.memory_space<vmem>>, %arg10: memref<32x2xbf16, #tpu.memory_space<vmem>>, %arg11: memref<1x2xf32, #tpu.memory_space<vmem>>, %arg12: memref<16x2xf32, #tpu.memory_space<vmem>>, %arg13: memref<16x16x300xbf16, #tpu.memory_space<vmem>>, %arg14: memref<8x16x144xbf16, #tpu.memory_space<vmem>>, %arg15: memref<16x48xbf16, #tpu.memory_space<vmem>>) attributes {dimension_semantics = [#tpu.dimension_semantics<parallel>], iteration_bounds = array<i64: 1>, scalar_prefetch = 0 : i64, scratch_operands = 3 : i64, tpu.core_type = #tpu.core_type<tc>, window_params = [{transform_indices = @transform_0, window_bounds = array<i64: 2, 10, 16, 60>}, {pipeline_mode = #tpu.pipeline_mode<synchronous>, transform_indices = @transform_1, window_bounds = array<i64: 300, 96>}, {pipeline_mode = #tpu.pipeline_mode<synchronous>, transform_indices = @transform_2, window_bounds = array<i64: 1, 96>}, {pipeline_mode = #tpu.pipeline_mode<synchronous>, transform_indices = @transform_3, window_bounds = array<i64: 144, 24>}, {pipeline_mode = #tpu.pipeline_mode<synchronous>, transform_indices = @transform_4, window_bounds = array<i64: 1, 24>}, {pipeline_mode = #tpu.pipeline_mode<synchronous>, transform_indices = @transform_5, window_bounds = array<i64: 48, 128>}, {pipeline_mode = #tpu.pipeline_mode<synchronous>, transform_indices = @transform_6, window_bounds = array<i64: 1, 128>}, {pipeline_mode = #tpu.pipeline_mode<synchronous>, transform_indices = @transform_7, window_bounds = array<i64: 128, 32>}, {pipeline_mode = #tpu.pipeline_mode<synchronous>, transform_indices = @transform_8, window_bounds = array<i64: 1, 32>}, {pipeline_mode = #tpu.pipeline_mode<synchronous>, transform_indices = @transform_9, window_bounds = array<i64: 32, 2>}, {pipeline_mode = #tpu.pipeline_mode<synchronous>, transform_indices = @transform_10, window_bounds = array<i64: 1, 2>}, {transform_indices = @transform_11, window_bounds = array<i64: 16, 2>}]} {
    %c0 = arith.constant 0 : index
    %c0_0 = arith.constant 0 : index
    %c0_1 = arith.constant 0 : index
    %c0_2 = arith.constant 0 : index
    %0 = vector.load %arg1[%c0, %c0_0, %c0_1, %c0_2] : memref<2x10x16x60xbf16, #tpu.memory_space<vmem>>, vector<1x8x16x60xbf16>
    %1 = vector.shape_cast %0 : vector<1x8x16x60xbf16> to vector<8x16x60xbf16>
    %c0_3 = arith.constant 0 : index
    %c0_4 = arith.constant 0 : index
    %c0_5 = arith.constant 0 : index
    %2 = vector.load %arg13[%c0_3, %c0_4, %c0_5] : memref<16x16x300xbf16, #tpu.memory_space<vmem>>, vector<8x16x60xbf16>
    tpu.vector_store %arg13[%c0_3, %c0_4, %c0_5], %1 {strides = array<i32>} : memref<16x16x300xbf16, #tpu.memory_space<vmem>>, vector<8x16x60xbf16>,
    %c1 = arith.constant 1 : index
    %c0_6 = arith.constant 0 : index
    %c0_7 = arith.constant 0 : index
    %c0_8 = arith.constant 0 : index
    %3 = vector.load %arg1[%c1, %c0_6, %c0_7, %c0_8] : memref<2x10x16x60xbf16, #tpu.memory_space<vmem>>, vector<1x8x16x60xbf16>
    %4 = vector.shape_cast %3 : vector<1x8x16x60xbf16> to vector<8x16x60xbf16>
    %c0_9 = arith.constant 0 : index
    %c0_10 = arith.constant 0 : index
    %c60 = arith.constant 60 : index
    %5 = vector.load %arg13[%c0_9, %c0_10, %c60] : memref<16x16x300xbf16, #tpu.memory_space<vmem>>, vector<8x16x60xbf16>
    tpu.vector_store %arg13[%c0_9, %c0_10, %c60], %4 {strides = array<i32>} : memref<16x16x300xbf16, #tpu.memory_space<vmem>>, vector<8x16x60xbf16>,
    %c0_11 = arith.constant 0 : index
    %c1_12 = arith.constant 1 : index
    %c0_13 = arith.constant 0 : index
    %c0_14 = arith.constant 0 : index
    %6 = vector.load %arg1[%c0_11, %c1_12, %c0_13, %c0_14] : memref<2x10x16x60xbf16, #tpu.memory_space<vmem>>, vector<1x8x16x60xbf16>
    %7 = vector.shape_cast %6 : vector<1x8x16x60xbf16> to vector<8x16x60xbf16>
    %c0_15 = arith.constant 0 : index
    %c0_16 = arith.constant 0 : index
    %c120 = arith.constant 120 : index
    %8 = vector.load %arg13[%c0_15, %c0_16, %c120] : memref<16x16x300xbf16, #tpu.memory_space<vmem>>, vector<8x16x60xbf16>
    tpu.vector_store %arg13[%c0_15, %c0_16, %c120], %7 {strides = array<i32>} : memref<16x16x300xbf16, #tpu.memory_space<vmem>>, vector<8x16x60xbf16>,
    %c1_17 = arith.constant 1 : index
    %c1_18 = arith.constant 1 : index
    %c0_19 = arith.constant 0 : index
    %c0_20 = arith.constant 0 : index
    %9 = vector.load %arg1[%c1_17, %c1_18, %c0_19, %c0_20] : memref<2x10x16x60xbf16, #tpu.memory_space<vmem>>, vector<1x8x16x60xbf16>
    %10 = vector.shape_cast %9 : vector<1x8x16x60xbf16> to vector<8x16x60xbf16>
    %c0_21 = arith.constant 0 : index
    %c0_22 = arith.constant 0 : index
    %c180 = arith.constant 180 : index
    %11 = vector.load %arg13[%c0_21, %c0_22, %c180] : memref<16x16x300xbf16, #tpu.memory_space<vmem>>, vector<8x16x60xbf16>
    tpu.vector_store %arg13[%c0_21, %c0_22, %c180], %10 {strides = array<i32>} : memref<16x16x300xbf16, #tpu.memory_space<vmem>>, vector<8x16x60xbf16>,
    %c0_23 = arith.constant 0 : index
    %c2 = arith.constant 2 : index
    %c0_24 = arith.constant 0 : index
    %c0_25 = arith.constant 0 : index
    %12 = vector.load %arg1[%c0_23, %c2, %c0_24, %c0_25] : memref<2x10x16x60xbf16, #tpu.memory_space<vmem>>, vector<1x8x16x60xbf16>
    %13 = vector.shape_cast %12 : vector<1x8x16x60xbf16> to vector<8x16x60xbf16>
    %c0_26 = arith.constant 0 : index
    %c0_27 = arith.constant 0 : index
    %c240 = arith.constant 240 : index
    %14 = vector.load %arg13[%c0_26, %c0_27, %c240] : memref<16x16x300xbf16, #tpu.memory_space<vmem>>, vector<8x16x60xbf16>
    tpu.vector_store %arg13[%c0_26, %c0_27, %c240], %13 {strides = array<i32>} : memref<16x16x300xbf16, #tpu.memory_space<vmem>>, vector<8x16x60xbf16>,
    %c1_28 = arith.constant 1 : index
    %c0_29 = arith.constant 0 : index
    %c0_30 = arith.constant 0 : index
    %c0_31 = arith.constant 0 : index
    %15 = vector.load %arg1[%c1_28, %c0_29, %c0_30, %c0_31] : memref<2x10x16x60xbf16, #tpu.memory_space<vmem>>, vector<1x8x16x60xbf16>
    %16 = vector.shape_cast %15 : vector<1x8x16x60xbf16> to vector<8x16x60xbf16>
    %c8 = arith.constant 8 : index
    %c0_32 = arith.constant 0 : index
    %c0_33 = arith.constant 0 : index
    %17 = vector.load %arg13[%c8, %c0_32, %c0_33] : memref<16x16x300xbf16, #tpu.memory_space<vmem>>, vector<8x16x60xbf16>
    tpu.vector_store %arg13[%c8, %c0_32, %c0_33], %16 {strides = array<i32>} : memref<16x16x300xbf16, #tpu.memory_space<vmem>>, vector<8x16x60xbf16>,
    %c0_34 = arith.constant 0 : index
    %c1_35 = arith.constant 1 : index
    %c0_36 = arith.constant 0 : index
    %c0_37 = arith.constant 0 : index
    %18 = vector.load %arg1[%c0_34, %c1_35, %c0_36, %c0_37] : memref<2x10x16x60xbf16, #tpu.memory_space<vmem>>, vector<1x8x16x60xbf16>
    %19 = vector.shape_cast %18 : vector<1x8x16x60xbf16> to vector<8x16x60xbf16>
    %c8_38 = arith.constant 8 : index
    %c0_39 = arith.constant 0 : index
    %c60_40 = arith.constant 60 : index
    %20 = vector.load %arg13[%c8_38, %c0_39, %c60_40] : memref<16x16x300xbf16, #tpu.memory_space<vmem>>, vector<8x16x60xbf16>
    tpu.vector_store %arg13[%c8_38, %c0_39, %c60_40], %19 {strides = array<i32>} : memref<16x16x300xbf16, #tpu.memory_space<vmem>>, vector<8x16x60xbf16>,
    %c1_41 = arith.constant 1 : index
    %c1_42 = arith.constant 1 : index
    %c0_43 = arith.constant 0 : index
    %c0_44 = arith.constant 0 : index
    %21 = vector.load %arg1[%c1_41, %c1_42, %c0_43, %c0_44] : memref<2x10x16x60xbf16, #tpu.memory_space<vmem>>, vector<1x8x16x60xbf16>
    %22 = vector.shape_cast %21 : vector<1x8x16x60xbf16> to vector<8x16x60xbf16>
    %c8_45 = arith.constant 8 : index
    %c0_46 = arith.constant 0 : index
    %c120_47 = arith.constant 120 : index
    %23 = vector.load %arg13[%c8_45, %c0_46, %c120_47] : memref<16x16x300xbf16, #tpu.memory_space<vmem>>, vector<8x16x60xbf16>
    tpu.vector_store %arg13[%c8_45, %c0_46, %c120_47], %22 {strides = array<i32>} : memref<16x16x300xbf16, #tpu.memory_space<vmem>>, vector<8x16x60xbf16>,
    %c0_48 = arith.constant 0 : index
    %c2_49 = arith.constant 2 : index
    %c0_50 = arith.constant 0 : index
    %c0_51 = arith.constant 0 : index
    %24 = vector.load %arg1[%c0_48, %c2_49, %c0_50, %c0_51] : memref<2x10x16x60xbf16, #tpu.memory_space<vmem>>, vector<1x8x16x60xbf16>
    %25 = vector.shape_cast %24 : vector<1x8x16x60xbf16> to vector<8x16x60xbf16>
    %c8_52 = arith.constant 8 : index
    %c0_53 = arith.constant 0 : index
    %c180_54 = arith.constant 180 : index
    %26 = vector.load %arg13[%c8_52, %c0_53, %c180_54] : memref<16x16x300xbf16, #tpu.memory_space<vmem>>, vector<8x16x60xbf16>
    tpu.vector_store %arg13[%c8_52, %c0_53, %c180_54], %25 {strides = array<i32>} : memref<16x16x300xbf16, #tpu.memory_space<vmem>>, vector<8x16x60xbf16>,
    %c1_55 = arith.constant 1 : index
    %c2_56 = arith.constant 2 : index
    %c0_57 = arith.constant 0 : index
    %c0_58 = arith.constant 0 : index
    %27 = vector.load %arg1[%c1_55, %c2_56, %c0_57, %c0_58] : memref<2x10x16x60xbf16, #tpu.memory_space<vmem>>, vector<1x8x16x60xbf16>
    %28 = vector.shape_cast %27 : vector<1x8x16x60xbf16> to vector<8x16x60xbf16>
    %c8_59 = arith.constant 8 : index
    %c0_60 = arith.constant 0 : index
    %c240_61 = arith.constant 240 : index
    %29 = vector.load %arg13[%c8_59, %c0_60, %c240_61] : memref<16x16x300xbf16, #tpu.memory_space<vmem>>, vector<8x16x60xbf16>
    tpu.vector_store %arg13[%c8_59, %c0_60, %c240_61], %28 {strides = array<i32>} : memref<16x16x300xbf16, #tpu.memory_space<vmem>>, vector<8x16x60xbf16>,
    %c0_62 = arith.constant 0 : index
    %c0_63 = arith.constant 0 : index
    %c0_64 = arith.constant 0 : index
    %30 = vector.load %arg13[%c0_62, %c0_63, %c0_64] : memref<16x16x300xbf16, #tpu.memory_space<vmem>>, vector<16x16x300xbf16>
    %31 = vector.shape_cast %30 : vector<16x16x300xbf16> to vector<256x300xbf16>
    %c0_65 = arith.constant 0 : index
    %c0_66 = arith.constant 0 : index
    %32 = vector.load %arg2[%c0_65, %c0_66] : memref<300x96xbf16, #tpu.memory_space<vmem>>, vector<300x96xbf16>
    %cst = arith.constant dense<0.000000e+00> : vector<256x96xf32>
    %33 = tpu.matmul %31, %32, %cst {dimension_numbers = #tpu.dot_dimension_numbers<[1], [0], [0], [1], [0, 0, 1, 1], [], []>} : vector<256x300xbf16>, vector<300x96xbf16>, vector<256x96xf32> -> vector<256x96xf32>
    %c0_67 = arith.constant 0 : index
    %c0_68 = arith.constant 0 : index
    %34 = vector.load %arg3[%c0_67, %c0_68] : memref<1x96xf32, #tpu.memory_space<vmem>>, vector<1x96xf32>
    %35 = vector.broadcast %34 : vector<1x96xf32> to vector<256x96xf32>
    %36 = arith.addf %33, %35 : vector<256x96xf32>
    %cst_69 = arith.constant 0.000000e+00 : f32
    %37 = vector.broadcast %cst_69 : f32 to vector<256x96xf32>
    %38 = arith.maximumf %36, %37 : vector<256x96xf32>
    %39 = vector.extract_strided_slice %38 {offsets = [0, 0], sizes = [128, 48], strides = [1, 1]} : vector<256x96xf32> to vector<128x48xf32>
    %40 = vector.extract_strided_slice %38 {offsets = [0, 48], sizes = [128, 48], strides = [1, 1]} : vector<256x96xf32> to vector<128x48xf32>
    %41 = arith.maximumf %39, %40 : vector<128x48xf32>
    %42 = vector.extract_strided_slice %38 {offsets = [128, 0], sizes = [128, 48], strides = [1, 1]} : vector<256x96xf32> to vector<128x48xf32>
    %43 = vector.extract_strided_slice %38 {offsets = [128, 48], sizes = [128, 48], strides = [1, 1]} : vector<256x96xf32> to vector<128x48xf32>
    %44 = arith.maximumf %42, %43 : vector<128x48xf32>
    %45 = arith.maximumf %41, %44 : vector<128x48xf32>
    %46 = arith.truncf %45 : vector<128x48xf32> to vector<128x48xbf16>
    %47 = vector.shape_cast %46 : vector<128x48xbf16> to vector<8x16x48xbf16>
    %cst_70 = arith.constant 0.000000e+00 : bf16
    %48 = vector.broadcast %cst_70 : bf16 to vector<16x48xbf16>
    %c0_71 = arith.constant 0 : index
    %c0_72 = arith.constant 0 : index
    %c0_73 = arith.constant 0 : index
    %49 = vector.load %arg14[%c0_71, %c0_72, %c0_73] : memref<8x16x144xbf16, #tpu.memory_space<vmem>>, vector<1x16x48xbf16>
    %50 = vector.shape_cast %49 : vector<1x16x48xbf16> to vector<16x48xbf16>
    %51 = vector.shape_cast %48 : vector<16x48xbf16> to vector<1x16x48xbf16>
    tpu.vector_store %arg14[%c0_71, %c0_72, %c0_73], %51 {strides = array<i32>} : memref<8x16x144xbf16, #tpu.memory_space<vmem>>, vector<1x16x48xbf16>,
    %cst_74 = arith.constant 0.000000e+00 : bf16
    %52 = vector.broadcast %cst_74 : bf16 to vector<16x48xbf16>
    %c7 = arith.constant 7 : index
    %c0_75 = arith.constant 0 : index
    %c96 = arith.constant 96 : index
    %53 = vector.load %arg14[%c7, %c0_75, %c96] : memref<8x16x144xbf16, #tpu.memory_space<vmem>>, vector<1x16x48xbf16>
    %54 = vector.shape_cast %53 : vector<1x16x48xbf16> to vector<16x48xbf16>
    %55 = vector.shape_cast %52 : vector<16x48xbf16> to vector<1x16x48xbf16>
    tpu.vector_store %arg14[%c7, %c0_75, %c96], %55 {strides = array<i32>} : memref<8x16x144xbf16, #tpu.memory_space<vmem>>, vector<1x16x48xbf16>,
    %56 = vector.extract_strided_slice %47 {offsets = [0, 0, 0], sizes = [1, 16, 48], strides = [1, 1, 1]} : vector<8x16x48xbf16> to vector<1x16x48xbf16>
    %57 = vector.shape_cast %56 : vector<1x16x48xbf16> to vector<16x48xbf16>
    %c0_76 = arith.constant 0 : index
    %c0_77 = arith.constant 0 : index
    %c48 = arith.constant 48 : index
    %58 = vector.load %arg14[%c0_76, %c0_77, %c48] : memref<8x16x144xbf16, #tpu.memory_space<vmem>>, vector<1x16x48xbf16>
    %59 = vector.shape_cast %58 : vector<1x16x48xbf16> to vector<16x48xbf16>
    %60 = vector.shape_cast %57 : vector<16x48xbf16> to vector<1x16x48xbf16>
    tpu.vector_store %arg14[%c0_76, %c0_77, %c48], %60 {strides = array<i32>} : memref<8x16x144xbf16, #tpu.memory_space<vmem>>, vector<1x16x48xbf16>,
    %61 = vector.extract_strided_slice %47 {offsets = [1, 0, 0], sizes = [1, 16, 48], strides = [1, 1, 1]} : vector<8x16x48xbf16> to vector<1x16x48xbf16>
    %62 = vector.shape_cast %61 : vector<1x16x48xbf16> to vector<16x48xbf16>
    %c0_78 = arith.constant 0 : index
    %c0_79 = arith.constant 0 : index
    %c96_80 = arith.constant 96 : index
    %63 = vector.load %arg14[%c0_78, %c0_79, %c96_80] : memref<8x16x144xbf16, #tpu.memory_space<vmem>>, vector<1x16x48xbf16>
    %64 = vector.shape_cast %63 : vector<1x16x48xbf16> to vector<16x48xbf16>
    %65 = vector.shape_cast %62 : vector<16x48xbf16> to vector<1x16x48xbf16>
    tpu.vector_store %arg14[%c0_78, %c0_79, %c96_80], %65 {strides = array<i32>} : memref<8x16x144xbf16, #tpu.memory_space<vmem>>, vector<1x16x48xbf16>,
    %66 = vector.extract_strided_slice %47 {offsets = [1, 0, 0], sizes = [1, 16, 48], strides = [1, 1, 1]} : vector<8x16x48xbf16> to vector<1x16x48xbf16>
    %67 = vector.shape_cast %66 : vector<1x16x48xbf16> to vector<16x48xbf16>
    %c1_81 = arith.constant 1 : index
    %c0_82 = arith.constant 0 : index
    %c0_83 = arith.constant 0 : index
    %68 = vector.load %arg14[%c1_81, %c0_82, %c0_83] : memref<8x16x144xbf16, #tpu.memory_space<vmem>>, vector<1x16x48xbf16>
    %69 = vector.shape_cast %68 : vector<1x16x48xbf16> to vector<16x48xbf16>
    %70 = vector.shape_cast %67 : vector<16x48xbf16> to vector<1x16x48xbf16>
    tpu.vector_store %arg14[%c1_81, %c0_82, %c0_83], %70 {strides = array<i32>} : memref<8x16x144xbf16, #tpu.memory_space<vmem>>, vector<1x16x48xbf16>,
    %71 = vector.extract_strided_slice %47 {offsets = [2, 0, 0], sizes = [1, 16, 48], strides = [1, 1, 1]} : vector<8x16x48xbf16> to vector<1x16x48xbf16>
    %72 = vector.shape_cast %71 : vector<1x16x48xbf16> to vector<16x48xbf16>
    %c1_84 = arith.constant 1 : index
    %c0_85 = arith.constant 0 : index
    %c48_86 = arith.constant 48 : index
    %73 = vector.load %arg14[%c1_84, %c0_85, %c48_86] : memref<8x16x144xbf16, #tpu.memory_space<vmem>>, vector<1x16x48xbf16>
    %74 = vector.shape_cast %73 : vector<1x16x48xbf16> to vector<16x48xbf16>
    %75 = vector.shape_cast %72 : vector<16x48xbf16> to vector<1x16x48xbf16>
    tpu.vector_store %arg14[%c1_84, %c0_85, %c48_86], %75 {strides = array<i32>} : memref<8x16x144xbf16, #tpu.memory_space<vmem>>, vector<1x16x48xbf16>,
    %76 = vector.extract_strided_slice %47 {offsets = [3, 0, 0], sizes = [1, 16, 48], strides = [1, 1, 1]} : vector<8x16x48xbf16> to vector<1x16x48xbf16>
    %77 = vector.shape_cast %76 : vector<1x16x48xbf16> to vector<16x48xbf16>
    %c1_87 = arith.constant 1 : index
    %c0_88 = arith.constant 0 : index
    %c96_89 = arith.constant 96 : index
    %78 = vector.load %arg14[%c1_87, %c0_88, %c96_89] : memref<8x16x144xbf16, #tpu.memory_space<vmem>>, vector<1x16x48xbf16>
    %79 = vector.shape_cast %78 : vector<1x16x48xbf16> to vector<16x48xbf16>
    %80 = vector.shape_cast %77 : vector<16x48xbf16> to vector<1x16x48xbf16>
    tpu.vector_store %arg14[%c1_87, %c0_88, %c96_89], %80 {strides = array<i32>} : memref<8x16x144xbf16, #tpu.memory_space<vmem>>, vector<1x16x48xbf16>,
    %81 = vector.extract_strided_slice %47 {offsets = [3, 0, 0], sizes = [1, 16, 48], strides = [1, 1, 1]} : vector<8x16x48xbf16> to vector<1x16x48xbf16>
    %82 = vector.shape_cast %81 : vector<1x16x48xbf16> to vector<16x48xbf16>
    %c2_90 = arith.constant 2 : index
    %c0_91 = arith.constant 0 : index
    %c0_92 = arith.constant 0 : index
    %83 = vector.load %arg14[%c2_90, %c0_91, %c0_92] : memref<8x16x144xbf16, #tpu.memory_space<vmem>>, vector<1x16x48xbf16>
    %84 = vector.shape_cast %83 : vector<1x16x48xbf16> to vector<16x48xbf16>
    %85 = vector.shape_cast %82 : vector<16x48xbf16> to vector<1x16x48xbf16>
    tpu.vector_store %arg14[%c2_90, %c0_91, %c0_92], %85 {strides = array<i32>} : memref<8x16x144xbf16, #tpu.memory_space<vmem>>, vector<1x16x48xbf16>,
    %86 = vector.extract_strided_slice %47 {offsets = [4, 0, 0], sizes = [1, 16, 48], strides = [1, 1, 1]} : vector<8x16x48xbf16> to vector<1x16x48xbf16>
    %87 = vector.shape_cast %86 : vector<1x16x48xbf16> to vector<16x48xbf16>
    %c2_93 = arith.constant 2 : index
    %c0_94 = arith.constant 0 : index
    %c48_95 = arith.constant 48 : index
    %88 = vector.load %arg14[%c2_93, %c0_94, %c48_95] : memref<8x16x144xbf16, #tpu.memory_space<vmem>>, vector<1x16x48xbf16>
    %89 = vector.shape_cast %88 : vector<1x16x48xbf16> to vector<16x48xbf16>
    %90 = vector.shape_cast %87 : vector<16x48xbf16> to vector<1x16x48xbf16>
    tpu.vector_store %arg14[%c2_93, %c0_94, %c48_95], %90 {strides = array<i32>} : memref<8x16x144xbf16, #tpu.memory_space<vmem>>, vector<1x16x48xbf16>,
    %91 = vector.extract_strided_slice %47 {offsets = [5, 0, 0], sizes = [1, 16, 48], strides = [1, 1, 1]} : vector<8x16x48xbf16> to vector<1x16x48xbf16>
    %92 = vector.shape_cast %91 : vector<1x16x48xbf16> to vector<16x48xbf16>
    %c2_96 = arith.constant 2 : index
    %c0_97 = arith.constant 0 : index
    %c96_98 = arith.constant 96 : index
    %93 = vector.load %arg14[%c2_96, %c0_97, %c96_98] : memref<8x16x144xbf16, #tpu.memory_space<vmem>>, vector<1x16x48xbf16>
    %94 = vector.shape_cast %93 : vector<1x16x48xbf16> to vector<16x48xbf16>
    %95 = vector.shape_cast %92 : vector<16x48xbf16> to vector<1x16x48xbf16>
    tpu.vector_store %arg14[%c2_96, %c0_97, %c96_98], %95 {strides = array<i32>} : memref<8x16x144xbf16, #tpu.memory_space<vmem>>, vector<1x16x48xbf16>,
    %96 = vector.extract_strided_slice %47 {offsets = [5, 0, 0], sizes = [1, 16, 48], strides = [1, 1, 1]} : vector<8x16x48xbf16> to vector<1x16x48xbf16>
    %97 = vector.shape_cast %96 : vector<1x16x48xbf16> to vector<16x48xbf16>
    %c3 = arith.constant 3 : index
    %c0_99 = arith.constant 0 : index
    %c0_100 = arith.constant 0 : index
    %98 = vector.load %arg14[%c3, %c0_99, %c0_100] : memref<8x16x144xbf16, #tpu.memory_space<vmem>>, vector<1x16x48xbf16>
    %99 = vector.shape_cast %98 : vector<1x16x48xbf16> to vector<16x48xbf16>
    %100 = vector.shape_cast %97 : vector<16x48xbf16> to vector<1x16x48xbf16>
    tpu.vector_store %arg14[%c3, %c0_99, %c0_100], %100 {strides = array<i32>} : memref<8x16x144xbf16, #tpu.memory_space<vmem>>, vector<1x16x48xbf16>,
    %101 = vector.extract_strided_slice %47 {offsets = [6, 0, 0], sizes = [1, 16, 48], strides = [1, 1, 1]} : vector<8x16x48xbf16> to vector<1x16x48xbf16>
    %102 = vector.shape_cast %101 : vector<1x16x48xbf16> to vector<16x48xbf16>
    %c3_101 = arith.constant 3 : index
    %c0_102 = arith.constant 0 : index
    %c48_103 = arith.constant 48 : index
    %103 = vector.load %arg14[%c3_101, %c0_102, %c48_103] : memref<8x16x144xbf16, #tpu.memory_space<vmem>>, vector<1x16x48xbf16>
    %104 = vector.shape_cast %103 : vector<1x16x48xbf16> to vector<16x48xbf16>
    %105 = vector.shape_cast %102 : vector<16x48xbf16> to vector<1x16x48xbf16>
    tpu.vector_store %arg14[%c3_101, %c0_102, %c48_103], %105 {strides = array<i32>} : memref<8x16x144xbf16, #tpu.memory_space<vmem>>, vector<1x16x48xbf16>,
    %106 = vector.extract_strided_slice %47 {offsets = [7, 0, 0], sizes = [1, 16, 48], strides = [1, 1, 1]} : vector<8x16x48xbf16> to vector<1x16x48xbf16>
    %107 = vector.shape_cast %106 : vector<1x16x48xbf16> to vector<16x48xbf16>
    %c3_104 = arith.constant 3 : index
    %c0_105 = arith.constant 0 : index
    %c96_106 = arith.constant 96 : index
    %108 = vector.load %arg14[%c3_104, %c0_105, %c96_106] : memref<8x16x144xbf16, #tpu.memory_space<vmem>>, vector<1x16x48xbf16>
    %109 = vector.shape_cast %108 : vector<1x16x48xbf16> to vector<16x48xbf16>
    %110 = vector.shape_cast %107 : vector<16x48xbf16> to vector<1x16x48xbf16>
    tpu.vector_store %arg14[%c3_104, %c0_105, %c96_106], %110 {strides = array<i32>} : memref<8x16x144xbf16, #tpu.memory_space<vmem>>, vector<1x16x48xbf16>,
    %111 = vector.extract_strided_slice %47 {offsets = [0, 0, 0], sizes = [1, 16, 48], strides = [1, 1, 1]} : vector<8x16x48xbf16> to vector<1x16x48xbf16>
    %112 = vector.shape_cast %111 : vector<1x16x48xbf16> to vector<16x48xbf16>
    %c4 = arith.constant 4 : index
    %c0_107 = arith.constant 0 : index
    %c0_108 = arith.constant 0 : index
    %113 = vector.load %arg14[%c4, %c0_107, %c0_108] : memref<8x16x144xbf16, #tpu.memory_space<vmem>>, vector<1x16x48xbf16>
    %114 = vector.shape_cast %113 : vector<1x16x48xbf16> to vector<16x48xbf16>
    %115 = vector.shape_cast %112 : vector<16x48xbf16> to vector<1x16x48xbf16>
    tpu.vector_store %arg14[%c4, %c0_107, %c0_108], %115 {strides = array<i32>} : memref<8x16x144xbf16, #tpu.memory_space<vmem>>, vector<1x16x48xbf16>,
    %116 = vector.extract_strided_slice %47 {offsets = [1, 0, 0], sizes = [1, 16, 48], strides = [1, 1, 1]} : vector<8x16x48xbf16> to vector<1x16x48xbf16>
    %117 = vector.shape_cast %116 : vector<1x16x48xbf16> to vector<16x48xbf16>
    %c4_109 = arith.constant 4 : index
    %c0_110 = arith.constant 0 : index
    %c48_111 = arith.constant 48 : index
    %118 = vector.load %arg14[%c4_109, %c0_110, %c48_111] : memref<8x16x144xbf16, #tpu.memory_space<vmem>>, vector<1x16x48xbf16>
    %119 = vector.shape_cast %118 : vector<1x16x48xbf16> to vector<16x48xbf16>
    %120 = vector.shape_cast %117 : vector<16x48xbf16> to vector<1x16x48xbf16>
    tpu.vector_store %arg14[%c4_109, %c0_110, %c48_111], %120 {strides = array<i32>} : memref<8x16x144xbf16, #tpu.memory_space<vmem>>, vector<1x16x48xbf16>,
    %121 = vector.extract_strided_slice %47 {offsets = [2, 0, 0], sizes = [1, 16, 48], strides = [1, 1, 1]} : vector<8x16x48xbf16> to vector<1x16x48xbf16>
    %122 = vector.shape_cast %121 : vector<1x16x48xbf16> to vector<16x48xbf16>
    %c4_112 = arith.constant 4 : index
    %c0_113 = arith.constant 0 : index
    %c96_114 = arith.constant 96 : index
    %123 = vector.load %arg14[%c4_112, %c0_113, %c96_114] : memref<8x16x144xbf16, #tpu.memory_space<vmem>>, vector<1x16x48xbf16>
    %124 = vector.shape_cast %123 : vector<1x16x48xbf16> to vector<16x48xbf16>
    %125 = vector.shape_cast %122 : vector<16x48xbf16> to vector<1x16x48xbf16>
    tpu.vector_store %arg14[%c4_112, %c0_113, %c96_114], %125 {strides = array<i32>} : memref<8x16x144xbf16, #tpu.memory_space<vmem>>, vector<1x16x48xbf16>,
    %126 = vector.extract_strided_slice %47 {offsets = [2, 0, 0], sizes = [1, 16, 48], strides = [1, 1, 1]} : vector<8x16x48xbf16> to vector<1x16x48xbf16>
    %127 = vector.shape_cast %126 : vector<1x16x48xbf16> to vector<16x48xbf16>
    %c5 = arith.constant 5 : index
    %c0_115 = arith.constant 0 : index
    %c0_116 = arith.constant 0 : index
    %128 = vector.load %arg14[%c5, %c0_115, %c0_116] : memref<8x16x144xbf16, #tpu.memory_space<vmem>>, vector<1x16x48xbf16>
    %129 = vector.shape_cast %128 : vector<1x16x48xbf16> to vector<16x48xbf16>
    %130 = vector.shape_cast %127 : vector<16x48xbf16> to vector<1x16x48xbf16>
    tpu.vector_store %arg14[%c5, %c0_115, %c0_116], %130 {strides = array<i32>} : memref<8x16x144xbf16, #tpu.memory_space<vmem>>, vector<1x16x48xbf16>,
    %131 = vector.extract_strided_slice %47 {offsets = [3, 0, 0], sizes = [1, 16, 48], strides = [1, 1, 1]} : vector<8x16x48xbf16> to vector<1x16x48xbf16>
    %132 = vector.shape_cast %131 : vector<1x16x48xbf16> to vector<16x48xbf16>
    %c5_117 = arith.constant 5 : index
    %c0_118 = arith.constant 0 : index
    %c48_119 = arith.constant 48 : index
    %133 = vector.load %arg14[%c5_117, %c0_118, %c48_119] : memref<8x16x144xbf16, #tpu.memory_space<vmem>>, vector<1x16x48xbf16>
    %134 = vector.shape_cast %133 : vector<1x16x48xbf16> to vector<16x48xbf16>
    %135 = vector.shape_cast %132 : vector<16x48xbf16> to vector<1x16x48xbf16>
    tpu.vector_store %arg14[%c5_117, %c0_118, %c48_119], %135 {strides = array<i32>} : memref<8x16x144xbf16, #tpu.memory_space<vmem>>, vector<1x16x48xbf16>,
    %136 = vector.extract_strided_slice %47 {offsets = [4, 0, 0], sizes = [1, 16, 48], strides = [1, 1, 1]} : vector<8x16x48xbf16> to vector<1x16x48xbf16>
    %137 = vector.shape_cast %136 : vector<1x16x48xbf16> to vector<16x48xbf16>
    %c5_120 = arith.constant 5 : index
    %c0_121 = arith.constant 0 : index
    %c96_122 = arith.constant 96 : index
    %138 = vector.load %arg14[%c5_120, %c0_121, %c96_122] : memref<8x16x144xbf16, #tpu.memory_space<vmem>>, vector<1x16x48xbf16>
    %139 = vector.shape_cast %138 : vector<1x16x48xbf16> to vector<16x48xbf16>
    %140 = vector.shape_cast %137 : vector<16x48xbf16> to vector<1x16x48xbf16>
    tpu.vector_store %arg14[%c5_120, %c0_121, %c96_122], %140 {strides = array<i32>} : memref<8x16x144xbf16, #tpu.memory_space<vmem>>, vector<1x16x48xbf16>,
    %141 = vector.extract_strided_slice %47 {offsets = [4, 0, 0], sizes = [1, 16, 48], strides = [1, 1, 1]} : vector<8x16x48xbf16> to vector<1x16x48xbf16>
    %142 = vector.shape_cast %141 : vector<1x16x48xbf16> to vector<16x48xbf16>
    %c6 = arith.constant 6 : index
    %c0_123 = arith.constant 0 : index
    %c0_124 = arith.constant 0 : index
    %143 = vector.load %arg14[%c6, %c0_123, %c0_124] : memref<8x16x144xbf16, #tpu.memory_space<vmem>>, vector<1x16x48xbf16>
    %144 = vector.shape_cast %143 : vector<1x16x48xbf16> to vector<16x48xbf16>
    %145 = vector.shape_cast %142 : vector<16x48xbf16> to vector<1x16x48xbf16>
    tpu.vector_store %arg14[%c6, %c0_123, %c0_124], %145 {strides = array<i32>} : memref<8x16x144xbf16, #tpu.memory_space<vmem>>, vector<1x16x48xbf16>,
    %146 = vector.extract_strided_slice %47 {offsets = [5, 0, 0], sizes = [1, 16, 48], strides = [1, 1, 1]} : vector<8x16x48xbf16> to vector<1x16x48xbf16>
    %147 = vector.shape_cast %146 : vector<1x16x48xbf16> to vector<16x48xbf16>
    %c6_125 = arith.constant 6 : index
    %c0_126 = arith.constant 0 : index
    %c48_127 = arith.constant 48 : index
    %148 = vector.load %arg14[%c6_125, %c0_126, %c48_127] : memref<8x16x144xbf16, #tpu.memory_space<vmem>>, vector<1x16x48xbf16>
    %149 = vector.shape_cast %148 : vector<1x16x48xbf16> to vector<16x48xbf16>
    %150 = vector.shape_cast %147 : vector<16x48xbf16> to vector<1x16x48xbf16>
    tpu.vector_store %arg14[%c6_125, %c0_126, %c48_127], %150 {strides = array<i32>} : memref<8x16x144xbf16, #tpu.memory_space<vmem>>, vector<1x16x48xbf16>,
    %151 = vector.extract_strided_slice %47 {offsets = [6, 0, 0], sizes = [1, 16, 48], strides = [1, 1, 1]} : vector<8x16x48xbf16> to vector<1x16x48xbf16>
    %152 = vector.shape_cast %151 : vector<1x16x48xbf16> to vector<16x48xbf16>
    %c6_128 = arith.constant 6 : index
    %c0_129 = arith.constant 0 : index
    %c96_130 = arith.constant 96 : index
    %153 = vector.load %arg14[%c6_128, %c0_129, %c96_130] : memref<8x16x144xbf16, #tpu.memory_space<vmem>>, vector<1x16x48xbf16>
    %154 = vector.shape_cast %153 : vector<1x16x48xbf16> to vector<16x48xbf16>
    %155 = vector.shape_cast %152 : vector<16x48xbf16> to vector<1x16x48xbf16>
    tpu.vector_store %arg14[%c6_128, %c0_129, %c96_130], %155 {strides = array<i32>} : memref<8x16x144xbf16, #tpu.memory_space<vmem>>, vector<1x16x48xbf16>,
    %156 = vector.extract_strided_slice %47 {offsets = [6, 0, 0], sizes = [1, 16, 48], strides = [1, 1, 1]} : vector<8x16x48xbf16> to vector<1x16x48xbf16>
    %157 = vector.shape_cast %156 : vector<1x16x48xbf16> to vector<16x48xbf16>
    %c7_131 = arith.constant 7 : index
    %c0_132 = arith.constant 0 : index
    %c0_133 = arith.constant 0 : index
    %158 = vector.load %arg14[%c7_131, %c0_132, %c0_133] : memref<8x16x144xbf16, #tpu.memory_space<vmem>>, vector<1x16x48xbf16>
    %159 = vector.shape_cast %158 : vector<1x16x48xbf16> to vector<16x48xbf16>
    %160 = vector.shape_cast %157 : vector<16x48xbf16> to vector<1x16x48xbf16>
    tpu.vector_store %arg14[%c7_131, %c0_132, %c0_133], %160 {strides = array<i32>} : memref<8x16x144xbf16, #tpu.memory_space<vmem>>, vector<1x16x48xbf16>,
    %161 = vector.extract_strided_slice %47 {offsets = [7, 0, 0], sizes = [1, 16, 48], strides = [1, 1, 1]} : vector<8x16x48xbf16> to vector<1x16x48xbf16>
    %162 = vector.shape_cast %161 : vector<1x16x48xbf16> to vector<16x48xbf16>
    %c7_134 = arith.constant 7 : index
    %c0_135 = arith.constant 0 : index
    %c48_136 = arith.constant 48 : index
    %163 = vector.load %arg14[%c7_134, %c0_135, %c48_136] : memref<8x16x144xbf16, #tpu.memory_space<vmem>>, vector<1x16x48xbf16>
    %164 = vector.shape_cast %163 : vector<1x16x48xbf16> to vector<16x48xbf16>
    %165 = vector.shape_cast %162 : vector<16x48xbf16> to vector<1x16x48xbf16>
    tpu.vector_store %arg14[%c7_134, %c0_135, %c48_136], %165 {strides = array<i32>} : memref<8x16x144xbf16, #tpu.memory_space<vmem>>, vector<1x16x48xbf16>,
    %c0_137 = arith.constant 0 : index
    %c0_138 = arith.constant 0 : index
    %c0_139 = arith.constant 0 : index
    %166 = vector.load %arg14[%c0_137, %c0_138, %c0_139] : memref<8x16x144xbf16, #tpu.memory_space<vmem>>, vector<8x16x144xbf16>
    %167 = vector.shape_cast %166 : vector<8x16x144xbf16> to vector<128x144xbf16>
    %c0_140 = arith.constant 0 : index
    %c0_141 = arith.constant 0 : index
    %168 = vector.load %arg4[%c0_140, %c0_141] : memref<144x24xbf16, #tpu.memory_space<vmem>>, vector<144x24xbf16>
    %cst_142 = arith.constant dense<0.000000e+00> : vector<128x24xf32>
    %169 = tpu.matmul %167, %168, %cst_142 {dimension_numbers = #tpu.dot_dimension_numbers<[1], [0], [0], [1], [0, 0, 1, 1], [], []>} : vector<128x144xbf16>, vector<144x24xbf16>, vector<128x24xf32> -> vector<128x24xf32>
    %c0_143 = arith.constant 0 : index
    %c0_144 = arith.constant 0 : index
    %170 = vector.load %arg5[%c0_143, %c0_144] : memref<1x24xf32, #tpu.memory_space<vmem>>, vector<1x24xf32>
    %171 = vector.broadcast %170 : vector<1x24xf32> to vector<128x24xf32>
    %172 = arith.addf %169, %171 : vector<128x24xf32>
    %cst_145 = arith.constant 0.000000e+00 : f32
    %173 = vector.broadcast %cst_145 : f32 to vector<128x24xf32>
    %174 = arith.maximumf %172, %173 : vector<128x24xf32>
    %175 = vector.extract_strided_slice %174 {offsets = [0, 0], sizes = [64, 12], strides = [1, 1]} : vector<128x24xf32> to vector<64x12xf32>
    %176 = vector.extract_strided_slice %174 {offsets = [0, 12], sizes = [64, 12], strides = [1, 1]} : vector<128x24xf32> to vector<64x12xf32>
    %177 = arith.maximumf %175, %176 : vector<64x12xf32>
    %178 = vector.extract_strided_slice %174 {offsets = [64, 0], sizes = [64, 12], strides = [1, 1]} : vector<128x24xf32> to vector<64x12xf32>
    %179 = vector.extract_strided_slice %174 {offsets = [64, 12], sizes = [64, 12], strides = [1, 1]} : vector<128x24xf32> to vector<64x12xf32>
    %180 = arith.maximumf %178, %179 : vector<64x12xf32>
    %181 = arith.maximumf %177, %180 : vector<64x12xf32>
    %182 = arith.truncf %181 : vector<64x12xf32> to vector<64x12xbf16>
    %183 = vector.shape_cast %182 : vector<64x12xbf16> to vector<4x16x12xbf16>
    %184 = vector.extract_strided_slice %183 {offsets = [0, 0, 0], sizes = [1, 16, 12], strides = [1, 1, 1]} : vector<4x16x12xbf16> to vector<1x16x12xbf16>
    %185 = vector.shape_cast %184 : vector<1x16x12xbf16> to vector<16x12xbf16>
    %c0_146 = arith.constant 0 : index
    %c0_147 = arith.constant 0 : index
    %186 = vector.load %arg15[%c0_146, %c0_147] : memref<16x48xbf16, #tpu.memory_space<vmem>>, vector<16x12xbf16>
    tpu.vector_store %arg15[%c0_146, %c0_147], %185 {strides = array<i32>} : memref<16x48xbf16, #tpu.memory_space<vmem>>, vector<16x12xbf16>,
    %187 = vector.extract_strided_slice %183 {offsets = [1, 0, 0], sizes = [1, 16, 12], strides = [1, 1, 1]} : vector<4x16x12xbf16> to vector<1x16x12xbf16>
    %188 = vector.shape_cast %187 : vector<1x16x12xbf16> to vector<16x12xbf16>
    %c0_148 = arith.constant 0 : index
    %c12 = arith.constant 12 : index
    %189 = vector.load %arg15[%c0_148, %c12] : memref<16x48xbf16, #tpu.memory_space<vmem>>, vector<16x12xbf16>
    tpu.vector_store %arg15[%c0_148, %c12], %188 {strides = array<i32>} : memref<16x48xbf16, #tpu.memory_space<vmem>>, vector<16x12xbf16>,
    %190 = vector.extract_strided_slice %183 {offsets = [2, 0, 0], sizes = [1, 16, 12], strides = [1, 1, 1]} : vector<4x16x12xbf16> to vector<1x16x12xbf16>
    %191 = vector.shape_cast %190 : vector<1x16x12xbf16> to vector<16x12xbf16>
    %c0_149 = arith.constant 0 : index
    %c24 = arith.constant 24 : index
    %192 = vector.load %arg15[%c0_149, %c24] : memref<16x48xbf16, #tpu.memory_space<vmem>>, vector<16x12xbf16>
    tpu.vector_store %arg15[%c0_149, %c24], %191 {strides = array<i32>} : memref<16x48xbf16, #tpu.memory_space<vmem>>, vector<16x12xbf16>,
    %193 = vector.extract_strided_slice %183 {offsets = [3, 0, 0], sizes = [1, 16, 12], strides = [1, 1, 1]} : vector<4x16x12xbf16> to vector<1x16x12xbf16>
    %194 = vector.shape_cast %193 : vector<1x16x12xbf16> to vector<16x12xbf16>
    %c0_150 = arith.constant 0 : index
    %c36 = arith.constant 36 : index
    %195 = vector.load %arg15[%c0_150, %c36] : memref<16x48xbf16, #tpu.memory_space<vmem>>, vector<16x12xbf16>
    tpu.vector_store %arg15[%c0_150, %c36], %194 {strides = array<i32>} : memref<16x48xbf16, #tpu.memory_space<vmem>>, vector<16x12xbf16>,
    %c0_151 = arith.constant 0 : index
    %c0_152 = arith.constant 0 : index
    %196 = vector.load %arg15[%c0_151, %c0_152] : memref<16x48xbf16, #tpu.memory_space<vmem>>, vector<16x48xbf16>
    %c0_153 = arith.constant 0 : index
    %c0_154 = arith.constant 0 : index
    %197 = vector.load %arg6[%c0_153, %c0_154] : memref<48x128xbf16, #tpu.memory_space<vmem>>, vector<48x128xbf16>
    %cst_155 = arith.constant dense<0.000000e+00> : vector<16x128xf32>
    %198 = tpu.matmul %196, %197, %cst_155 {dimension_numbers = #tpu.dot_dimension_numbers<[1], [0], [0], [1], [0, 0, 1, 1], [], []>} : vector<16x48xbf16>, vector<48x128xbf16>, vector<16x128xf32> -> vector<16x128xf32>
    %c0_156 = arith.constant 0 : index
    %c0_157 = arith.constant 0 : index
    %199 = vector.load %arg7[%c0_156, %c0_157] : memref<1x128xf32, #tpu.memory_space<vmem>>, vector<1x128xf32>
    %200 = vector.broadcast %199 : vector<1x128xf32> to vector<16x128xf32>
    %201 = arith.addf %198, %200 : vector<16x128xf32>
    %cst_158 = arith.constant 0.000000e+00 : f32
    %202 = vector.broadcast %cst_158 : f32 to vector<16x128xf32>
    %203 = arith.maximumf %201, %202 : vector<16x128xf32>
    %204 = arith.truncf %203 : vector<16x128xf32> to vector<16x128xbf16>
    %c0_159 = arith.constant 0 : index
    %c0_160 = arith.constant 0 : index
    %205 = vector.load %arg8[%c0_159, %c0_160] : memref<128x32xbf16, #tpu.memory_space<vmem>>, vector<128x32xbf16>
    %cst_161 = arith.constant dense<0.000000e+00> : vector<16x32xf32>
    %206 = tpu.matmul %204, %205, %cst_161 {dimension_numbers = #tpu.dot_dimension_numbers<[1], [0], [0], [1], [0, 0, 1, 1], [], []>} : vector<16x128xbf16>, vector<128x32xbf16>, vector<16x32xf32> -> vector<16x32xf32>
    %c0_162 = arith.constant 0 : index
    %c0_163 = arith.constant 0 : index
    %207 = vector.load %arg9[%c0_162, %c0_163] : memref<1x32xf32, #tpu.memory_space<vmem>>, vector<1x32xf32>
    %208 = vector.broadcast %207 : vector<1x32xf32> to vector<16x32xf32>
    %209 = arith.addf %206, %208 : vector<16x32xf32>
    %cst_164 = arith.constant 0.000000e+00 : f32
    %210 = vector.broadcast %cst_164 : f32 to vector<16x32xf32>
    %211 = arith.maximumf %209, %210 : vector<16x32xf32>
    %212 = arith.truncf %211 : vector<16x32xf32> to vector<16x32xbf16>
    %c0_165 = arith.constant 0 : index
    %c0_166 = arith.constant 0 : index
    %213 = vector.load %arg10[%c0_165, %c0_166] : memref<32x2xbf16, #tpu.memory_space<vmem>>, vector<32x2xbf16>
    %cst_167 = arith.constant dense<0.000000e+00> : vector<16x2xf32>
    %214 = tpu.matmul %212, %213, %cst_167 {dimension_numbers = #tpu.dot_dimension_numbers<[1], [0], [0], [1], [0, 0, 1, 1], [], []>} : vector<16x32xbf16>, vector<32x2xbf16>, vector<16x2xf32> -> vector<16x2xf32>
    %c0_168 = arith.constant 0 : index
    %c0_169 = arith.constant 0 : index
    %215 = vector.load %arg11[%c0_168, %c0_169] : memref<1x2xf32, #tpu.memory_space<vmem>>, vector<1x2xf32>
    %216 = vector.broadcast %215 : vector<1x2xf32> to vector<16x2xf32>
    %217 = arith.addf %214, %216 : vector<16x2xf32>
    %218 = math.absf %217 : vector<16x2xf32>
    %cst_170 = arith.constant 0.000000e+00 : f32
    %219 = vector.broadcast %cst_170 : f32 to vector<16x2xf32>
    %220 = arith.subf %219, %218 : vector<16x2xf32>
    %221 = math.exp %220 : vector<16x2xf32>
    %cst_171 = arith.constant 1.000000e+00 : f32
    %222 = vector.broadcast %cst_171 : f32 to vector<16x2xf32>
    %223 = arith.addf %222, %221 : vector<16x2xf32>
    %224 = tpu.reciprocal %223 {approx = true} : vector<16x2xf32> -> vector<16x2xf32>
    %cst_172 = arith.constant 0.000000e+00 : f32
    %225 = vector.broadcast %cst_172 : f32 to vector<16x2xf32>
    %226 = arith.cmpf oge, %217, %225 : vector<16x2xf32>
    %227 = arith.mulf %221, %224 : vector<16x2xf32>
    %228 = arith.select %226, %224, %227 : vector<16x2xi1>, vector<16x2xf32>
    %cst_173 = arith.constant 0.000000e+00 : f32
    %229 = vector.broadcast %cst_173 : f32 to vector<16x2xf32>
    %230 = arith.maximumf %228, %229 : vector<16x2xf32>
    %cst_174 = arith.constant 1.000000e+00 : f32
    %231 = vector.broadcast %cst_174 : f32 to vector<16x2xf32>
    %232 = arith.minimumf %230, %231 : vector<16x2xf32>
    %c0_175 = arith.constant 0 : index
    %c0_176 = arith.constant 0 : index
    %233 = vector.load %arg12[%c0_175, %c0_176] : memref<16x2xf32, #tpu.memory_space<vmem>>, vector<16x2xf32>
    tpu.vector_store %arg12[%c0_175, %c0_176], %232 {strides = array<i32>} : memref<16x2xf32, #tpu.memory_space<vmem>>, vector<16x2xf32>,
    return
  }
  func.func @transform_0(%arg0: i32) -> (i32, i32, i32, i32) {
    %c0_i32 = arith.constant 0 : i32
    %c0_i32_0 = arith.constant 0 : i32
    %c0_i32_1 = arith.constant 0 : i32
    %c0_i32_2 = arith.constant 0 : i32
    return %c0_i32, %c0_i32_0, %arg0, %c0_i32_1 : i32, i32, i32, i32
  }
  func.func @transform_1(%arg0: i32) -> (i32, i32) {
    %c0_i32 = arith.constant 0 : i32
    %c0_i32_0 = arith.constant 0 : i32
    %c0_i32_1 = arith.constant 0 : i32
    return %c0_i32, %c0_i32_0 : i32, i32
  }
  func.func @transform_2(%arg0: i32) -> (i32, i32) {
    %c0_i32 = arith.constant 0 : i32
    %c0_i32_0 = arith.constant 0 : i32
    %c0_i32_1 = arith.constant 0 : i32
    return %c0_i32, %c0_i32_0 : i32, i32
  }
  func.func @transform_3(%arg0: i32) -> (i32, i32) {
    %c0_i32 = arith.constant 0 : i32
    %c0_i32_0 = arith.constant 0 : i32
    %c0_i32_1 = arith.constant 0 : i32
    return %c0_i32, %c0_i32_0 : i32, i32
  }
  func.func @transform_4(%arg0: i32) -> (i32, i32) {
    %c0_i32 = arith.constant 0 : i32
    %c0_i32_0 = arith.constant 0 : i32
    %c0_i32_1 = arith.constant 0 : i32
    return %c0_i32, %c0_i32_0 : i32, i32
  }
  func.func @transform_5(%arg0: i32) -> (i32, i32) {
    %c0_i32 = arith.constant 0 : i32
    %c0_i32_0 = arith.constant 0 : i32
    %c0_i32_1 = arith.constant 0 : i32
    return %c0_i32, %c0_i32_0 : i32, i32
  }
  func.func @transform_6(%arg0: i32) -> (i32, i32) {
    %c0_i32 = arith.constant 0 : i32
    %c0_i32_0 = arith.constant 0 : i32
    %c0_i32_1 = arith.constant 0 : i32
    return %c0_i32, %c0_i32_0 : i32, i32
  }
  func.func @transform_7(%arg0: i32) -> (i32, i32) {
    %c0_i32 = arith.constant 0 : i32
    %c0_i32_0 = arith.constant 0 : i32
    %c0_i32_1 = arith.constant 0 : i32
    return %c0_i32, %c0_i32_0 : i32, i32
  }
  func.func @transform_8(%arg0: i32) -> (i32, i32) {
    %c0_i32 = arith.constant 0 : i32
    %c0_i32_0 = arith.constant 0 : i32
    %c0_i32_1 = arith.constant 0 : i32
    return %c0_i32, %c0_i32_0 : i32, i32
  }
  func.func @transform_9(%arg0: i32) -> (i32, i32) {
    %c0_i32 = arith.constant 0 : i32
    %c0_i32_0 = arith.constant 0 : i32
    %c0_i32_1 = arith.constant 0 : i32
    return %c0_i32, %c0_i32_0 : i32, i32
  }
  func.func @transform_10(%arg0: i32) -> (i32, i32) {
    %c0_i32 = arith.constant 0 : i32
    %c0_i32_0 = arith.constant 0 : i32
    %c0_i32_1 = arith.constant 0 : i32
    return %c0_i32, %c0_i32_0 : i32, i32
  }
  func.func @transform_11(%arg0: i32) -> (i32, i32) {
    %c0_i32 = arith.constant 0 : i32
    %c0_i32_0 = arith.constant 0 : i32
    return %arg0, %c0_i32 : i32, i32
  }
}

</mosaic_0001>

<llo_original>
// kernel: cnn_forward.1
$region0: #{cnn_forward.1}
  #allocation0 [shape = 'u32[]', space=smem, size = 0x4, offset = 0x4, fixed_abs, tag = 'smem constant byte address 0x4 - core index']
  #allocation1 [shape = 'u32[144,128]{1,0:T(1,128)}', space=vmem, size = 0x12000, scoped, tag = 'internal scratch']
  #allocation2 [shape = 'bf16[16,16,300]{2,1,0:T(8,128)(2,1)}', space=vmem, size = 0x30000, scoped, tag = 'scratch operand']
  #allocation3 [shape = 'bf16[8,16,144]{2,1,0:T(8,128)(2,1)}', space=vmem, size = 0x10000, scoped, tag = 'scratch operand']
  #allocation4 [shape = 'bf16[16,48]{1,0:T(8,128)(2,1)}', space=vmem, size = 0x1000, scoped, tag = 'scratch operand']
  %s0 = inlined_call_operand.vmem [shape: bf16[2,10,16,60], index: 0, kind: input, shape index: {}]
  %s1 = inlined_call_operand.vmem [shape: bf16[300,96], index: 1, kind: input, shape index: {}]
  %s2 = inlined_call_operand.vmem [shape: f32[1,96], index: 2, kind: input, shape index: {}]
  %s3 = inlined_call_operand.vmem [shape: bf16[144,24], index: 3, kind: input, shape index: {}]
  %s4 = inlined_call_operand.vmem [shape: f32[1,24], index: 4, kind: input, shape index: {}]
  %s5 = inlined_call_operand.vmem [shape: bf16[48,128], index: 5, kind: input, shape index: {}]
  %s6 = inlined_call_operand.vmem [shape: f32[1,128], index: 6, kind: input, shape index: {}]
  %s7 = inlined_call_operand.vmem [shape: bf16[128,32], index: 7, kind: input, shape index: {}]
  %s8 = inlined_call_operand.vmem [shape: f32[1,32], index: 8, kind: input, shape index: {}]
  %s9 = inlined_call_operand.vmem [shape: bf16[32,2], index: 9, kind: input, shape index: {}]
  %s10 = inlined_call_operand.vmem [shape: f32[1,2], index: 10, kind: input, shape index: {}]
  %s11 = inlined_call_operand.vmem [shape: f32[16,2], index: 11, kind: output, shape index: {}]
  %s12 = sld [smem:[#allocation0]]
  $region54: #{cnn_forward.1} parent=0
    _
  %s14 = ssub.s32 1, %s12
  %s15 = scalar_select 0, %s14, %s12
  // Predicated region
  $region2: #{cnn_forward.1} parent=0 // pred_check
    _
  $region3: #{cnn_forward.1} parent=0 // pred_check_branch
    %17 = sbr.rel (0) target = $region5
  $region4: #{cnn_forward.1} parent=0 // pred_region
    _
  $region5: #{cnn_forward.1} parent=0 // pred_fallthru
    _
  // Predicated region
  $region6: #{cnn_forward.1} parent=0 // pred_check
    _
  $region7: #{cnn_forward.1} parent=0 // pred_check_branch
    %19 = sbr.rel (0) target = $region9
  $region8: #{cnn_forward.1} parent=0 // pred_region
    _
  $region9: #{cnn_forward.1} parent=0 // pred_fallthru
    _
  // Predicated region
  $region10: #{cnn_forward.1} parent=0 // pred_check
    _
  $region11: #{cnn_forward.1} parent=0 // pred_check_branch
    %21 = sbr.rel (0) target = $region13
  $region12: #{cnn_forward.1} parent=0 // pred_region
    _
  $region13: #{cnn_forward.1} parent=0 // pred_fallthru
    _
  // Predicated region
  $region14: #{cnn_forward.1} parent=0 // pred_check
    _
  $region15: #{cnn_forward.1} parent=0 // pred_check_branch
    %23 = sbr.rel (0) target = $region17
  $region16: #{cnn_forward.1} parent=0 // pred_region
    _
  $region17: #{cnn_forward.1} parent=0 // pred_fallthru
    _
  // Predicated region
  $region18: #{cnn_forward.1} parent=0 // pred_check
    _
  $region19: #{cnn_forward.1} parent=0 // pred_check_branch
    %25 = sbr.rel (0) target = $region21
  $region20: #{cnn_forward.1} parent=0 // pred_region
    _
  $region21: #{cnn_forward.1} parent=0 // pred_fallthru
    _
  // Predicated region
  $region22: #{cnn_forward.1} parent=0 // pred_check
    _
  $region23: #{cnn_forward.1} parent=0 // pred_check_branch
    %27 = sbr.rel (0) target = $region25
  $region24: #{cnn_forward.1} parent=0 // pred_region
    _
  $region25: #{cnn_forward.1} parent=0 // pred_fallthru
    _
  // Predicated region
  $region26: #{cnn_forward.1} parent=0 // pred_check
    _
  $region27: #{cnn_forward.1} parent=0 // pred_check_branch
    %29 = sbr.rel (0) target = $region29
  $region28: #{cnn_forward.1} parent=0 // pred_region
    _
  $region29: #{cnn_forward.1} parent=0 // pred_fallthru
    _
  // Predicated region
  $region30: #{cnn_forward.1} parent=0 // pred_check
    _
  $region31: #{cnn_forward.1} parent=0 // pred_check_branch
    %31 = sbr.rel (0) target = $region33
  $region32: #{cnn_forward.1} parent=0 // pred_region
    _
  $region33: #{cnn_forward.1} parent=0 // pred_fallthru
    _
  // Predicated region
  $region34: #{cnn_forward.1} parent=0 // pred_check
    _
  $region35: #{cnn_forward.1} parent=0 // pred_check_branch
    %33 = sbr.rel (0) target = $region37
  $region36: #{cnn_forward.1} parent=0 // pred_region
    _
  $region37: #{cnn_forward.1} parent=0 // pred_fallthru
    _
  // Predicated region
  $region38: #{cnn_forward.1} parent=0 // pred_check
    _
  $region39: #{cnn_forward.1} parent=0 // pred_check_branch
    %35 = sbr.rel (0) target = $region41
  $region40: #{cnn_forward.1} parent=0 // pred_region
    _
  $region41: #{cnn_forward.1} parent=0 // pred_fallthru
    _
  // Predicated region
  $region42: #{cnn_forward.1} parent=0 // pred_check
    _
  $region43: #{cnn_forward.1} parent=0 // pred_check_branch
    %37 = sbr.rel (0) target = $region45
  $region44: #{cnn_forward.1} parent=0 // pred_region
    _
  $region45: #{cnn_forward.1} parent=0 // pred_fallthru
    _
  %v39 = vld [vmem:[%s0] sm:$0xf]
  %v40 = vld [vmem:[%s0 + $0x4] sm:$0xf]
  %v41 = vld [vmem:[%s0 + $0x8] sm:$0xf]
  %v42 = vld [vmem:[%s0 + $0xc] sm:$0xf]
  %v43 = vld [vmem:[%s0 + $0x10] sm:$0xf]
  %v44 = vld [vmem:[%s0 + $0x14] sm:$0xf]
  %v45 = vld [vmem:[%s0 + $0x18] sm:$0xf]
  %v46 = vld [vmem:[%s0 + $0x1c] sm:$0xf]
  %v47 = vld [vmem:[%s0 + $0x20] sm:$0xf]
  %v48 = vld [vmem:[%s0 + $0x24] sm:$0xf]
  %v49 = vld [vmem:[%s0 + $0x28] sm:$0xf]
  %v50 = vld [vmem:[%s0 + $0x2c] sm:$0xf]
  %v51 = vld [vmem:[%s0 + $0x30] sm:$0xf]
  %v52 = vld [vmem:[%s0 + $0x34] sm:$0xf]
  %v53 = vld [vmem:[%s0 + $0x38] sm:$0xf]
  %v54 = vld [vmem:[%s0 + $0x3c] sm:$0xf]
  %vm55 = vcmask 486400
  %56 = vst.msk [vmem:[#allocation2] sm:$0xf] %vm55, %v39
  %57 = vst.msk [vmem:[#allocation2 + $0xc] sm:$0xf] %vm55, %v40
  %58 = vst.msk [vmem:[#allocation2 + $0x18] sm:$0xf] %vm55, %v41
  %59 = vst.msk [vmem:[#allocation2 + $0x24] sm:$0xf] %vm55, %v42
  %60 = vst.msk [vmem:[#allocation2 + $0x30] sm:$0xf] %vm55, %v43
  %61 = vst.msk [vmem:[#allocation2 + $0x3c] sm:$0xf] %vm55, %v44
  %62 = vst.msk [vmem:[#allocation2 + $0x48] sm:$0xf] %vm55, %v45
  %63 = vst.msk [vmem:[#allocation2 + $0x54] sm:$0xf] %vm55, %v46
  %64 = vst.msk [vmem:[#allocation2 + $0x60] sm:$0xf] %vm55, %v47
  %65 = vst.msk [vmem:[#allocation2 + $0x6c] sm:$0xf] %vm55, %v48
  %66 = vst.msk [vmem:[#allocation2 + $0x78] sm:$0xf] %vm55, %v49
  %67 = vst.msk [vmem:[#allocation2 + $0x84] sm:$0xf] %vm55, %v50
  %68 = vst.msk [vmem:[#allocation2 + $0x90] sm:$0xf] %vm55, %v51
  %69 = vst.msk [vmem:[#allocation2 + $0x9c] sm:$0xf] %vm55, %v52
  %70 = vst.msk [vmem:[#allocation2 + $0xa8] sm:$0xf] %vm55, %v53
  %71 = vst.msk [vmem:[#allocation2 + $0xb4] sm:$0xf] %vm55, %v54
  %s72 = scalar_lea.vmem %s0, 80
  %v73 = vld [vmem:[%s72] sm:$0xf]
  %v74 = vld [vmem:[%s72 + $0x4] sm:$0xf]
  %v75 = vld [vmem:[%s72 + $0x8] sm:$0xf]
  %v76 = vld [vmem:[%s72 + $0xc] sm:$0xf]
  %v77 = vld [vmem:[%s72 + $0x10] sm:$0xf]
  %v78 = vld [vmem:[%s72 + $0x14] sm:$0xf]
  %v79 = vld [vmem:[%s72 + $0x18] sm:$0xf]
  %v80 = vld [vmem:[%s72 + $0x1c] sm:$0xf]
  %v81 = vld [vmem:[%s72 + $0x20] sm:$0xf]
  %v82 = vld [vmem:[%s72 + $0x24] sm:$0xf]
  %v83 = vld [vmem:[%s72 + $0x28] sm:$0xf]
  %v84 = vld [vmem:[%s72 + $0x2c] sm:$0xf]
  %v85 = vld [vmem:[%s72 + $0x30] sm:$0xf]
  %v86 = vld [vmem:[%s72 + $0x34] sm:$0xf]
  %v87 = vld [vmem:[%s72 + $0x38] sm:$0xf]
  %v88 = vld [vmem:[%s72 + $0x3c] sm:$0xf]
  %105 = vrot.lane.b32.xlu0 %v73, 60
  %v106 = vpop.permute.xlu0 %105
  %107 = vrot.lane.b32.xlu0 %v74, 60
  %v108 = vpop.permute.xlu0 %107
  %109 = vrot.lane.b32.xlu0 %v75, 60
  %v110 = vpop.permute.xlu0 %109
  %111 = vrot.lane.b32.xlu0 %v76, 60
  %v112 = vpop.permute.xlu0 %111
  %113 = vrot.lane.b32.xlu0 %v77, 60
  %v114 = vpop.permute.xlu0 %113
  %115 = vrot.lane.b32.xlu0 %v78, 60
  %v116 = vpop.permute.xlu0 %115
  %117 = vrot.lane.b32.xlu0 %v79, 60
  %v118 = vpop.permute.xlu0 %117
  %119 = vrot.lane.b32.xlu0 %v80, 60
  %v120 = vpop.permute.xlu0 %119
  %121 = vrot.lane.b32.xlu0 %v81, 60
  %v122 = vpop.permute.xlu0 %121
  %123 = vrot.lane.b32.xlu0 %v82, 60
  %v124 = vpop.permute.xlu0 %123
  %125 = vrot.lane.b32.xlu0 %v83, 60
  %v126 = vpop.permute.xlu0 %125
  %127 = vrot.lane.b32.xlu0 %v84, 60
  %v128 = vpop.permute.xlu0 %127
  %129 = vrot.lane.b32.xlu0 %v85, 60
  %v130 = vpop.permute.xlu0 %129
  %131 = vrot.lane.b32.xlu0 %v86, 60
  %v132 = vpop.permute.xlu0 %131
  %133 = vrot.lane.b32.xlu0 %v87, 60
  %v134 = vpop.permute.xlu0 %133
  %135 = vrot.lane.b32.xlu0 %v88, 60
  %v136 = vpop.permute.xlu0 %135
  %vm153 = vcmask 978400
  %154 = vst.msk [vmem:[#allocation2] sm:$0xf] %vm153, %v106
  %155 = vst.msk [vmem:[#allocation2 + $0xc] sm:$0xf] %vm153, %v108
  %156 = vst.msk [vmem:[#allocation2 + $0x18] sm:$0xf] %vm153, %v110
  %157 = vst.msk [vmem:[#allocation2 + $0x24] sm:$0xf] %vm153, %v112
  %158 = vst.msk [vmem:[#allocation2 + $0x30] sm:$0xf] %vm153, %v114
  %159 = vst.msk [vmem:[#allocation2 + $0x3c] sm:$0xf] %vm153, %v116
  %160 = vst.msk [vmem:[#allocation2 + $0x48] sm:$0xf] %vm153, %v118
  %161 = vst.msk [vmem:[#allocation2 + $0x54] sm:$0xf] %vm153, %v120
  %162 = vst.msk [vmem:[#allocation2 + $0x60] sm:$0xf] %vm153, %v122
  %163 = vst.msk [vmem:[#allocation2 + $0x6c] sm:$0xf] %vm153, %v124
  %164 = vst.msk [vmem:[#allocation2 + $0x78] sm:$0xf] %vm153, %v126
  %165 = vst.msk [vmem:[#allocation2 + $0x84] sm:$0xf] %vm153, %v128
  %166 = vst.msk [vmem:[#allocation2 + $0x90] sm:$0xf] %vm153, %v130
  %167 = vst.msk [vmem:[#allocation2 + $0x9c] sm:$0xf] %vm153, %v132
  %168 = vst.msk [vmem:[#allocation2 + $0xa8] sm:$0xf] %vm153, %v134
  %169 = vst.msk [vmem:[#allocation2 + $0xb4] sm:$0xf] %vm153, %v136
  %s170 = scalar_lea.vmem %s0, 8
  %v171 = vld [vmem:[%s170] sm:$0xf]
  %v172 = vld [vmem:[%s170 + $0x4] sm:$0xf]
  %v173 = vld [vmem:[%s170 + $0x8] sm:$0xf]
  %v174 = vld [vmem:[%s170 + $0xc] sm:$0xf]
  %v175 = vld [vmem:[%s170 + $0x10] sm:$0xf]
  %v176 = vld [vmem:[%s170 + $0x14] sm:$0xf]
  %v177 = vld [vmem:[%s170 + $0x18] sm:$0xf]
  %v178 = vld [vmem:[%s170 + $0x1c] sm:$0xf]
  %v179 = vld [vmem:[%s170 + $0x20] sm:$0xf]
  %v180 = vld [vmem:[%s170 + $0x24] sm:$0xf]
  %v181 = vld [vmem:[%s170 + $0x28] sm:$0xf]
  %v182 = vld [vmem:[%s170 + $0x2c] sm:$0xf]
  %v183 = vld [vmem:[%s170 + $0x30] sm:$0xf]
  %v184 = vld [vmem:[%s170 + $0x34] sm:$0xf]
  %v185 = vld [vmem:[%s170 + $0x38] sm:$0xf]
  %v186 = vld [vmem:[%s170 + $0x3c] sm:$0xf]
  %203 = vrot.lane.b32.xlu0 %v171, 120
  %v204 = vpop.permute.xlu0 %203
  %205 = vrot.lane.b32.xlu0 %v172, 120
  %v206 = vpop.permute.xlu0 %205
  %207 = vrot.lane.b32.xlu0 %v173, 120
  %v208 = vpop.permute.xlu0 %207
  %209 = vrot.lane.b32.xlu0 %v174, 120
  %v210 = vpop.permute.xlu0 %209
  %211 = vrot.lane.b32.xlu0 %v175, 120
  %v212 = vpop.permute.xlu0 %211
  %213 = vrot.lane.b32.xlu0 %v176, 120
  %v214 = vpop.permute.xlu0 %213
  %215 = vrot.lane.b32.xlu0 %v177, 120
  %v216 = vpop.permute.xlu0 %215
  %217 = vrot.lane.b32.xlu0 %v178, 120
  %v218 = vpop.permute.xlu0 %217
  %219 = vrot.lane.b32.xlu0 %v179, 120
  %v220 = vpop.permute.xlu0 %219
  %221 = vrot.lane.b32.xlu0 %v180, 120
  %v222 = vpop.permute.xlu0 %221
  %223 = vrot.lane.b32.xlu0 %v181, 120
  %v224 = vpop.permute.xlu0 %223
  %225 = vrot.lane.b32.xlu0 %v182, 120
  %v226 = vpop.permute.xlu0 %225
  %227 = vrot.lane.b32.xlu0 %v183, 120
  %v228 = vpop.permute.xlu0 %227
  %229 = vrot.lane.b32.xlu0 %v184, 120
  %v230 = vpop.permute.xlu0 %229
  %231 = vrot.lane.b32.xlu0 %v185, 120
  %v232 = vpop.permute.xlu0 %231
  %233 = vrot.lane.b32.xlu0 %v186, 120
  %v234 = vpop.permute.xlu0 %233
  %v235 = vrot.slane %v204, 4
  %v236 = vrot.slane %v206, 4
  %v237 = vrot.slane %v208, 4
  %v238 = vrot.slane %v210, 4
  %v239 = vrot.slane %v212, 4
  %v240 = vrot.slane %v214, 4
  %v241 = vrot.slane %v216, 4
  %v242 = vrot.slane %v218, 4
  %v243 = vrot.slane %v220, 4
  %v244 = vrot.slane %v222, 4
  %v245 = vrot.slane %v224, 4
  %v246 = vrot.slane %v226, 4
  %v247 = vrot.slane %v228, 4
  %v248 = vrot.slane %v230, 4
  %v249 = vrot.slane %v232, 4
  %v250 = vrot.slane %v234, 4
  %vm251 = vcmask 982016
  %v252 = vsel %vm251, %v235, %v204
  %v253 = vsel %vm251, %v236, %v206
  %v254 = vsel %vm251, %v237, %v208
  %v255 = vsel %vm251, %v238, %v210
  %v256 = vsel %vm251, %v239, %v212
  %v257 = vsel %vm251, %v240, %v214
  %v258 = vsel %vm251, %v241, %v216
  %v259 = vsel %vm251, %v242, %v218
  %v260 = vsel %vm251, %v243, %v220
  %v261 = vsel %vm251, %v244, %v222
  %v262 = vsel %vm251, %v245, %v224
  %v263 = vsel %vm251, %v246, %v226
  %v264 = vsel %vm251, %v247, %v228
  %v265 = vsel %vm251, %v248, %v230
  %v266 = vsel %vm251, %v249, %v232
  %v267 = vsel %vm251, %v250, %v234
  %vm284 = vcmask 1044416
  %vm285 = vcmask 424964
  %vm286 = vmor %vm285, %vm284
  %287 = vst.msk [vmem:[#allocation2] sm:$0xff] %vm286, %v252
  %288 = vst.msk [vmem:[#allocation2 + $0xc] sm:$0xff] %vm286, %v253
  %289 = vst.msk [vmem:[#allocation2 + $0x18] sm:$0xff] %vm286, %v254
  %290 = vst.msk [vmem:[#allocation2 + $0x24] sm:$0xff] %vm286, %v255
  %291 = vst.msk [vmem:[#allocation2 + $0x30] sm:$0xff] %vm286, %v256
  %292 = vst.msk [vmem:[#allocation2 + $0x3c] sm:$0xff] %vm286, %v257
  %293 = vst.msk [vmem:[#allocation2 + $0x48] sm:$0xff] %vm286, %v258
  %294 = vst.msk [vmem:[#allocation2 + $0x54] sm:$0xff] %vm286, %v259
  %295 = vst.msk [vmem:[#allocation2 + $0x60] sm:$0xff] %vm286, %v260
  %296 = vst.msk [vmem:[#allocation2 + $0x6c] sm:$0xff] %vm286, %v261
  %297 = vst.msk [vmem:[#allocation2 + $0x78] sm:$0xff] %vm286, %v262
  %298 = vst.msk [vmem:[#allocation2 + $0x84] sm:$0xff] %vm286, %v263
  %299 = vst.msk [vmem:[#allocation2 + $0x90] sm:$0xff] %vm286, %v264
  %300 = vst.msk [vmem:[#allocation2 + $0x9c] sm:$0xff] %vm286, %v265
  %301 = vst.msk [vmem:[#allocation2 + $0xa8] sm:$0xff] %vm286, %v266
  %302 = vst.msk [vmem:[#allocation2 + $0xb4] sm:$0xff] %vm286, %v267
  %s303 = scalar_lea.vmem %s0, 88
  %v304 = vld [vmem:[%s303] sm:$0xf]
  %v305 = vld [vmem:[%s303 + $0x4] sm:$0xf]
  %v306 = vld [vmem:[%s303 + $0x8] sm:$0xf]
  %v307 = vld [vmem:[%s303 + $0xc] sm:$0xf]
  %v308 = vld [vmem:[%s303 + $0x10] sm:$0xf]
  %v309 = vld [vmem:[%s303 + $0x14] sm:$0xf]
  %v310 = vld [vmem:[%s303 + $0x18] sm:$0xf]
  %v311 = vld [vmem:[%s303 + $0x1c] sm:$0xf]
  %v312 = vld [vmem:[%s303 + $0x20] sm:$0xf]
  %v313 = vld [vmem:[%s303 + $0x24] sm:$0xf]
  %v314 = vld [vmem:[%s303 + $0x28] sm:$0xf]
  %v315 = vld [vmem:[%s303 + $0x2c] sm:$0xf]
  %v316 = vld [vmem:[%s303 + $0x30] sm:$0xf]
  %v317 = vld [vmem:[%s303 + $0x34] sm:$0xf]
  %v318 = vld [vmem:[%s303 + $0x38] sm:$0xf]
  %v319 = vld [vmem:[%s303 + $0x3c] sm:$0xf]
  %336 = vrot.lane.b32.xlu0 %v304, 52
  %v337 = vpop.permute.xlu0 %336
  %338 = vrot.lane.b32.xlu0 %v305, 52
  %v339 = vpop.permute.xlu0 %338
  %340 = vrot.lane.b32.xlu0 %v306, 52
  %v341 = vpop.permute.xlu0 %340
  %342 = vrot.lane.b32.xlu0 %v307, 52
  %v343 = vpop.permute.xlu0 %342
  %344 = vrot.lane.b32.xlu0 %v308, 52
  %v345 = vpop.permute.xlu0 %344
  %346 = vrot.lane.b32.xlu0 %v309, 52
  %v347 = vpop.permute.xlu0 %346
  %348 = vrot.lane.b32.xlu0 %v310, 52
  %v349 = vpop.permute.xlu0 %348
  %350 = vrot.lane.b32.xlu0 %v311, 52
  %v351 = vpop.permute.xlu0 %350
  %352 = vrot.lane.b32.xlu0 %v312, 52
  %v353 = vpop.permute.xlu0 %352
  %354 = vrot.lane.b32.xlu0 %v313, 52
  %v355 = vpop.permute.xlu0 %354
  %356 = vrot.lane.b32.xlu0 %v314, 52
  %v357 = vpop.permute.xlu0 %356
  %358 = vrot.lane.b32.xlu0 %v315, 52
  %v359 = vpop.permute.xlu0 %358
  %360 = vrot.lane.b32.xlu0 %v316, 52
  %v361 = vpop.permute.xlu0 %360
  %362 = vrot.lane.b32.xlu0 %v317, 52
  %v363 = vpop.permute.xlu0 %362
  %364 = vrot.lane.b32.xlu0 %v318, 52
  %v365 = vpop.permute.xlu0 %364
  %366 = vrot.lane.b32.xlu0 %v319, 52
  %v367 = vpop.permute.xlu0 %366
  %vm384 = vcmask 912800
  %385 = vst.msk [vmem:[#allocation2 + $0x4] sm:$0xf] %vm384, %v337
  %386 = vst.msk [vmem:[#allocation2 + $0x10] sm:$0xf] %vm384, %v339
  %387 = vst.msk [vmem:[#allocation2 + $0x1c] sm:$0xf] %vm384, %v341
  %388 = vst.msk [vmem:[#allocation2 + $0x28] sm:$0xf] %vm384, %v343
  %389 = vst.msk [vmem:[#allocation2 + $0x34] sm:$0xf] %vm384, %v345
  %390 = vst.msk [vmem:[#allocation2 + $0x40] sm:$0xf] %vm384, %v347
  %391 = vst.msk [vmem:[#allocation2 + $0x4c] sm:$0xf] %vm384, %v349
  %392 = vst.msk [vmem:[#allocation2 + $0x58] sm:$0xf] %vm384, %v351
  %393 = vst.msk [vmem:[#allocation2 + $0x64] sm:$0xf] %vm384, %v353
  %394 = vst.msk [vmem:[#allocation2 + $0x70] sm:$0xf] %vm384, %v355
  %395 = vst.msk [vmem:[#allocation2 + $0x7c] sm:$0xf] %vm384, %v357
  %396 = vst.msk [vmem:[#allocation2 + $0x88] sm:$0xf] %vm384, %v359
  %397 = vst.msk [vmem:[#allocation2 + $0x94] sm:$0xf] %vm384, %v361
  %398 = vst.msk [vmem:[#allocation2 + $0xa0] sm:$0xf] %vm384, %v363
  %399 = vst.msk [vmem:[#allocation2 + $0xac] sm:$0xf] %vm384, %v365
  %400 = vst.msk [vmem:[#allocation2 + $0xb8] sm:$0xf] %vm384, %v367
  %s401 = scalar_lea.vmem %s0, 16
  %v402 = vld [vmem:[%s401] sm:$0xf]
  %v403 = vld [vmem:[%s401 + $0x4] sm:$0xf]
  %v404 = vld [vmem:[%s401 + $0x8] sm:$0xf]
  %v405 = vld [vmem:[%s401 + $0xc] sm:$0xf]
  %v406 = vld [vmem:[%s401 + $0x10] sm:$0xf]
  %v407 = vld [vmem:[%s401 + $0x14] sm:$0xf]
  %v408 = vld [vmem:[%s401 + $0x18] sm:$0xf]
  %v409 = vld [vmem:[%s401 + $0x1c] sm:$0xf]
  %v410 = vld [vmem:[%s401 + $0x20] sm:$0xf]
  %v411 = vld [vmem:[%s401 + $0x24] sm:$0xf]
  %v412 = vld [vmem:[%s401 + $0x28] sm:$0xf]
  %v413 = vld [vmem:[%s401 + $0x2c] sm:$0xf]
  %v414 = vld [vmem:[%s401 + $0x30] sm:$0xf]
  %v415 = vld [vmem:[%s401 + $0x34] sm:$0xf]
  %v416 = vld [vmem:[%s401 + $0x38] sm:$0xf]
  %v417 = vld [vmem:[%s401 + $0x3c] sm:$0xf]
  %434 = vrot.lane.b32.xlu0 %v402, 112
  %v435 = vpop.permute.xlu0 %434
  %436 = vrot.lane.b32.xlu0 %v403, 112
  %v437 = vpop.permute.xlu0 %436
  %438 = vrot.lane.b32.xlu0 %v404, 112
  %v439 = vpop.permute.xlu0 %438
  %440 = vrot.lane.b32.xlu0 %v405, 112
  %v441 = vpop.permute.xlu0 %440
  %442 = vrot.lane.b32.xlu0 %v406, 112
  %v443 = vpop.permute.xlu0 %442
  %444 = vrot.lane.b32.xlu0 %v407, 112
  %v445 = vpop.permute.xlu0 %444
  %446 = vrot.lane.b32.xlu0 %v408, 112
  %v447 = vpop.permute.xlu0 %446
  %448 = vrot.lane.b32.xlu0 %v409, 112
  %v449 = vpop.permute.xlu0 %448
  %450 = vrot.lane.b32.xlu0 %v410, 112
  %v451 = vpop.permute.xlu0 %450
  %452 = vrot.lane.b32.xlu0 %v411, 112
  %v453 = vpop.permute.xlu0 %452
  %454 = vrot.lane.b32.xlu0 %v412, 112
  %v455 = vpop.permute.xlu0 %454
  %456 = vrot.lane.b32.xlu0 %v413, 112
  %v457 = vpop.permute.xlu0 %456
  %458 = vrot.lane.b32.xlu0 %v414, 112
  %v459 = vpop.permute.xlu0 %458
  %460 = vrot.lane.b32.xlu0 %v415, 112
  %v461 = vpop.permute.xlu0 %460
  %462 = vrot.lane.b32.xlu0 %v416, 112
  %v463 = vpop.permute.xlu0 %462
  %464 = vrot.lane.b32.xlu0 %v417, 112
  %v465 = vpop.permute.xlu0 %464
  %v466 = vrot.slane %v435, 4
  %v467 = vrot.slane %v437, 4
  %v468 = vrot.slane %v439, 4
  %v469 = vrot.slane %v441, 4
  %v470 = vrot.slane %v443, 4
  %v471 = vrot.slane %v445, 4
  %v472 = vrot.slane %v447, 4
  %v473 = vrot.slane %v449, 4
  %v474 = vrot.slane %v451, 4
  %v475 = vrot.slane %v453, 4
  %v476 = vrot.slane %v455, 4
  %v477 = vrot.slane %v457, 4
  %v478 = vrot.slane %v459, 4
  %v479 = vrot.slane %v461, 4
  %v480 = vrot.slane %v463, 4
  %v481 = vrot.slane %v465, 4
  %vm482 = vcmask 916480
  %v483 = vsel %vm482, %v466, %v435
  %v484 = vsel %vm482, %v467, %v437
  %v485 = vsel %vm482, %v468, %v439
  %v486 = vsel %vm482, %v469, %v441
  %v487 = vsel %vm482, %v470, %v443
  %v488 = vsel %vm482, %v471, %v445
  %v489 = vsel %vm482, %v472, %v447
  %v490 = vsel %vm482, %v473, %v449
  %v491 = vsel %vm482, %v474, %v451
  %v492 = vsel %vm482, %v475, %v453
  %v493 = vsel %vm482, %v476, %v455
  %v494 = vsel %vm482, %v477, %v457
  %v495 = vsel %vm482, %v478, %v459
  %v496 = vsel %vm482, %v479, %v461
  %v497 = vsel %vm482, %v480, %v463
  %v498 = vsel %vm482, %v481, %v465
  %vm515 = vcmask 1044352
  %vm516 = vcmask 359428
  %vm517 = vmor %vm516, %vm515
  %518 = vst.msk [vmem:[#allocation2 + $0x4] sm:$0xff] %vm517, %v483
  %519 = vst.msk [vmem:[#allocation2 + $0x10] sm:$0xff] %vm517, %v484
  %520 = vst.msk [vmem:[#allocation2 + $0x1c] sm:$0xff] %vm517, %v485
  %521 = vst.msk [vmem:[#allocation2 + $0x28] sm:$0xff] %vm517, %v486
  %522 = vst.msk [vmem:[#allocation2 + $0x34] sm:$0xff] %vm517, %v487
  %523 = vst.msk [vmem:[#allocation2 + $0x40] sm:$0xff] %vm517, %v488
  %524 = vst.msk [vmem:[#allocation2 + $0x4c] sm:$0xff] %vm517, %v489
  %525 = vst.msk [vmem:[#allocation2 + $0x58] sm:$0xff] %vm517, %v490
  %526 = vst.msk [vmem:[#allocation2 + $0x64] sm:$0xff] %vm517, %v491
  %527 = vst.msk [vmem:[#allocation2 + $0x70] sm:$0xff] %vm517, %v492
  %528 = vst.msk [vmem:[#allocation2 + $0x7c] sm:$0xff] %vm517, %v493
  %529 = vst.msk [vmem:[#allocation2 + $0x88] sm:$0xff] %vm517, %v494
  %530 = vst.msk [vmem:[#allocation2 + $0x94] sm:$0xff] %vm517, %v495
  %531 = vst.msk [vmem:[#allocation2 + $0xa0] sm:$0xff] %vm517, %v496
  %532 = vst.msk [vmem:[#allocation2 + $0xac] sm:$0xff] %vm517, %v497
  %533 = vst.msk [vmem:[#allocation2 + $0xb8] sm:$0xff] %vm517, %v498
  %v534 = vld [vmem:[%s72] sm:$0xf]
  %v535 = vld [vmem:[%s72 + $0x4] sm:$0xf]
  %v536 = vld [vmem:[%s72 + $0x8] sm:$0xf]
  %v537 = vld [vmem:[%s72 + $0xc] sm:$0xf]
  %v538 = vld [vmem:[%s72 + $0x10] sm:$0xf]
  %v539 = vld [vmem:[%s72 + $0x14] sm:$0xf]
  %v540 = vld [vmem:[%s72 + $0x18] sm:$0xf]
  %v541 = vld [vmem:[%s72 + $0x1c] sm:$0xf]
  %v542 = vld [vmem:[%s72 + $0x20] sm:$0xf]
  %v543 = vld [vmem:[%s72 + $0x24] sm:$0xf]
  %v544 = vld [vmem:[%s72 + $0x28] sm:$0xf]
  %v545 = vld [vmem:[%s72 + $0x2c] sm:$0xf]
  %v546 = vld [vmem:[%s72 + $0x30] sm:$0xf]
  %v547 = vld [vmem:[%s72 + $0x34] sm:$0xf]
  %v548 = vld [vmem:[%s72 + $0x38] sm:$0xf]
  %v549 = vld [vmem:[%s72 + $0x3c] sm:$0xf]
  %s550 = scalar_lea.vmem [#allocation2], 192
  %551 = vst.msk [vmem:[%s550] sm:$0xf] %vm55, %v534
  %552 = vst.msk [vmem:[%s550 + $0xc] sm:$0xf] %vm55, %v535
  %553 = vst.msk [vmem:[%s550 + $0x18] sm:$0xf] %vm55, %v536
  %554 = vst.msk [vmem:[%s550 + $0x24] sm:$0xf] %vm55, %v537
  %555 = vst.msk [vmem:[%s550 + $0x30] sm:$0xf] %vm55, %v538
  %556 = vst.msk [vmem:[%s550 + $0x3c] sm:$0xf] %vm55, %v539
  %557 = vst.msk [vmem:[%s550 + $0x48] sm:$0xf] %vm55, %v540
  %558 = vst.msk [vmem:[%s550 + $0x54] sm:$0xf] %vm55, %v541
  %559 = vst.msk [vmem:[%s550 + $0x60] sm:$0xf] %vm55, %v542
  %560 = vst.msk [vmem:[%s550 + $0x6c] sm:$0xf] %vm55, %v543
  %561 = vst.msk [vmem:[%s550 + $0x78] sm:$0xf] %vm55, %v544
  %562 = vst.msk [vmem:[%s550 + $0x84] sm:$0xf] %vm55, %v545
  %563 = vst.msk [vmem:[%s550 + $0x90] sm:$0xf] %vm55, %v546
  %564 = vst.msk [vmem:[%s550 + $0x9c] sm:$0xf] %vm55, %v547
  %565 = vst.msk [vmem:[%s550 + $0xa8] sm:$0xf] %vm55, %v548
  %566 = vst.msk [vmem:[%s550 + $0xb4] sm:$0xf] %vm55, %v549
  %v567 = vld [vmem:[%s170] sm:$0xf]
  %v568 = vld [vmem:[%s170 + $0x4] sm:$0xf]
  %v569 = vld [vmem:[%s170 + $0x8] sm:$0xf]
  %v570 = vld [vmem:[%s170 + $0xc] sm:$0xf]
  %v571 = vld [vmem:[%s170 + $0x10] sm:$0xf]
  %v572 = vld [vmem:[%s170 + $0x14] sm:$0xf]
  %v573 = vld [vmem:[%s170 + $0x18] sm:$0xf]
  %v574 = vld [vmem:[%s170 + $0x1c] sm:$0xf]
  %v575 = vld [vmem:[%s170 + $0x20] sm:$0xf]
  %v576 = vld [vmem:[%s170 + $0x24] sm:$0xf]
  %v577 = vld [vmem:[%s170 + $0x28] sm:$0xf]
  %v578 = vld [vmem:[%s170 + $0x2c] sm:$0xf]
  %v579 = vld [vmem:[%s170 + $0x30] sm:$0xf]
  %v580 = vld [vmem:[%s170 + $0x34] sm:$0xf]
  %v581 = vld [vmem:[%s170 + $0x38] sm:$0xf]
  %v582 = vld [vmem:[%s170 + $0x3c] sm:$0xf]
  %599 = vrot.lane.b32.xlu0 %v567, 60
  %v600 = vpop.permute.xlu0 %599
  %601 = vrot.lane.b32.xlu0 %v568, 60
  %v602 = vpop.permute.xlu0 %601
  %603 = vrot.lane.b32.xlu0 %v569, 60
  %v604 = vpop.permute.xlu0 %603
  %605 = vrot.lane.b32.xlu0 %v570, 60
  %v606 = vpop.permute.xlu0 %605
  %607 = vrot.lane.b32.xlu0 %v571, 60
  %v608 = vpop.permute.xlu0 %607
  %609 = vrot.lane.b32.xlu0 %v572, 60
  %v610 = vpop.permute.xlu0 %609
  %611 = vrot.lane.b32.xlu0 %v573, 60
  %v612 = vpop.permute.xlu0 %611
  %613 = vrot.lane.b32.xlu0 %v574, 60
  %v614 = vpop.permute.xlu0 %613
  %615 = vrot.lane.b32.xlu0 %v575, 60
  %v616 = vpop.permute.xlu0 %615
  %617 = vrot.lane.b32.xlu0 %v576, 60
  %v618 = vpop.permute.xlu0 %617
  %619 = vrot.lane.b32.xlu0 %v577, 60
  %v620 = vpop.permute.xlu0 %619
  %621 = vrot.lane.b32.xlu0 %v578, 60
  %v622 = vpop.permute.xlu0 %621
  %623 = vrot.lane.b32.xlu0 %v579, 60
  %v624 = vpop.permute.xlu0 %623
  %625 = vrot.lane.b32.xlu0 %v580, 60
  %v626 = vpop.permute.xlu0 %625
  %627 = vrot.lane.b32.xlu0 %v581, 60
  %v628 = vpop.permute.xlu0 %627
  %629 = vrot.lane.b32.xlu0 %v582, 60
  %v630 = vpop.permute.xlu0 %629
  %647 = vst.msk [vmem:[%s550] sm:$0xf] %vm153, %v600
  %648 = vst.msk [vmem:[%s550 + $0xc] sm:$0xf] %vm153, %v602
  %649 = vst.msk [vmem:[%s550 + $0x18] sm:$0xf] %vm153, %v604
  %650 = vst.msk [vmem:[%s550 + $0x24] sm:$0xf] %vm153, %v606
  %651 = vst.msk [vmem:[%s550 + $0x30] sm:$0xf] %vm153, %v608
  %652 = vst.msk [vmem:[%s550 + $0x3c] sm:$0xf] %vm153, %v610
  %653 = vst.msk [vmem:[%s550 + $0x48] sm:$0xf] %vm153, %v612
  %654 = vst.msk [vmem:[%s550 + $0x54] sm:$0xf] %vm153, %v614
  %655 = vst.msk [vmem:[%s550 + $0x60] sm:$0xf] %vm153, %v616
  %656 = vst.msk [vmem:[%s550 + $0x6c] sm:$0xf] %vm153, %v618
  %657 = vst.msk [vmem:[%s550 + $0x78] sm:$0xf] %vm153, %v620
  %658 = vst.msk [vmem:[%s550 + $0x84] sm:$0xf] %vm153, %v622
  %659 = vst.msk [vmem:[%s550 + $0x90] sm:$0xf] %vm153, %v624
  %660 = vst.msk [vmem:[%s550 + $0x9c] sm:$0xf] %vm153, %v626
  %661 = vst.msk [vmem:[%s550 + $0xa8] sm:$0xf] %vm153, %v628
  %662 = vst.msk [vmem:[%s550 + $0xb4] sm:$0xf] %vm153, %v630
  %v663 = vld [vmem:[%s303] sm:$0xf]
  %v664 = vld [vmem:[%s303 + $0x4] sm:$0xf]
  %v665 = vld [vmem:[%s303 + $0x8] sm:$0xf]
  %v666 = vld [vmem:[%s303 + $0xc] sm:$0xf]
  %v667 = vld [vmem:[%s303 + $0x10] sm:$0xf]
  %v668 = vld [vmem:[%s303 + $0x14] sm:$0xf]
  %v669 = vld [vmem:[%s303 + $0x18] sm:$0xf]
  %v670 = vld [vmem:[%s303 + $0x1c] sm:$0xf]
  %v671 = vld [vmem:[%s303 + $0x20] sm:$0xf]
  %v672 = vld [vmem:[%s303 + $0x24] sm:$0xf]
  %v673 = vld [vmem:[%s303 + $0x28] sm:$0xf]
  %v674 = vld [vmem:[%s303 + $0x2c] sm:$0xf]
  %v675 = vld [vmem:[%s303 + $0x30] sm:$0xf]
  %v676 = vld [vmem:[%s303 + $0x34] sm:$0xf]
  %v677 = vld [vmem:[%s303 + $0x38] sm:$0xf]
  %v678 = vld [vmem:[%s303 + $0x3c] sm:$0xf]
  %695 = vrot.lane.b32.xlu0 %v663, 120
  %v696 = vpop.permute.xlu0 %695
  %697 = vrot.lane.b32.xlu0 %v664, 120
  %v698 = vpop.permute.xlu0 %697
  %699 = vrot.lane.b32.xlu0 %v665, 120
  %v700 = vpop.permute.xlu0 %699
  %701 = vrot.lane.b32.xlu0 %v666, 120
  %v702 = vpop.permute.xlu0 %701
  %703 = vrot.lane.b32.xlu0 %v667, 120
  %v704 = vpop.permute.xlu0 %703
  %705 = vrot.lane.b32.xlu0 %v668, 120
  %v706 = vpop.permute.xlu0 %705
  %707 = vrot.lane.b32.xlu0 %v669, 120
  %v708 = vpop.permute.xlu0 %707
  %709 = vrot.lane.b32.xlu0 %v670, 120
  %v710 = vpop.permute.xlu0 %709
  %711 = vrot.lane.b32.xlu0 %v671, 120
  %v712 = vpop.permute.xlu0 %711
  %713 = vrot.lane.b32.xlu0 %v672, 120
  %v714 = vpop.permute.xlu0 %713
  %715 = vrot.lane.b32.xlu0 %v673, 120
  %v716 = vpop.permute.xlu0 %715
  %717 = vrot.lane.b32.xlu0 %v674, 120
  %v718 = vpop.permute.xlu0 %717
  %719 = vrot.lane.b32.xlu0 %v675, 120
  %v720 = vpop.permute.xlu0 %719
  %721 = vrot.lane.b32.xlu0 %v676, 120
  %v722 = vpop.permute.xlu0 %721
  %723 = vrot.lane.b32.xlu0 %v677, 120
  %v724 = vpop.permute.xlu0 %723
  %725 = vrot.lane.b32.xlu0 %v678, 120
  %v726 = vpop.permute.xlu0 %725
  %v727 = vrot.slane %v696, 4
  %v728 = vrot.slane %v698, 4
  %v729 = vrot.slane %v700, 4
  %v730 = vrot.slane %v702, 4
  %v731 = vrot.slane %v704, 4
  %v732 = vrot.slane %v706, 4
  %v733 = vrot.slane %v708, 4
  %v734 = vrot.slane %v710, 4
  %v735 = vrot.slane %v712, 4
  %v736 = vrot.slane %v714, 4
  %v737 = vrot.slane %v716, 4
  %v738 = vrot.slane %v718, 4
  %v739 = vrot.slane %v720, 4
  %v740 = vrot.slane %v722, 4
  %v741 = vrot.slane %v724, 4
  %v742 = vrot.slane %v726, 4
  %v743 = vsel %vm251, %v727, %v696
  %v744 = vsel %vm251, %v728, %v698
  %v745 = vsel %vm251, %v729, %v700
  %v746 = vsel %vm251, %v730, %v702
  %v747 = vsel %vm251, %v731, %v704
  %v748 = vsel %vm251, %v732, %v706
  %v749 = vsel %vm251, %v733, %v708
  %v750 = vsel %vm251, %v734, %v710
  %v751 = vsel %vm251, %v735, %v712
  %v752 = vsel %vm251, %v736, %v714
  %v753 = vsel %vm251, %v737, %v716
  %v754 = vsel %vm251, %v738, %v718
  %v755 = vsel %vm251, %v739, %v720
  %v756 = vsel %vm251, %v740, %v722
  %v757 = vsel %vm251, %v741, %v724
  %v758 = vsel %vm251, %v742, %v726
  %775 = vst.msk [vmem:[%s550] sm:$0xff] %vm286, %v743
  %776 = vst.msk [vmem:[%s550 + $0xc] sm:$0xff] %vm286, %v744
  %777 = vst.msk [vmem:[%s550 + $0x18] sm:$0xff] %vm286, %v745
  %778 = vst.msk [vmem:[%s550 + $0x24] sm:$0xff] %vm286, %v746
  %779 = vst.msk [vmem:[%s550 + $0x30] sm:$0xff] %vm286, %v747
  %780 = vst.msk [vmem:[%s550 + $0x3c] sm:$0xff] %vm286, %v748
  %781 = vst.msk [vmem:[%s550 + $0x48] sm:$0xff] %vm286, %v749
  %782 = vst.msk [vmem:[%s550 + $0x54] sm:$0xff] %vm286, %v750
  %783 = vst.msk [vmem:[%s550 + $0x60] sm:$0xff] %vm286, %v751
  %784 = vst.msk [vmem:[%s550 + $0x6c] sm:$0xff] %vm286, %v752
  %785 = vst.msk [vmem:[%s550 + $0x78] sm:$0xff] %vm286, %v753
  %786 = vst.msk [vmem:[%s550 + $0x84] sm:$0xff] %vm286, %v754
  %787 = vst.msk [vmem:[%s550 + $0x90] sm:$0xff] %vm286, %v755
  %788 = vst.msk [vmem:[%s550 + $0x9c] sm:$0xff] %vm286, %v756
  %789 = vst.msk [vmem:[%s550 + $0xa8] sm:$0xff] %vm286, %v757
  %790 = vst.msk [vmem:[%s550 + $0xb4] sm:$0xff] %vm286, %v758
  %v791 = vld [vmem:[%s401] sm:$0xf]
  %v792 = vld [vmem:[%s401 + $0x4] sm:$0xf]
  %v793 = vld [vmem:[%s401 + $0x8] sm:$0xf]
  %v794 = vld [vmem:[%s401 + $0xc] sm:$0xf]
  %v795 = vld [vmem:[%s401 + $0x10] sm:$0xf]
  %v796 = vld [vmem:[%s401 + $0x14] sm:$0xf]
  %v797 = vld [vmem:[%s401 + $0x18] sm:$0xf]
  %v798 = vld [vmem:[%s401 + $0x1c] sm:$0xf]
  %v799 = vld [vmem:[%s401 + $0x20] sm:$0xf]
  %v800 = vld [vmem:[%s401 + $0x24] sm:$0xf]
  %v801 = vld [vmem:[%s401 + $0x28] sm:$0xf]
  %v802 = vld [vmem:[%s401 + $0x2c] sm:$0xf]
  %v803 = vld [vmem:[%s401 + $0x30] sm:$0xf]
  %v804 = vld [vmem:[%s401 + $0x34] sm:$0xf]
  %v805 = vld [vmem:[%s401 + $0x38] sm:$0xf]
  %v806 = vld [vmem:[%s401 + $0x3c] sm:$0xf]
  %823 = vrot.lane.b32.xlu0 %v791, 52
  %v824 = vpop.permute.xlu0 %823
  %825 = vrot.lane.b32.xlu0 %v792, 52
  %v826 = vpop.permute.xlu0 %825
  %827 = vrot.lane.b32.xlu0 %v793, 52
  %v828 = vpop.permute.xlu0 %827
  %829 = vrot.lane.b32.xlu0 %v794, 52
  %v830 = vpop.permute.xlu0 %829
  %831 = vrot.lane.b32.xlu0 %v795, 52
  %v832 = vpop.permute.xlu0 %831
  %833 = vrot.lane.b32.xlu0 %v796, 52
  %v834 = vpop.permute.xlu0 %833
  %835 = vrot.lane.b32.xlu0 %v797, 52
  %v836 = vpop.permute.xlu0 %835
  %837 = vrot.lane.b32.xlu0 %v798, 52
  %v838 = vpop.permute.xlu0 %837
  %839 = vrot.lane.b32.xlu0 %v799, 52
  %v840 = vpop.permute.xlu0 %839
  %841 = vrot.lane.b32.xlu0 %v800, 52
  %v842 = vpop.permute.xlu0 %841
  %843 = vrot.lane.b32.xlu0 %v801, 52
  %v844 = vpop.permute.xlu0 %843
  %845 = vrot.lane.b32.xlu0 %v802, 52
  %v846 = vpop.permute.xlu0 %845
  %847 = vrot.lane.b32.xlu0 %v803, 52
  %v848 = vpop.permute.xlu0 %847
  %849 = vrot.lane.b32.xlu0 %v804, 52
  %v850 = vpop.permute.xlu0 %849
  %851 = vrot.lane.b32.xlu0 %v805, 52
  %v852 = vpop.permute.xlu0 %851
  %853 = vrot.lane.b32.xlu0 %v806, 52
  %v854 = vpop.permute.xlu0 %853
  %871 = vst.msk [vmem:[%s550 + $0x4] sm:$0xf] %vm384, %v824
  %872 = vst.msk [vmem:[%s550 + $0x10] sm:$0xf] %vm384, %v826
  %873 = vst.msk [vmem:[%s550 + $0x1c] sm:$0xf] %vm384, %v828
  %874 = vst.msk [vmem:[%s550 + $0x28] sm:$0xf] %vm384, %v830
  %875 = vst.msk [vmem:[%s550 + $0x34] sm:$0xf] %vm384, %v832
  %876 = vst.msk [vmem:[%s550 + $0x40] sm:$0xf] %vm384, %v834
  %877 = vst.msk [vmem:[%s550 + $0x4c] sm:$0xf] %vm384, %v836
  %878 = vst.msk [vmem:[%s550 + $0x58] sm:$0xf] %vm384, %v838
  %879 = vst.msk [vmem:[%s550 + $0x64] sm:$0xf] %vm384, %v840
  %880 = vst.msk [vmem:[%s550 + $0x70] sm:$0xf] %vm384, %v842
  %881 = vst.msk [vmem:[%s550 + $0x7c] sm:$0xf] %vm384, %v844
  %882 = vst.msk [vmem:[%s550 + $0x88] sm:$0xf] %vm384, %v846
  %883 = vst.msk [vmem:[%s550 + $0x94] sm:$0xf] %vm384, %v848
  %884 = vst.msk [vmem:[%s550 + $0xa0] sm:$0xf] %vm384, %v850
  %885 = vst.msk [vmem:[%s550 + $0xac] sm:$0xf] %vm384, %v852
  %886 = vst.msk [vmem:[%s550 + $0xb8] sm:$0xf] %vm384, %v854
  %s887 = scalar_lea.vmem %s0, 96
  %v888 = vld [vmem:[%s887] sm:$0xf]
  %v889 = vld [vmem:[%s887 + $0x4] sm:$0xf]
  %v890 = vld [vmem:[%s887 + $0x8] sm:$0xf]
  %v891 = vld [vmem:[%s887 + $0xc] sm:$0xf]
  %v892 = vld [vmem:[%s887 + $0x10] sm:$0xf]
  %v893 = vld [vmem:[%s887 + $0x14] sm:$0xf]
  %v894 = vld [vmem:[%s887 + $0x18] sm:$0xf]
  %v895 = vld [vmem:[%s887 + $0x1c] sm:$0xf]
  %v896 = vld [vmem:[%s887 + $0x20] sm:$0xf]
  %v897 = vld [vmem:[%s887 + $0x24] sm:$0xf]
  %v898 = vld [vmem:[%s887 + $0x28] sm:$0xf]
  %v899 = vld [vmem:[%s887 + $0x2c] sm:$0xf]
  %v900 = vld [vmem:[%s887 + $0x30] sm:$0xf]
  %v901 = vld [vmem:[%s887 + $0x34] sm:$0xf]
  %v902 = vld [vmem:[%s887 + $0x38] sm:$0xf]
  %v903 = vld [vmem:[%s887 + $0x3c] sm:$0xf]
  %920 = vrot.lane.b32.xlu0 %v888, 112
  %v921 = vpop.permute.xlu0 %920
  %922 = vrot.lane.b32.xlu0 %v889, 112
  %v923 = vpop.permute.xlu0 %922
  %924 = vrot.lane.b32.xlu0 %v890, 112
  %v925 = vpop.permute.xlu0 %924
  %926 = vrot.lane.b32.xlu0 %v891, 112
  %v927 = vpop.permute.xlu0 %926
  %928 = vrot.lane.b32.xlu0 %v892, 112
  %v929 = vpop.permute.xlu0 %928
  %930 = vrot.lane.b32.xlu0 %v893, 112
  %v931 = vpop.permute.xlu0 %930
  %932 = vrot.lane.b32.xlu0 %v894, 112
  %v933 = vpop.permute.xlu0 %932
  %934 = vrot.lane.b32.xlu0 %v895, 112
  %v935 = vpop.permute.xlu0 %934
  %936 = vrot.lane.b32.xlu0 %v896, 112
  %v937 = vpop.permute.xlu0 %936
  %938 = vrot.lane.b32.xlu0 %v897, 112
  %v939 = vpop.permute.xlu0 %938
  %940 = vrot.lane.b32.xlu0 %v898, 112
  %v941 = vpop.permute.xlu0 %940
  %942 = vrot.lane.b32.xlu0 %v899, 112
  %v943 = vpop.permute.xlu0 %942
  %944 = vrot.lane.b32.xlu0 %v900, 112
  %v945 = vpop.permute.xlu0 %944
  %946 = vrot.lane.b32.xlu0 %v901, 112
  %v947 = vpop.permute.xlu0 %946
  %948 = vrot.lane.b32.xlu0 %v902, 112
  %v949 = vpop.permute.xlu0 %948
  %950 = vrot.lane.b32.xlu0 %v903, 112
  %v951 = vpop.permute.xlu0 %950
  %v952 = vrot.slane %v921, 4
  %v953 = vrot.slane %v923, 4
  %v954 = vrot.slane %v925, 4
  %v955 = vrot.slane %v927, 4
  %v956 = vrot.slane %v929, 4
  %v957 = vrot.slane %v931, 4
  %v958 = vrot.slane %v933, 4
  %v959 = vrot.slane %v935, 4
  %v960 = vrot.slane %v937, 4
  %v961 = vrot.slane %v939, 4
  %v962 = vrot.slane %v941, 4
  %v963 = vrot.slane %v943, 4
  %v964 = vrot.slane %v945, 4
  %v965 = vrot.slane %v947, 4
  %v966 = vrot.slane %v949, 4
  %v967 = vrot.slane %v951, 4
  %v968 = vsel %vm482, %v952, %v921
  %v969 = vsel %vm482, %v953, %v923
  %v970 = vsel %vm482, %v954, %v925
  %v971 = vsel %vm482, %v955, %v927
  %v972 = vsel %vm482, %v956, %v929
  %v973 = vsel %vm482, %v957, %v931
  %v974 = vsel %vm482, %v958, %v933
  %v975 = vsel %vm482, %v959, %v935
  %v976 = vsel %vm482, %v960, %v937
  %v977 = vsel %vm482, %v961, %v939
  %v978 = vsel %vm482, %v962, %v941
  %v979 = vsel %vm482, %v963, %v943
  %v980 = vsel %vm482, %v964, %v945
  %v981 = vsel %vm482, %v965, %v947
  %v982 = vsel %vm482, %v966, %v949
  %v983 = vsel %vm482, %v967, %v951
  %1000 = vst.msk [vmem:[%s550 + $0x4] sm:$0xff] %vm517, %v968
  %1001 = vst.msk [vmem:[%s550 + $0x10] sm:$0xff] %vm517, %v969
  %1002 = vst.msk [vmem:[%s550 + $0x1c] sm:$0xff] %vm517, %v970
  %1003 = vst.msk [vmem:[%s550 + $0x28] sm:$0xff] %vm517, %v971
  %1004 = vst.msk [vmem:[%s550 + $0x34] sm:$0xff] %vm517, %v972
  %1005 = vst.msk [vmem:[%s550 + $0x40] sm:$0xff] %vm517, %v973
  %1006 = vst.msk [vmem:[%s550 + $0x4c] sm:$0xff] %vm517, %v974
  %1007 = vst.msk [vmem:[%s550 + $0x58] sm:$0xff] %vm517, %v975
  %1008 = vst.msk [vmem:[%s550 + $0x64] sm:$0xff] %vm517, %v976
  %1009 = vst.msk [vmem:[%s550 + $0x70] sm:$0xff] %vm517, %v977
  %1010 = vst.msk [vmem:[%s550 + $0x7c] sm:$0xff] %vm517, %v978
  %1011 = vst.msk [vmem:[%s550 + $0x88] sm:$0xff] %vm517, %v979
  %1012 = vst.msk [vmem:[%s550 + $0x94] sm:$0xff] %vm517, %v980
  %1013 = vst.msk [vmem:[%s550 + $0xa0] sm:$0xff] %vm517, %v981
  %1014 = vst.msk [vmem:[%s550 + $0xac] sm:$0xff] %vm517, %v982
  %1015 = vst.msk [vmem:[%s550 + $0xb8] sm:$0xff] %vm517, %v983
  %v1016 = vld [vmem:[#allocation2] sm:$0xff]
  %v1017 = vld [vmem:[#allocation2 + $0x8] sm:$0xf]
  %v1018 = vld [vmem:[#allocation2 + $0xc] sm:$0xff]
  %v1019 = vld [vmem:[#allocation2 + $0x14] sm:$0xf]
  %v1020 = vld [vmem:[#allocation2 + $0x18] sm:$0xff]
  %v1021 = vld [vmem:[#allocation2 + $0x20] sm:$0xf]
  %v1022 = vld [vmem:[#allocation2 + $0x24] sm:$0xff]
  %v1023 = vld [vmem:[#allocation2 + $0x2c] sm:$0xf]
  %v1024 = vld [vmem:[#allocation2 + $0x30] sm:$0xff]
  %v1025 = vld [vmem:[#allocation2 + $0x38] sm:$0xf]
  %v1026 = vld [vmem:[#allocation2 + $0x3c] sm:$0xff]
  %v1027 = vld [vmem:[#allocation2 + $0x44] sm:$0xf]
  %v1028 = vld [vmem:[#allocation2 + $0x48] sm:$0xff]
  %v1029 = vld [vmem:[#allocation2 + $0x50] sm:$0xf]
  %v1030 = vld [vmem:[#allocation2 + $0x54] sm:$0xff]
  %v1031 = vld [vmem:[#allocation2 + $0x5c] sm:$0xf]
  %v1032 = vld [vmem:[#allocation2 + $0x60] sm:$0xff]
  %v1033 = vld [vmem:[#allocation2 + $0x68] sm:$0xf]
  %v1034 = vld [vmem:[#allocation2 + $0x6c] sm:$0xff]
  %v1035 = vld [vmem:[#allocation2 + $0x74] sm:$0xf]
  %v1036 = vld [vmem:[#allocation2 + $0x78] sm:$0xff]
  %v1037 = vld [vmem:[#allocation2 + $0x80] sm:$0xf]
  %v1038 = vld [vmem:[#allocation2 + $0x84] sm:$0xff]
  %v1039 = vld [vmem:[#allocation2 + $0x8c] sm:$0xf]
  %v1040 = vld [vmem:[#allocation2 + $0x90] sm:$0xff]
  %v1041 = vld [vmem:[#allocation2 + $0x98] sm:$0xf]
  %v1042 = vld [vmem:[#allocation2 + $0x9c] sm:$0xff]
  %v1043 = vld [vmem:[#allocation2 + $0xa4] sm:$0xf]
  %v1044 = vld [vmem:[#allocation2 + $0xa8] sm:$0xff]
  %v1045 = vld [vmem:[#allocation2 + $0xb0] sm:$0xf]
  %v1046 = vld [vmem:[#allocation2 + $0xb4] sm:$0xff]
  %v1047 = vld [vmem:[#allocation2 + $0xbc] sm:$0xf]
  %v1048 = vld [vmem:[#allocation2 + $0xc0] sm:$0xff]
  %v1049 = vld [vmem:[#allocation2 + $0xc8] sm:$0xf]
  %v1050 = vld [vmem:[#allocation2 + $0xcc] sm:$0xff]
  %v1051 = vld [vmem:[#allocation2 + $0xd4] sm:$0xf]
  %v1052 = vld [vmem:[#allocation2 + $0xd8] sm:$0xff]
  %v1053 = vld [vmem:[#allocation2 + $0xe0] sm:$0xf]
  %v1054 = vld [vmem:[#allocation2 + $0xe4] sm:$0xff]
  %v1055 = vld [vmem:[#allocation2 + $0xec] sm:$0xf]
  %v1056 = vld [vmem:[#allocation2 + $0xf0] sm:$0xff]
  %v1057 = vld [vmem:[#allocation2 + $0xf8] sm:$0xf]
  %v1058 = vld [vmem:[#allocation2 + $0xfc] sm:$0xff]
  %v1059 = vld [vmem:[#allocation2 + $0x104] sm:$0xf]
  %v1060 = vld [vmem:[#allocation2 + $0x108] sm:$0xff]
  %v1061 = vld [vmem:[#allocation2 + $0x110] sm:$0xf]
  %v1062 = vld [vmem:[#allocation2 + $0x114] sm:$0xff]
  %v1063 = vld [vmem:[#allocation2 + $0x11c] sm:$0xf]
  %v1064 = vld [vmem:[#allocation2 + $0x120] sm:$0xff]
  %v1065 = vld [vmem:[#allocation2 + $0x128] sm:$0xf]
  %v1066 = vld [vmem:[#allocation2 + $0x12c] sm:$0xff]
  %v1067 = vld [vmem:[#allocation2 + $0x134] sm:$0xf]
  %v1068 = vld [vmem:[#allocation2 + $0x138] sm:$0xff]
  %v1069 = vld [vmem:[#allocation2 + $0x140] sm:$0xf]
  %v1070 = vld [vmem:[#allocation2 + $0x144] sm:$0xff]
  %v1071 = vld [vmem:[#allocation2 + $0x14c] sm:$0xf]
  %v1072 = vld [vmem:[#allocation2 + $0x150] sm:$0xff]
  %v1073 = vld [vmem:[#allocation2 + $0x158] sm:$0xf]
  %v1074 = vld [vmem:[#allocation2 + $0x15c] sm:$0xff]
  %v1075 = vld [vmem:[#allocation2 + $0x164] sm:$0xf]
  %v1076 = vld [vmem:[#allocation2 + $0x168] sm:$0xff]
  %v1077 = vld [vmem:[#allocation2 + $0x170] sm:$0xf]
  %v1078 = vld [vmem:[#allocation2 + $0x174] sm:$0xff]
  %v1079 = vld [vmem:[#allocation2 + $0x17c] sm:$0xf]
  %v1080 = vld [vmem:[%s1] sm:$0xf]
  %v1081 = vld [vmem:[%s1 + $0x4] sm:$0xf]
  %v1082 = vld [vmem:[%s1 + $0x8] sm:$0xf]
  %v1083 = vld [vmem:[%s1 + $0xc] sm:$0xf]
  %v1084 = vld [vmem:[%s1 + $0x10] sm:$0xf]
  %v1085 = vld [vmem:[%s1 + $0x14] sm:$0xf]
  %v1086 = vld [vmem:[%s1 + $0x18] sm:$0xf]
  %v1087 = vld [vmem:[%s1 + $0x1c] sm:$0xf]
  %v1088 = vld [vmem:[%s1 + $0x20] sm:$0xf]
  %v1089 = vld [vmem:[%s1 + $0x24] sm:$0xf]
  %v1090 = vld [vmem:[%s1 + $0x28] sm:$0xf]
  %v1091 = vld [vmem:[%s1 + $0x2c] sm:$0xf]
  %v1092 = vld [vmem:[%s1 + $0x30] sm:$0xf]
  %v1093 = vld [vmem:[%s1 + $0x34] sm:$0xf]
  %v1094 = vld [vmem:[%s1 + $0x38] sm:$0xf]
  %v1095 = vld [vmem:[%s1 + $0x3c] sm:$0xf]
  %v1096 = vld [vmem:[%s1 + $0x40] sm:$0xf]
  %v1097 = vld [vmem:[%s1 + $0x44] sm:$0xf]
  %v1098 = vld [vmem:[%s1 + $0x48] sm:$0xf]
  %v1099 = vld [vmem:[%s1 + $0x4c] sm:$0xf]
  %v1100 = vld [vmem:[%s1 + $0x50] sm:$0xf]
  %v1101 = vld [vmem:[%s1 + $0x54] sm:$0xf]
  %v1102 = vld [vmem:[%s1 + $0x58] sm:$0xf]
  %v1103 = vld [vmem:[%s1 + $0x5c] sm:$0xf]
  %v1104 = vld [vmem:[%s1 + $0x60] sm:$0xf]
  %v1105 = vld [vmem:[%s1 + $0x64] sm:$0xf]
  %v1106 = vld [vmem:[%s1 + $0x68] sm:$0xf]
  %v1107 = vld [vmem:[%s1 + $0x6c] sm:$0xf]
  %v1108 = vld [vmem:[%s1 + $0x70] sm:$0xf]
  %v1109 = vld [vmem:[%s1 + $0x74] sm:$0xf]
  %v1110 = vld [vmem:[%s1 + $0x78] sm:$0xf]
  %v1111 = vld [vmem:[%s1 + $0x7c] sm:$0xf]
  %v1112 = vld [vmem:[%s1 + $0x80] sm:$0xf]
  %v1113 = vld [vmem:[%s1 + $0x84] sm:$0xf]
  %v1114 = vld [vmem:[%s1 + $0x88] sm:$0xf]
  %v1115 = vld [vmem:[%s1 + $0x8c] sm:$0xf]
  %v1116 = vld [vmem:[%s1 + $0x90] sm:$0xf]
  %v1117 = vld [vmem:[%s1 + $0x94] sm:$0x3]
  %v1118 = vld [vmem:[%s2] sm:$0x1]
  %v1120 = vlaneseq
  %v1121 = vshrl.u32 %v1120, 7
  %v1122 = vsub.s32 0, %v1121
  %v1123 = vrot.slane %v1118, %v1122
  %v1189 = vunpack.c.l.b16 %v1016
  %v1190 = vunpack.c.h.b16 %v1016
  %v1191 = vunpack.c.l.b16 %v1017
  %v1192 = vunpack.c.l.b16 %v1018
  %v1193 = vunpack.c.h.b16 %v1018
  %v1194 = vunpack.c.l.b16 %v1019
  %v1195 = vunpack.c.l.b16 %v1020
  %v1196 = vunpack.c.h.b16 %v1020
  %v1197 = vunpack.c.l.b16 %v1021
  %v1198 = vunpack.c.l.b16 %v1022
  %v1199 = vunpack.c.h.b16 %v1022
  %v1200 = vunpack.c.l.b16 %v1023
  %v1201 = vunpack.c.l.b16 %v1024
  %v1202 = vunpack.c.h.b16 %v1024
  %v1203 = vunpack.c.l.b16 %v1025
  %v1204 = vunpack.c.l.b16 %v1026
  %v1205 = vunpack.c.h.b16 %v1026
  %v1206 = vunpack.c.l.b16 %v1027
  %v1207 = vunpack.c.l.b16 %v1028
  %v1208 = vunpack.c.h.b16 %v1028
  %v1209 = vunpack.c.l.b16 %v1029
  %v1210 = vunpack.c.l.b16 %v1030
  %v1211 = vunpack.c.h.b16 %v1030
  %v1212 = vunpack.c.l.b16 %v1031
  %v1213 = vunpack.c.l.b16 %v1032
  %v1214 = vunpack.c.h.b16 %v1032
  %v1215 = vunpack.c.l.b16 %v1033
  %v1216 = vunpack.c.l.b16 %v1034
  %v1217 = vunpack.c.h.b16 %v1034
  %v1218 = vunpack.c.l.b16 %v1035
  %v1219 = vunpack.c.l.b16 %v1036
  %v1220 = vunpack.c.h.b16 %v1036
  %v1221 = vunpack.c.l.b16 %v1037
  %v1222 = vunpack.c.l.b16 %v1038
  %v1223 = vunpack.c.h.b16 %v1038
  %v1224 = vunpack.c.l.b16 %v1039
  %v1225 = vunpack.c.l.b16 %v1040
  %v1226 = vunpack.c.h.b16 %v1040
  %v1227 = vunpack.c.l.b16 %v1041
  %v1228 = vunpack.c.l.b16 %v1042
  %v1229 = vunpack.c.h.b16 %v1042
  %v1230 = vunpack.c.l.b16 %v1043
  %v1231 = vunpack.c.l.b16 %v1044
  %v1232 = vunpack.c.h.b16 %v1044
  %v1233 = vunpack.c.l.b16 %v1045
  %v1234 = vunpack.c.l.b16 %v1046
  %v1235 = vunpack.c.h.b16 %v1046
  %v1236 = vunpack.c.l.b16 %v1047
  %v1237 = vunpack.c.l.b16 %v1048
  %v1238 = vunpack.c.h.b16 %v1048
  %v1239 = vunpack.c.l.b16 %v1049
  %v1240 = vunpack.c.l.b16 %v1050
  %v1241 = vunpack.c.h.b16 %v1050
  %v1242 = vunpack.c.l.b16 %v1051
  %v1243 = vunpack.c.l.b16 %v1052
  %v1244 = vunpack.c.h.b16 %v1052
  %v1245 = vunpack.c.l.b16 %v1053
  %v1246 = vunpack.c.l.b16 %v1054
  %v1247 = vunpack.c.h.b16 %v1054
  %v1248 = vunpack.c.l.b16 %v1055
  %v1249 = vunpack.c.l.b16 %v1056
  %v1250 = vunpack.c.h.b16 %v1056
  %v1251 = vunpack.c.l.b16 %v1057
  %v1252 = vunpack.c.l.b16 %v1058
  %v1253 = vunpack.c.h.b16 %v1058
  %v1254 = vunpack.c.l.b16 %v1059
  %v1255 = vunpack.c.l.b16 %v1060
  %v1256 = vunpack.c.h.b16 %v1060
  %v1257 = vunpack.c.l.b16 %v1061
  %v1258 = vunpack.c.l.b16 %v1062
  %v1259 = vunpack.c.h.b16 %v1062
  %v1260 = vunpack.c.l.b16 %v1063
  %v1261 = vunpack.c.l.b16 %v1064
  %v1262 = vunpack.c.h.b16 %v1064
  %v1263 = vunpack.c.l.b16 %v1065
  %v1264 = vunpack.c.l.b16 %v1066
  %v1265 = vunpack.c.h.b16 %v1066
  %v1266 = vunpack.c.l.b16 %v1067
  %v1267 = vunpack.c.l.b16 %v1068
  %v1268 = vunpack.c.h.b16 %v1068
  %v1269 = vunpack.c.l.b16 %v1069
  %v1270 = vunpack.c.l.b16 %v1070
  %v1271 = vunpack.c.h.b16 %v1070
  %v1272 = vunpack.c.l.b16 %v1071
  %v1273 = vunpack.c.l.b16 %v1072
  %v1274 = vunpack.c.h.b16 %v1072
  %v1275 = vunpack.c.l.b16 %v1073
  %v1276 = vunpack.c.l.b16 %v1074
  %v1277 = vunpack.c.h.b16 %v1074
  %v1278 = vunpack.c.l.b16 %v1075
  %v1279 = vunpack.c.l.b16 %v1076
  %v1280 = vunpack.c.h.b16 %v1076
  %v1281 = vunpack.c.l.b16 %v1077
  %v1282 = vunpack.c.l.b16 %v1078
  %v1283 = vunpack.c.h.b16 %v1078
  %v1284 = vunpack.c.l.b16 %v1079
  %v1285 = vpack.c.b16 %v1192, %v1189
  %v1286 = vpack.c.b16 %v1193, %v1190
  %v1287 = vpack.c.b16 %v1194, %v1191
  %v1288 = vpack.c.b16 %v1198, %v1195
  %v1289 = vpack.c.b16 %v1199, %v1196
  %v1290 = vpack.c.b16 %v1200, %v1197
  %v1291 = vpack.c.b16 %v1204, %v1201
  %v1292 = vpack.c.b16 %v1205, %v1202
  %v1293 = vpack.c.b16 %v1206, %v1203
  %v1294 = vpack.c.b16 %v1210, %v1207
  %v1295 = vpack.c.b16 %v1211, %v1208
  %v1296 = vpack.c.b16 %v1212, %v1209
  %v1297 = vpack.c.b16 %v1216, %v1213
  %v1298 = vpack.c.b16 %v1217, %v1214
  %v1299 = vpack.c.b16 %v1218, %v1215
  %v1300 = vpack.c.b16 %v1222, %v1219
  %v1301 = vpack.c.b16 %v1223, %v1220
  %v1302 = vpack.c.b16 %v1224, %v1221
  %v1303 = vpack.c.b16 %v1228, %v1225
  %v1304 = vpack.c.b16 %v1229, %v1226
  %v1305 = vpack.c.b16 %v1230, %v1227
  %v1306 = vpack.c.b16 %v1234, %v1231
  %v1307 = vpack.c.b16 %v1235, %v1232
  %v1308 = vpack.c.b16 %v1236, %v1233
  %v1309 = vpack.c.b16 %v1240, %v1237
  %v1310 = vpack.c.b16 %v1241, %v1238
  %v1311 = vpack.c.b16 %v1242, %v1239
  %v1312 = vpack.c.b16 %v1246, %v1243
  %v1313 = vpack.c.b16 %v1247, %v1244
  %v1314 = vpack.c.b16 %v1248, %v1245
  %v1315 = vpack.c.b16 %v1252, %v1249
  %v1316 = vpack.c.b16 %v1253, %v1250
  %v1317 = vpack.c.b16 %v1254, %v1251
  %v1318 = vpack.c.b16 %v1258, %v1255
  %v1319 = vpack.c.b16 %v1259, %v1256
  %v1320 = vpack.c.b16 %v1260, %v1257
  %v1321 = vpack.c.b16 %v1264, %v1261
  %v1322 = vpack.c.b16 %v1265, %v1262
  %v1323 = vpack.c.b16 %v1266, %v1263
  %v1324 = vpack.c.b16 %v1270, %v1267
  %v1325 = vpack.c.b16 %v1271, %v1268
  %v1326 = vpack.c.b16 %v1272, %v1269
  %v1327 = vpack.c.b16 %v1276, %v1273
  %v1328 = vpack.c.b16 %v1277, %v1274
  %v1329 = vpack.c.b16 %v1278, %v1275
  %v1330 = vpack.c.b16 %v1282, %v1279
  %v1331 = vpack.c.b16 %v1283, %v1280
  %v1332 = vpack.c.b16 %v1284, %v1281
  %v1403 = vunpack.c.l.b16 %v1080
  %v1404 = vunpack.c.l.b16 %v1081
  %v1405 = vunpack.c.l.b16 %v1082
  %v1406 = vunpack.c.l.b16 %v1083
  %v1407 = vunpack.c.l.b16 %v1084
  %v1408 = vunpack.c.l.b16 %v1085
  %v1409 = vunpack.c.l.b16 %v1086
  %v1410 = vunpack.c.l.b16 %v1087
  %v1411 = vunpack.c.l.b16 %v1088
  %v1412 = vunpack.c.l.b16 %v1089
  %v1413 = vunpack.c.l.b16 %v1090
  %v1414 = vunpack.c.l.b16 %v1091
  %v1415 = vunpack.c.l.b16 %v1092
  %v1416 = vunpack.c.l.b16 %v1093
  %v1417 = vunpack.c.l.b16 %v1094
  %v1418 = vunpack.c.l.b16 %v1095
  %v1419 = vunpack.c.l.b16 %v1096
  %v1420 = vunpack.c.l.b16 %v1097
  %v1421 = vunpack.c.l.b16 %v1098
  %v1422 = vunpack.c.l.b16 %v1099
  %v1423 = vunpack.c.l.b16 %v1100
  %v1424 = vunpack.c.l.b16 %v1101
  %v1425 = vunpack.c.l.b16 %v1102
  %v1426 = vunpack.c.l.b16 %v1103
  %v1427 = vunpack.c.l.b16 %v1104
  %v1428 = vunpack.c.l.b16 %v1105
  %v1429 = vunpack.c.l.b16 %v1106
  %v1430 = vunpack.c.l.b16 %v1107
  %v1431 = vunpack.c.l.b16 %v1108
  %v1432 = vunpack.c.l.b16 %v1109
  %v1433 = vunpack.c.l.b16 %v1110
  %v1434 = vunpack.c.l.b16 %v1111
  %v1435 = vunpack.c.l.b16 %v1112
  %v1436 = vunpack.c.l.b16 %v1113
  %v1437 = vunpack.c.l.b16 %v1114
  %v1438 = vunpack.c.l.b16 %v1115
  %v1439 = vunpack.c.l.b16 %v1116
  %v1440 = vunpack.c.l.b16 %v1117
  %v1441 = vpack.c.b16 %v1404, %v1403
  %v1442 = vpack.c.b16 %v1406, %v1405
  %v1443 = vpack.c.b16 %v1408, %v1407
  %v1444 = vpack.c.b16 %v1410, %v1409
  %v1445 = vpack.c.b16 %v1412, %v1411
  %v1446 = vpack.c.b16 %v1414, %v1413
  %v1447 = vpack.c.b16 %v1416, %v1415
  %v1448 = vpack.c.b16 %v1418, %v1417
  %v1449 = vpack.c.b16 %v1420, %v1419
  %v1450 = vpack.c.b16 %v1422, %v1421
  %v1451 = vpack.c.b16 %v1424, %v1423
  %v1452 = vpack.c.b16 %v1426, %v1425
  %v1453 = vpack.c.b16 %v1428, %v1427
  %v1454 = vpack.c.b16 %v1430, %v1429
  %v1455 = vpack.c.b16 %v1432, %v1431
  %v1456 = vpack.c.b16 %v1434, %v1433
  %v1457 = vpack.c.b16 %v1436, %v1435
  %v1458 = vpack.c.b16 %v1438, %v1437
  %v1459 = vpack.c.b16 %v1440, %v1439
  %vm1478 = vcmask 359424
  %v1480 = vsel %vm1478, %v1287, 0
  %v1483 = vsel %vm1478, %v1290, 0
  %v1486 = vsel %vm1478, %v1293, 0
  %v1489 = vsel %vm1478, %v1296, 0
  %v1492 = vsel %vm1478, %v1299, 0
  %v1495 = vsel %vm1478, %v1302, 0
  %v1498 = vsel %vm1478, %v1305, 0
  %v1501 = vsel %vm1478, %v1308, 0
  %v1504 = vsel %vm1478, %v1311, 0
  %v1507 = vsel %vm1478, %v1314, 0
  %v1510 = vsel %vm1478, %v1317, 0
  %v1513 = vsel %vm1478, %v1320, 0
  %v1516 = vsel %vm1478, %v1323, 0
  %v1519 = vsel %vm1478, %v1326, 0
  %v1522 = vsel %vm1478, %v1329, 0
  %v1525 = vsel %vm1478, %v1332, 0
  %vm1527 = vcmask 1045504
  %v1529 = vsel %vm1527, %v1459, 0
  %1531 = vmatprep.subr.bf16.mxu0 0
  %1532 = vmatpush1.bf16.msra.mxu0 %v1448
  %1533 = vmatprep.subr.bf16.mxu0 0
  %1534 = vmatpush1.bf16.msra.mxu0 %v1447
  %1535 = vmatprep.subr.bf16.mxu0 0
  %1536 = vmatpush1.bf16.msra.mxu0 %v1446
  %1537 = vmatprep.subr.bf16.mxu0 0
  %1538 = vmatpush1.bf16.msra.mxu0 %v1445
  %1539 = vmatprep.subr.bf16.mxu0 0
  %1540 = vmatpush1.bf16.msra.mxu0 %v1444
  %1541 = vmatprep.subr.bf16.mxu0 0
  %1542 = vmatpush1.bf16.msra.mxu0 %v1443
  %1543 = vmatprep.subr.bf16.mxu0 0
  %1544 = vmatpush1.bf16.msra.mxu0 %v1442
  %1545 = vmatprep.subr.bf16.mxu0 0
  %1546 = vmatpush1.bf16.msra.mxu0 %v1441
  %1547 = vmatprep.subr.bf16.mxu0 0
  %1548 = vmatpush2.bf16.msra.mxu0 %v1456
  %1549 = vmatprep.subr.bf16.mxu0 0
  %1550 = vmatpush2.bf16.msra.mxu0 %v1455
  %1551 = vmatprep.subr.bf16.mxu0 0
  %1552 = vmatpush2.bf16.msra.mxu0 %v1454
  %1553 = vmatprep.subr.bf16.mxu0 0
  %1554 = vmatpush2.bf16.msra.mxu0 %v1453
  %1555 = vmatprep.subr.bf16.mxu0 0
  %1556 = vmatpush2.bf16.msra.mxu0 %v1452
  %1557 = vmatprep.subr.bf16.mxu0 0
  %1558 = vmatpush2.bf16.msra.mxu0 %v1451
  %1559 = vmatprep.subr.bf16.mxu0 0
  %1560 = vmatpush2.bf16.msra.mxu0 %v1450
  %1561 = vmatprep.subr.bf16.mxu0 0
  %1562 = vmatpush2.bf16.msra.mxu0 %v1449
  %1563 = vmatprep.mubr.bf16.mxu0 %v1286
  %1564 = vmatmul.mubr.bf16.gmra.mxu0 %v1285
  %v1565 = vpop.f32.mrf.mxu0
  %v1566 = vadd.f32 %v1123, %v1565
  %v1567 = vpop.f32.mrf.mxu0
  %v1568 = vpop.f32.mrf.mxu0
  %v1569 = vadd.f32 %v1123, %v1568
  %v1570 = vpop.f32.mrf.mxu0
  %1571 = vmatprep.mubr.bf16.mxu0 %v1289
  %1572 = vmatmul.mubr.bf16.gmra.mxu0 %v1288
  %v1573 = vpop.f32.mrf.mxu0
  %v1574 = vadd.f32 %v1123, %v1573
  %v1575 = vpop.f32.mrf.mxu0
  %v1576 = vpop.f32.mrf.mxu0
  %v1577 = vadd.f32 %v1123, %v1576
  %v1578 = vpop.f32.mrf.mxu0
  %1579 = vmatprep.mubr.bf16.mxu0 %v1292
  %1580 = vmatmul.mubr.bf16.gmra.mxu0 %v1291
  %v1581 = vpop.f32.mrf.mxu0
  %v1582 = vadd.f32 %v1123, %v1581
  %v1583 = vpop.f32.mrf.mxu0
  %v1584 = vpop.f32.mrf.mxu0
  %v1585 = vadd.f32 %v1123, %v1584
  %v1586 = vpop.f32.mrf.mxu0
  %1587 = vmatprep.mubr.bf16.mxu0 %v1295
  %1588 = vmatmul.mubr.bf16.gmra.mxu0 %v1294
  %v1589 = vpop.f32.mrf.mxu0
  %v1590 = vadd.f32 %v1123, %v1589
  %v1591 = vpop.f32.mrf.mxu0
  %v1592 = vpop.f32.mrf.mxu0
  %v1593 = vadd.f32 %v1123, %v1592
  %v1594 = vpop.f32.mrf.mxu0
  %1595 = vmatprep.mubr.bf16.mxu0 %v1298
  %1596 = vmatmul.mubr.bf16.gmra.mxu0 %v1297
  %v1597 = vpop.f32.mrf.mxu0
  %v1598 = vadd.f32 %v1123, %v1597
  %v1599 = vpop.f32.mrf.mxu0
  %v1600 = vpop.f32.mrf.mxu0
  %v1601 = vadd.f32 %v1123, %v1600
  %v1602 = vpop.f32.mrf.mxu0
  %1603 = vmatprep.mubr.bf16.mxu0 %v1301
  %1604 = vmatmul.mubr.bf16.gmra.mxu0 %v1300
  %v1605 = vpop.f32.mrf.mxu0
  %v1606 = vadd.f32 %v1123, %v1605
  %v1607 = vpop.f32.mrf.mxu0
  %v1608 = vpop.f32.mrf.mxu0
  %v1609 = vadd.f32 %v1123, %v1608
  %v1610 = vpop.f32.mrf.mxu0
  %1611 = vmatprep.mubr.bf16.mxu0 %v1304
  %1612 = vmatmul.mubr.bf16.gmra.mxu0 %v1303
  %v1613 = vpop.f32.mrf.mxu0
  %v1614 = vadd.f32 %v1123, %v1613
  %v1615 = vpop.f32.mrf.mxu0
  %v1616 = vpop.f32.mrf.mxu0
  %v1617 = vadd.f32 %v1123, %v1616
  %v1618 = vpop.f32.mrf.mxu0
  %1619 = vmatprep.mubr.bf16.mxu0 %v1307
  %1620 = vmatmul.mubr.bf16.gmra.mxu0 %v1306
  %v1621 = vpop.f32.mrf.mxu0
  %v1622 = vadd.f32 %v1123, %v1621
  %v1623 = vpop.f32.mrf.mxu0
  %v1624 = vpop.f32.mrf.mxu0
  %v1625 = vadd.f32 %v1123, %v1624
  %v1626 = vpop.f32.mrf.mxu0
  %1627 = vmatprep.mubr.bf16.mxu0 %v1310
  %1628 = vmatmul.mubr.bf16.gmra.mxu0 %v1309
  %v1629 = vpop.f32.mrf.mxu0
  %v1630 = vadd.f32 %v1123, %v1629
  %v1631 = vpop.f32.mrf.mxu0
  %v1632 = vpop.f32.mrf.mxu0
  %v1633 = vadd.f32 %v1123, %v1632
  %v1634 = vpop.f32.mrf.mxu0
  %1635 = vmatprep.mubr.bf16.mxu0 %v1313
  %1636 = vmatmul.mubr.bf16.gmra.mxu0 %v1312
  %v1637 = vpop.f32.mrf.mxu0
  %v1638 = vadd.f32 %v1123, %v1637
  %v1639 = vpop.f32.mrf.mxu0
  %v1640 = vpop.f32.mrf.mxu0
  %v1641 = vadd.f32 %v1123, %v1640
  %v1642 = vpop.f32.mrf.mxu0
  %1643 = vmatprep.mubr.bf16.mxu0 %v1316
  %1644 = vmatmul.mubr.bf16.gmra.mxu0 %v1315
  %v1645 = vpop.f32.mrf.mxu0
  %v1646 = vadd.f32 %v1123, %v1645
  %v1647 = vpop.f32.mrf.mxu0
  %v1648 = vpop.f32.mrf.mxu0
  %v1649 = vadd.f32 %v1123, %v1648
  %v1650 = vpop.f32.mrf.mxu0
  %1651 = vmatprep.mubr.bf16.mxu0 %v1319
  %1652 = vmatmul.mubr.bf16.gmra.mxu0 %v1318
  %v1653 = vpop.f32.mrf.mxu0
  %v1654 = vadd.f32 %v1123, %v1653
  %v1655 = vpop.f32.mrf.mxu0
  %v1656 = vpop.f32.mrf.mxu0
  %v1657 = vadd.f32 %v1123, %v1656
  %v1658 = vpop.f32.mrf.mxu0
  %1659 = vmatprep.mubr.bf16.mxu0 %v1322
  %1660 = vmatmul.mubr.bf16.gmra.mxu0 %v1321
  %v1661 = vpop.f32.mrf.mxu0
  %v1662 = vadd.f32 %v1123, %v1661
  %v1663 = vpop.f32.mrf.mxu0
  %v1664 = vpop.f32.mrf.mxu0
  %v1665 = vadd.f32 %v1123, %v1664
  %v1666 = vpop.f32.mrf.mxu0
  %1667 = vmatprep.mubr.bf16.mxu0 %v1325
  %1668 = vmatmul.mubr.bf16.gmra.mxu0 %v1324
  %v1669 = vpop.f32.mrf.mxu0
  %v1670 = vadd.f32 %v1123, %v1669
  %v1671 = vpop.f32.mrf.mxu0
  %v1672 = vpop.f32.mrf.mxu0
  %v1673 = vadd.f32 %v1123, %v1672
  %v1674 = vpop.f32.mrf.mxu0
  %1675 = vmatprep.mubr.bf16.mxu0 %v1328
  %1676 = vmatmul.mubr.bf16.gmra.mxu0 %v1327
  %v1677 = vpop.f32.mrf.mxu0
  %v1678 = vadd.f32 %v1123, %v1677
  %v1679 = vpop.f32.mrf.mxu0
  %v1680 = vpop.f32.mrf.mxu0
  %v1681 = vadd.f32 %v1123, %v1680
  %v1682 = vpop.f32.mrf.mxu0
  %1683 = vmatprep.mubr.bf16.mxu0 %v1331
  %1684 = vmatmul.mubr.bf16.gmra.mxu0 %v1330
  %v1685 = vpop.f32.mrf.mxu0
  %v1686 = vadd.f32 %v1123, %v1685
  %v1687 = vpop.f32.mrf.mxu0
  %v1688 = vpop.f32.mrf.mxu0
  %v1689 = vadd.f32 %v1123, %v1688
  %v1690 = vpop.f32.mrf.mxu0
  %1691 = vdwg.mxu0
  %1692 = vmatprep.subr.bf16.mxu0 0
  %1693 = vmatpush1.bf16.msra.mxu0 0
  %1694 = vmatprep.subr.bf16.mxu0 0
  %1695 = vmatpush1.bf16.msra.mxu0 0
  %1696 = vmatprep.subr.bf16.mxu0 0
  %1697 = vmatpush1.bf16.msra.mxu0 0
  %1698 = vmatprep.subr.bf16.mxu0 0
  %1699 = vmatpush1.bf16.msra.mxu0 0
  %1700 = vmatprep.subr.bf16.mxu0 0
  %1701 = vmatpush1.bf16.msra.mxu0 0
  %1702 = vmatprep.subr.bf16.mxu0 0
  %1703 = vmatpush1.bf16.msra.mxu0 %v1529
  %1704 = vmatprep.subr.bf16.mxu0 0
  %1705 = vmatpush1.bf16.msra.mxu0 %v1458
  %1706 = vmatprep.subr.bf16.mxu0 0
  %1707 = vmatpush1.bf16.msra.mxu0 %v1457
  %1708 = vmatprep.subr.bf16.mxu0 0
  %1709 = vmatpush2.bf16.msra.mxu0 0
  %1710 = vmatprep.subr.bf16.mxu0 0
  %1711 = vmatpush2.bf16.msra.mxu0 0
  %1712 = vmatprep.subr.bf16.mxu0 0
  %1713 = vmatpush2.bf16.msra.mxu0 0
  %1714 = vmatprep.subr.bf16.mxu0 0
  %1715 = vmatpush2.bf16.msra.mxu0 0
  %1716 = vmatprep.subr.bf16.mxu0 0
  %1717 = vmatpush2.bf16.msra.mxu0 0
  %1718 = vmatprep.subr.bf16.mxu0 0
  %1719 = vmatpush2.bf16.msra.mxu0 0
  %1720 = vmatprep.subr.bf16.mxu0 0
  %1721 = vmatpush2.bf16.msra.mxu0 0
  %1722 = vmatprep.subr.bf16.mxu0 0
  %1723 = vmatpush2.bf16.msra.mxu0 0
  %1724 = vmatprep.mubr.bf16.mxu0 0
  %1725 = vmatmul.mubr.bf16.gmra.mxu0 %v1480
  %v1726 = vpop.f32.mrf.mxu0
  %v1727 = vadd.f32 %v1566, %v1726
  %v1728 = vpop.f32.mrf.mxu0
  %v1729 = vpop.f32.mrf.mxu0
  %v1730 = vadd.f32 %v1569, %v1729
  %v1731 = vpop.f32.mrf.mxu0
  %1732 = vmatprep.mubr.bf16.mxu0 0
  %1733 = vmatmul.mubr.bf16.gmra.mxu0 %v1483
  %v1734 = vpop.f32.mrf.mxu0
  %v1735 = vadd.f32 %v1574, %v1734
  %v1736 = vpop.f32.mrf.mxu0
  %v1737 = vpop.f32.mrf.mxu0
  %v1738 = vadd.f32 %v1577, %v1737
  %v1739 = vpop.f32.mrf.mxu0
  %1740 = vmatprep.mubr.bf16.mxu0 0
  %1741 = vmatmul.mubr.bf16.gmra.mxu0 %v1486
  %v1742 = vpop.f32.mrf.mxu0
  %v1743 = vadd.f32 %v1582, %v1742
  %v1744 = vpop.f32.mrf.mxu0
  %v1745 = vpop.f32.mrf.mxu0
  %v1746 = vadd.f32 %v1585, %v1745
  %v1747 = vpop.f32.mrf.mxu0
  %1748 = vmatprep.mubr.bf16.mxu0 0
  %1749 = vmatmul.mubr.bf16.gmra.mxu0 %v1489
  %v1750 = vpop.f32.mrf.mxu0
  %v1751 = vadd.f32 %v1590, %v1750
  %v1752 = vpop.f32.mrf.mxu0
  %v1753 = vpop.f32.mrf.mxu0
  %v1754 = vadd.f32 %v1593, %v1753
  %v1755 = vpop.f32.mrf.mxu0
  %1756 = vmatprep.mubr.bf16.mxu0 0
  %1757 = vmatmul.mubr.bf16.gmra.mxu0 %v1492
  %v1758 = vpop.f32.mrf.mxu0
  %v1759 = vadd.f32 %v1598, %v1758
  %v1760 = vpop.f32.mrf.mxu0
  %v1761 = vpop.f32.mrf.mxu0
  %v1762 = vadd.f32 %v1601, %v1761
  %v1763 = vpop.f32.mrf.mxu0
  %1764 = vmatprep.mubr.bf16.mxu0 0
  %1765 = vmatmul.mubr.bf16.gmra.mxu0 %v1495
  %v1766 = vpop.f32.mrf.mxu0
  %v1767 = vadd.f32 %v1606, %v1766
  %v1768 = vpop.f32.mrf.mxu0
  %v1769 = vpop.f32.mrf.mxu0
  %v1770 = vadd.f32 %v1609, %v1769
  %v1771 = vpop.f32.mrf.mxu0
  %1772 = vmatprep.mubr.bf16.mxu0 0
  %1773 = vmatmul.mubr.bf16.gmra.mxu0 %v1498
  %v1774 = vpop.f32.mrf.mxu0
  %v1775 = vadd.f32 %v1614, %v1774
  %v1776 = vpop.f32.mrf.mxu0
  %v1777 = vpop.f32.mrf.mxu0
  %v1778 = vadd.f32 %v1617, %v1777
  %v1779 = vpop.f32.mrf.mxu0
  %1780 = vmatprep.mubr.bf16.mxu0 0
  %1781 = vmatmul.mubr.bf16.gmra.mxu0 %v1501
  %v1782 = vpop.f32.mrf.mxu0
  %v1783 = vadd.f32 %v1622, %v1782
  %v1784 = vpop.f32.mrf.mxu0
  %v1785 = vpop.f32.mrf.mxu0
  %v1786 = vadd.f32 %v1625, %v1785
  %v1787 = vpop.f32.mrf.mxu0
  %1788 = vmatprep.mubr.bf16.mxu0 0
  %1789 = vmatmul.mubr.bf16.gmra.mxu0 %v1504
  %v1790 = vpop.f32.mrf.mxu0
  %v1791 = vadd.f32 %v1630, %v1790
  %v1792 = vpop.f32.mrf.mxu0
  %v1793 = vpop.f32.mrf.mxu0
  %v1794 = vadd.f32 %v1633, %v1793
  %v1795 = vpop.f32.mrf.mxu0
  %1796 = vmatprep.mubr.bf16.mxu0 0
  %1797 = vmatmul.mubr.bf16.gmra.mxu0 %v1507
  %v1798 = vpop.f32.mrf.mxu0
  %v1799 = vadd.f32 %v1638, %v1798
  %v1800 = vpop.f32.mrf.mxu0
  %v1801 = vpop.f32.mrf.mxu0
  %v1802 = vadd.f32 %v1641, %v1801
  %v1803 = vpop.f32.mrf.mxu0
  %1804 = vmatprep.mubr.bf16.mxu0 0
  %1805 = vmatmul.mubr.bf16.gmra.mxu0 %v1510
  %v1806 = vpop.f32.mrf.mxu0
  %v1807 = vadd.f32 %v1646, %v1806
  %v1808 = vpop.f32.mrf.mxu0
  %v1809 = vpop.f32.mrf.mxu0
  %v1810 = vadd.f32 %v1649, %v1809
  %v1811 = vpop.f32.mrf.mxu0
  %1812 = vmatprep.mubr.bf16.mxu0 0
  %1813 = vmatmul.mubr.bf16.gmra.mxu0 %v1513
  %v1814 = vpop.f32.mrf.mxu0
  %v1815 = vadd.f32 %v1654, %v1814
  %v1816 = vpop.f32.mrf.mxu0
  %v1817 = vpop.f32.mrf.mxu0
  %v1818 = vadd.f32 %v1657, %v1817
  %v1819 = vpop.f32.mrf.mxu0
  %1820 = vmatprep.mubr.bf16.mxu0 0
  %1821 = vmatmul.mubr.bf16.gmra.mxu0 %v1516
  %v1822 = vpop.f32.mrf.mxu0
  %v1823 = vadd.f32 %v1662, %v1822
  %v1824 = vpop.f32.mrf.mxu0
  %v1825 = vpop.f32.mrf.mxu0
  %v1826 = vadd.f32 %v1665, %v1825
  %v1827 = vpop.f32.mrf.mxu0
  %1828 = vmatprep.mubr.bf16.mxu0 0
  %1829 = vmatmul.mubr.bf16.gmra.mxu0 %v1519
  %v1830 = vpop.f32.mrf.mxu0
  %v1831 = vadd.f32 %v1670, %v1830
  %v1832 = vpop.f32.mrf.mxu0
  %v1833 = vpop.f32.mrf.mxu0
  %v1834 = vadd.f32 %v1673, %v1833
  %v1835 = vpop.f32.mrf.mxu0
  %1836 = vmatprep.mubr.bf16.mxu0 0
  %1837 = vmatmul.mubr.bf16.gmra.mxu0 %v1522
  %v1838 = vpop.f32.mrf.mxu0
  %v1839 = vadd.f32 %v1678, %v1838
  %v1840 = vpop.f32.mrf.mxu0
  %v1841 = vpop.f32.mrf.mxu0
  %v1842 = vadd.f32 %v1681, %v1841
  %v1843 = vpop.f32.mrf.mxu0
  %1844 = vmatprep.mubr.bf16.mxu0 0
  %1845 = vmatmul.mubr.bf16.gmra.mxu0 %v1525
  %v1846 = vpop.f32.mrf.mxu0
  %v1847 = vadd.f32 %v1686, %v1846
  %v1848 = vpop.f32.mrf.mxu0
  %v1849 = vpop.f32.mrf.mxu0
  %v1850 = vadd.f32 %v1689, %v1849
  %v1851 = vpop.f32.mrf.mxu0
  %1852 = vdwg.mxu0
  %v1853 = vmax.f32 %v1727, 0.0
  %v1854 = vmax.f32 %v1730, 0.0
  %v1855 = vmax.f32 %v1735, 0.0
  %v1856 = vmax.f32 %v1738, 0.0
  %v1857 = vmax.f32 %v1743, 0.0
  %v1858 = vmax.f32 %v1746, 0.0
  %v1859 = vmax.f32 %v1751, 0.0
  %v1860 = vmax.f32 %v1754, 0.0
  %v1861 = vmax.f32 %v1759, 0.0
  %v1862 = vmax.f32 %v1762, 0.0
  %v1863 = vmax.f32 %v1767, 0.0
  %v1864 = vmax.f32 %v1770, 0.0
  %v1865 = vmax.f32 %v1775, 0.0
  %v1866 = vmax.f32 %v1778, 0.0
  %v1867 = vmax.f32 %v1783, 0.0
  %v1868 = vmax.f32 %v1786, 0.0
  %v1869 = vmax.f32 %v1791, 0.0
  %v1870 = vmax.f32 %v1794, 0.0
  %v1871 = vmax.f32 %v1799, 0.0
  %v1872 = vmax.f32 %v1802, 0.0
  %v1873 = vmax.f32 %v1807, 0.0
  %v1874 = vmax.f32 %v1810, 0.0
  %v1875 = vmax.f32 %v1815, 0.0
  %v1876 = vmax.f32 %v1818, 0.0
  %v1877 = vmax.f32 %v1823, 0.0
  %v1878 = vmax.f32 %v1826, 0.0
  %v1879 = vmax.f32 %v1831, 0.0
  %v1880 = vmax.f32 %v1834, 0.0
  %v1881 = vmax.f32 %v1839, 0.0
  %v1882 = vmax.f32 %v1842, 0.0
  %v1883 = vmax.f32 %v1847, 0.0
  %v1884 = vmax.f32 %v1850, 0.0
  %1901 = vrot.lane.b32.xlu0 %v1853, 80
  %v1902 = vpop.permute.xlu0 %1901
  %1903 = vrot.lane.b32.xlu0 %v1854, 80
  %v1904 = vpop.permute.xlu0 %1903
  %1905 = vrot.lane.b32.xlu0 %v1855, 80
  %v1906 = vpop.permute.xlu0 %1905
  %1907 = vrot.lane.b32.xlu0 %v1856, 80
  %v1908 = vpop.permute.xlu0 %1907
  %1909 = vrot.lane.b32.xlu0 %v1857, 80
  %v1910 = vpop.permute.xlu0 %1909
  %1911 = vrot.lane.b32.xlu0 %v1858, 80
  %v1912 = vpop.permute.xlu0 %1911
  %1913 = vrot.lane.b32.xlu0 %v1859, 80
  %v1914 = vpop.permute.xlu0 %1913
  %1915 = vrot.lane.b32.xlu0 %v1860, 80
  %v1916 = vpop.permute.xlu0 %1915
  %1917 = vrot.lane.b32.xlu0 %v1861, 80
  %v1918 = vpop.permute.xlu0 %1917
  %1919 = vrot.lane.b32.xlu0 %v1862, 80
  %v1920 = vpop.permute.xlu0 %1919
  %1921 = vrot.lane.b32.xlu0 %v1863, 80
  %v1922 = vpop.permute.xlu0 %1921
  %1923 = vrot.lane.b32.xlu0 %v1864, 80
  %v1924 = vpop.permute.xlu0 %1923
  %1925 = vrot.lane.b32.xlu0 %v1865, 80
  %v1926 = vpop.permute.xlu0 %1925
  %1927 = vrot.lane.b32.xlu0 %v1866, 80
  %v1928 = vpop.permute.xlu0 %1927
  %1929 = vrot.lane.b32.xlu0 %v1867, 80
  %v1930 = vpop.permute.xlu0 %1929
  %1931 = vrot.lane.b32.xlu0 %v1868, 80
  %v1932 = vpop.permute.xlu0 %1931
  %v1949 = vmax.f32 %v1853, %v1902
  %v1950 = vmax.f32 %v1854, %v1904
  %v1951 = vmax.f32 %v1855, %v1906
  %v1952 = vmax.f32 %v1856, %v1908
  %v1953 = vmax.f32 %v1857, %v1910
  %v1954 = vmax.f32 %v1858, %v1912
  %v1955 = vmax.f32 %v1859, %v1914
  %v1956 = vmax.f32 %v1860, %v1916
  %v1957 = vmax.f32 %v1861, %v1918
  %v1958 = vmax.f32 %v1862, %v1920
  %v1959 = vmax.f32 %v1863, %v1922
  %v1960 = vmax.f32 %v1864, %v1924
  %v1961 = vmax.f32 %v1865, %v1926
  %v1962 = vmax.f32 %v1866, %v1928
  %v1963 = vmax.f32 %v1867, %v1930
  %v1964 = vmax.f32 %v1868, %v1932
  %1981 = vrot.lane.b32.xlu0 %v1869, 80
  %v1982 = vpop.permute.xlu0 %1981
  %1983 = vrot.lane.b32.xlu0 %v1870, 80
  %v1984 = vpop.permute.xlu0 %1983
  %1985 = vrot.lane.b32.xlu0 %v1871, 80
  %v1986 = vpop.permute.xlu0 %1985
  %1987 = vrot.lane.b32.xlu0 %v1872, 80
  %v1988 = vpop.permute.xlu0 %1987
  %1989 = vrot.lane.b32.xlu0 %v1873, 80
  %v1990 = vpop.permute.xlu0 %1989
  %1991 = vrot.lane.b32.xlu0 %v1874, 80
  %v1992 = vpop.permute.xlu0 %1991
  %1993 = vrot.lane.b32.xlu0 %v1875, 80
  %v1994 = vpop.permute.xlu0 %1993
  %1995 = vrot.lane.b32.xlu0 %v1876, 80
  %v1996 = vpop.permute.xlu0 %1995
  %1997 = vrot.lane.b32.xlu0 %v1877, 80
  %v1998 = vpop.permute.xlu0 %1997
  %1999 = vrot.lane.b32.xlu0 %v1878, 80
  %v2000 = vpop.permute.xlu0 %1999
  %2001 = vrot.lane.b32.xlu0 %v1879, 80
  %v2002 = vpop.permute.xlu0 %2001
  %2003 = vrot.lane.b32.xlu0 %v1880, 80
  %v2004 = vpop.permute.xlu0 %2003
  %2005 = vrot.lane.b32.xlu0 %v1881, 80
  %v2006 = vpop.permute.xlu0 %2005
  %2007 = vrot.lane.b32.xlu0 %v1882, 80
  %v2008 = vpop.permute.xlu0 %2007
  %2009 = vrot.lane.b32.xlu0 %v1883, 80
  %v2010 = vpop.permute.xlu0 %2009
  %2011 = vrot.lane.b32.xlu0 %v1884, 80
  %v2012 = vpop.permute.xlu0 %2011
  %v2029 = vmax.f32 %v1869, %v1982
  %v2030 = vmax.f32 %v1870, %v1984
  %v2031 = vmax.f32 %v1871, %v1986
  %v2032 = vmax.f32 %v1872, %v1988
  %v2033 = vmax.f32 %v1873, %v1990
  %v2034 = vmax.f32 %v1874, %v1992
  %v2035 = vmax.f32 %v1875, %v1994
  %v2036 = vmax.f32 %v1876, %v1996
  %v2037 = vmax.f32 %v1877, %v1998
  %v2038 = vmax.f32 %v1878, %v2000
  %v2039 = vmax.f32 %v1879, %v2002
  %v2040 = vmax.f32 %v1880, %v2004
  %v2041 = vmax.f32 %v1881, %v2006
  %v2042 = vmax.f32 %v1882, %v2008
  %v2043 = vmax.f32 %v1883, %v2010
  %v2044 = vmax.f32 %v1884, %v2012
  %v2045 = vmax.f32 %v1949, %v2029
  %v2046 = vmax.f32 %v1950, %v2030
  %v2047 = vmax.f32 %v1951, %v2031
  %v2048 = vmax.f32 %v1952, %v2032
  %v2049 = vmax.f32 %v1953, %v2033
  %v2050 = vmax.f32 %v1954, %v2034
  %v2051 = vmax.f32 %v1955, %v2035
  %v2052 = vmax.f32 %v1956, %v2036
  %v2053 = vmax.f32 %v1957, %v2037
  %v2054 = vmax.f32 %v1958, %v2038
  %v2055 = vmax.f32 %v1959, %v2039
  %v2056 = vmax.f32 %v1960, %v2040
  %v2057 = vmax.f32 %v1961, %v2041
  %v2058 = vmax.f32 %v1962, %v2042
  %v2059 = vmax.f32 %v1963, %v2043
  %v2060 = vmax.f32 %v1964, %v2044
  %v2061 = vpack.c.bf16 %v2046, %v2045
  %v2062 = vpack.c.bf16 %v2048, %v2047
  %v2063 = vpack.c.bf16 %v2050, %v2049
  %v2064 = vpack.c.bf16 %v2052, %v2051
  %v2065 = vpack.c.bf16 %v2054, %v2053
  %v2066 = vpack.c.bf16 %v2056, %v2055
  %v2067 = vpack.c.bf16 %v2058, %v2057
  %v2068 = vpack.c.bf16 %v2060, %v2059
  %vm2069 = vcmask 388096
  %2070 = vst.msk [vmem:[#allocation3] sm:$0xf] %vm2069, 0
  %2071 = vst.msk [vmem:[#allocation3 + $0x8] sm:$0xf] %vm2069, 0
  %s2072 = scalar_lea.vmem [#allocation3], 112
  %vm2073 = vcmask 1044224
  %vm2074 = vcmask 130052
  %vm2075 = vmor %vm2074, %vm2073
  %2076 = vst.msk [vmem:[%s2072] sm:$0xff] %vm2075, 0
  %2077 = vst.msk [vmem:[%s2072 + $0x8] sm:$0xff] %vm2075, 0
  %v2079 = vunpack.c.l.b16 %v2061
  %v2080 = vunpack.c.h.b16 %v2061
  %v2081 = vpack.c.b16 %v2079, %v2079
  %v2082 = vpack.c.b16 %v2080, %v2080
  %2083 = vrot.lane.b32.xlu0 %v2081, 48
  %v2084 = vpop.permute.xlu0 %2083
  %2085 = vrot.lane.b32.xlu0 %v2082, 48
  %v2086 = vpop.permute.xlu0 %2085
  %vm2089 = vcmask 781696
  %2090 = vst.msk [vmem:[#allocation3] sm:$0xf] %vm2089, %v2084
  %2091 = vst.msk [vmem:[#allocation3 + $0x8] sm:$0xf] %vm2089, %v2086
  %v2093 = vunpack.c.l.b16 %v2062
  %v2094 = vunpack.c.h.b16 %v2062
  %v2095 = vpack.c.b16 %v2093, %v2093
  %v2096 = vpack.c.b16 %v2094, %v2094
  %2097 = vrot.lane.b32.xlu0 %v2095, 96
  %v2098 = vpop.permute.xlu0 %2097
  %2099 = vrot.lane.b32.xlu0 %v2096, 96
  %v2100 = vpop.permute.xlu0 %2099
  %v2101 = vrot.slane %v2098, 4
  %v2102 = vrot.slane %v2100, 4
  %vm2103 = vcmask 785408
  %v2104 = vsel %vm2103, %v2101, %v2098
  %v2105 = vsel %vm2103, %v2102, %v2100
  %2108 = vst.msk [vmem:[#allocation3] sm:$0xff] %vm2075, %v2104
  %2109 = vst.msk [vmem:[#allocation3 + $0x8] sm:$0xff] %vm2075, %v2105
  %s2112 = scalar_lea.vmem [#allocation3], 16
  %2113 = vst.msk [vmem:[%s2112] sm:$0xf] %vm2069, %v2095
  %2114 = vst.msk [vmem:[%s2112 + $0x8] sm:$0xf] %vm2069, %v2096
  %v2116 = vunpack.c.l.b16 %v2063
  %v2117 = vunpack.c.h.b16 %v2063
  %v2118 = vpack.c.b16 %v2116, %v2116
  %v2119 = vpack.c.b16 %v2117, %v2117
  %2120 = vrot.lane.b32.xlu0 %v2118, 48
  %v2121 = vpop.permute.xlu0 %2120
  %2122 = vrot.lane.b32.xlu0 %v2119, 48
  %v2123 = vpop.permute.xlu0 %2122
  %2126 = vst.msk [vmem:[%s2112] sm:$0xf] %vm2089, %v2121
  %2127 = vst.msk [vmem:[%s2112 + $0x8] sm:$0xf] %vm2089, %v2123
  %v2129 = vunpack.c.l.b16 %v2064
  %v2130 = vunpack.c.h.b16 %v2064
  %v2131 = vpack.c.b16 %v2129, %v2129
  %v2132 = vpack.c.b16 %v2130, %v2130
  %2133 = vrot.lane.b32.xlu0 %v2131, 96
  %v2134 = vpop.permute.xlu0 %2133
  %2135 = vrot.lane.b32.xlu0 %v2132, 96
  %v2136 = vpop.permute.xlu0 %2135
  %v2137 = vrot.slane %v2134, 4
  %v2138 = vrot.slane %v2136, 4
  %v2139 = vsel %vm2103, %v2137, %v2134
  %v2140 = vsel %vm2103, %v2138, %v2136
  %2143 = vst.msk [vmem:[%s2112] sm:$0xff] %vm2075, %v2139
  %2144 = vst.msk [vmem:[%s2112 + $0x8] sm:$0xff] %vm2075, %v2140
  %s2147 = scalar_lea.vmem [#allocation3], 32
  %2148 = vst.msk [vmem:[%s2147] sm:$0xf] %vm2069, %v2131
  %2149 = vst.msk [vmem:[%s2147 + $0x8] sm:$0xf] %vm2069, %v2132
  %v2151 = vunpack.c.l.b16 %v2065
  %v2152 = vunpack.c.h.b16 %v2065
  %v2153 = vpack.c.b16 %v2151, %v2151
  %v2154 = vpack.c.b16 %v2152, %v2152
  %2155 = vrot.lane.b32.xlu0 %v2153, 48
  %v2156 = vpop.permute.xlu0 %2155
  %2157 = vrot.lane.b32.xlu0 %v2154, 48
  %v2158 = vpop.permute.xlu0 %2157
  %2161 = vst.msk [vmem:[%s2147] sm:$0xf] %vm2089, %v2156
  %2162 = vst.msk [vmem:[%s2147 + $0x8] sm:$0xf] %vm2089, %v2158
  %v2164 = vunpack.c.l.b16 %v2066
  %v2165 = vunpack.c.h.b16 %v2066
  %v2166 = vpack.c.b16 %v2164, %v2164
  %v2167 = vpack.c.b16 %v2165, %v2165
  %2168 = vrot.lane.b32.xlu0 %v2166, 96
  %v2169 = vpop.permute.xlu0 %2168
  %2170 = vrot.lane.b32.xlu0 %v2167, 96
  %v2171 = vpop.permute.xlu0 %2170
  %v2172 = vrot.slane %v2169, 4
  %v2173 = vrot.slane %v2171, 4
  %v2174 = vsel %vm2103, %v2172, %v2169
  %v2175 = vsel %vm2103, %v2173, %v2171
  %2178 = vst.msk [vmem:[%s2147] sm:$0xff] %vm2075, %v2174
  %2179 = vst.msk [vmem:[%s2147 + $0x8] sm:$0xff] %vm2075, %v2175
  %s2182 = scalar_lea.vmem [#allocation3], 48
  %2183 = vst.msk [vmem:[%s2182] sm:$0xf] %vm2069, %v2166
  %2184 = vst.msk [vmem:[%s2182 + $0x8] sm:$0xf] %vm2069, %v2167
  %v2186 = vunpack.c.l.b16 %v2067
  %v2187 = vunpack.c.h.b16 %v2067
  %v2188 = vpack.c.b16 %v2186, %v2186
  %v2189 = vpack.c.b16 %v2187, %v2187
  %2190 = vrot.lane.b32.xlu0 %v2188, 48
  %v2191 = vpop.permute.xlu0 %2190
  %2192 = vrot.lane.b32.xlu0 %v2189, 48
  %v2193 = vpop.permute.xlu0 %2192
  %2196 = vst.msk [vmem:[%s2182] sm:$0xf] %vm2089, %v2191
  %2197 = vst.msk [vmem:[%s2182 + $0x8] sm:$0xf] %vm2089, %v2193
  %v2199 = vunpack.c.l.b16 %v2068
  %v2200 = vunpack.c.h.b16 %v2068
  %v2201 = vpack.c.b16 %v2199, %v2199
  %v2202 = vpack.c.b16 %v2200, %v2200
  %2203 = vrot.lane.b32.xlu0 %v2201, 96
  %v2204 = vpop.permute.xlu0 %2203
  %2205 = vrot.lane.b32.xlu0 %v2202, 96
  %v2206 = vpop.permute.xlu0 %2205
  %v2207 = vrot.slane %v2204, 4
  %v2208 = vrot.slane %v2206, 4
  %v2209 = vsel %vm2103, %v2207, %v2204
  %v2210 = vsel %vm2103, %v2208, %v2206
  %2213 = vst.msk [vmem:[%s2182] sm:$0xff] %vm2075, %v2209
  %2214 = vst.msk [vmem:[%s2182 + $0x8] sm:$0xff] %vm2075, %v2210
  %s2217 = scalar_lea.vmem [#allocation3], 64
  %2218 = vst.msk [vmem:[%s2217] sm:$0xf] %vm2069, %v2081
  %2219 = vst.msk [vmem:[%s2217 + $0x8] sm:$0xf] %vm2069, %v2082
  %2220 = vrot.lane.b32.xlu0 %v2095, 48
  %v2221 = vpop.permute.xlu0 %2220
  %2222 = vrot.lane.b32.xlu0 %v2096, 48
  %v2223 = vpop.permute.xlu0 %2222
  %2226 = vst.msk [vmem:[%s2217] sm:$0xf] %vm2089, %v2221
  %2227 = vst.msk [vmem:[%s2217 + $0x8] sm:$0xf] %vm2089, %v2223
  %2228 = vrot.lane.b32.xlu0 %v2118, 96
  %v2229 = vpop.permute.xlu0 %2228
  %2230 = vrot.lane.b32.xlu0 %v2119, 96
  %v2231 = vpop.permute.xlu0 %2230
  %v2232 = vrot.slane %v2229, 4
  %v2233 = vrot.slane %v2231, 4
  %v2234 = vsel %vm2103, %v2232, %v2229
  %v2235 = vsel %vm2103, %v2233, %v2231
  %2238 = vst.msk [vmem:[%s2217] sm:$0xff] %vm2075, %v2234
  %2239 = vst.msk [vmem:[%s2217 + $0x8] sm:$0xff] %vm2075, %v2235
  %s2242 = scalar_lea.vmem [#allocation3], 80
  %2243 = vst.msk [vmem:[%s2242] sm:$0xf] %vm2069, %v2118
  %2244 = vst.msk [vmem:[%s2242 + $0x8] sm:$0xf] %vm2069, %v2119
  %2245 = vrot.lane.b32.xlu0 %v2131, 48
  %v2246 = vpop.permute.xlu0 %2245
  %2247 = vrot.lane.b32.xlu0 %v2132, 48
  %v2248 = vpop.permute.xlu0 %2247
  %2251 = vst.msk [vmem:[%s2242] sm:$0xf] %vm2089, %v2246
  %2252 = vst.msk [vmem:[%s2242 + $0x8] sm:$0xf] %vm2089, %v2248
  %2253 = vrot.lane.b32.xlu0 %v2153, 96
  %v2254 = vpop.permute.xlu0 %2253
  %2255 = vrot.lane.b32.xlu0 %v2154, 96
  %v2256 = vpop.permute.xlu0 %2255
  %v2257 = vrot.slane %v2254, 4
  %v2258 = vrot.slane %v2256, 4
  %v2259 = vsel %vm2103, %v2257, %v2254
  %v2260 = vsel %vm2103, %v2258, %v2256
  %2263 = vst.msk [vmem:[%s2242] sm:$0xff] %vm2075, %v2259
  %2264 = vst.msk [vmem:[%s2242 + $0x8] sm:$0xff] %vm2075, %v2260
  %s2267 = scalar_lea.vmem [#allocation3], 96
  %2268 = vst.msk [vmem:[%s2267] sm:$0xf] %vm2069, %v2153
  %2269 = vst.msk [vmem:[%s2267 + $0x8] sm:$0xf] %vm2069, %v2154
  %2270 = vrot.lane.b32.xlu0 %v2166, 48
  %v2271 = vpop.permute.xlu0 %2270
  %2272 = vrot.lane.b32.xlu0 %v2167, 48
  %v2273 = vpop.permute.xlu0 %2272
  %2276 = vst.msk [vmem:[%s2267] sm:$0xf] %vm2089, %v2271
  %2277 = vst.msk [vmem:[%s2267 + $0x8] sm:$0xf] %vm2089, %v2273
  %2278 = vrot.lane.b32.xlu0 %v2188, 96
  %v2279 = vpop.permute.xlu0 %2278
  %2280 = vrot.lane.b32.xlu0 %v2189, 96
  %v2281 = vpop.permute.xlu0 %2280
  %v2282 = vrot.slane %v2279, 4
  %v2283 = vrot.slane %v2281, 4
  %v2284 = vsel %vm2103, %v2282, %v2279
  %v2285 = vsel %vm2103, %v2283, %v2281
  %2288 = vst.msk [vmem:[%s2267] sm:$0xff] %vm2075, %v2284
  %2289 = vst.msk [vmem:[%s2267 + $0x8] sm:$0xff] %vm2075, %v2285
  %2292 = vst.msk [vmem:[%s2072] sm:$0xf] %vm2069, %v2188
  %2293 = vst.msk [vmem:[%s2072 + $0x8] sm:$0xf] %vm2069, %v2189
  %2294 = vrot.lane.b32.xlu0 %v2201, 48
  %v2295 = vpop.permute.xlu0 %2294
  %2296 = vrot.lane.b32.xlu0 %v2202, 48
  %v2297 = vpop.permute.xlu0 %2296
  %2300 = vst.msk [vmem:[%s2072] sm:$0xf] %vm2089, %v2295
  %2301 = vst.msk [vmem:[%s2072 + $0x8] sm:$0xf] %vm2089, %v2297
  %v2302 = vld [vmem:[#allocation3] sm:$0xff]
  %v2303 = vld [vmem:[#allocation3 + $0x8] sm:$0xff]
  %v2304 = vld [vmem:[#allocation3 + $0x10] sm:$0xff]
  %v2305 = vld [vmem:[#allocation3 + $0x18] sm:$0xff]
  %v2306 = vld [vmem:[#allocation3 + $0x20] sm:$0xff]
  %v2307 = vld [vmem:[#allocation3 + $0x28] sm:$0xff]
  %v2308 = vld [vmem:[#allocation3 + $0x30] sm:$0xff]
  %v2309 = vld [vmem:[#allocation3 + $0x38] sm:$0xff]
  %v2310 = vld [vmem:[#allocation3 + $0x40] sm:$0xff]
  %v2311 = vld [vmem:[#allocation3 + $0x48] sm:$0xff]
  %v2312 = vld [vmem:[#allocation3 + $0x50] sm:$0xff]
  %v2313 = vld [vmem:[#allocation3 + $0x58] sm:$0xff]
  %v2314 = vld [vmem:[#allocation3 + $0x60] sm:$0xff]
  %v2315 = vld [vmem:[#allocation3 + $0x68] sm:$0xff]
  %v2316 = vld [vmem:[#allocation3 + $0x70] sm:$0xff]
  %v2317 = vld [vmem:[#allocation3 + $0x78] sm:$0xff]
  %v2318 = vld [vmem:[%s3] sm:$0xf]
  %v2319 = vld [vmem:[%s3 + $0x4] sm:$0xf]
  %v2320 = vld [vmem:[%s3 + $0x8] sm:$0xf]
  %v2321 = vld [vmem:[%s3 + $0xc] sm:$0xf]
  %v2322 = vld [vmem:[%s3 + $0x10] sm:$0xf]
  %v2323 = vld [vmem:[%s3 + $0x14] sm:$0xf]
  %v2324 = vld [vmem:[%s3 + $0x18] sm:$0xf]
  %v2325 = vld [vmem:[%s3 + $0x1c] sm:$0xf]
  %v2326 = vld [vmem:[%s3 + $0x20] sm:$0xf]
  %v2327 = vld [vmem:[%s3 + $0x24] sm:$0xf]
  %v2328 = vld [vmem:[%s3 + $0x28] sm:$0xf]
  %v2329 = vld [vmem:[%s3 + $0x2c] sm:$0xf]
  %v2330 = vld [vmem:[%s3 + $0x30] sm:$0xf]
  %v2331 = vld [vmem:[%s3 + $0x34] sm:$0xf]
  %v2332 = vld [vmem:[%s3 + $0x38] sm:$0xf]
  %v2333 = vld [vmem:[%s3 + $0x3c] sm:$0xf]
  %v2334 = vld [vmem:[%s3 + $0x40] sm:$0xf]
  %v2335 = vld [vmem:[%s3 + $0x44] sm:$0xf]
  %v2336 = vld [vmem:[%s4] sm:$0x1]
  %v2338 = vlaneseq
  %v2339 = vshrl.u32 %v2338, 7
  %v2340 = vsub.s32 0, %v2339
  %v2341 = vrot.slane %v2336, %v2340
  %v2359 = vunpack.c.l.b16 %v2302
  %v2360 = vunpack.c.h.b16 %v2302
  %v2361 = vunpack.c.l.b16 %v2303
  %v2362 = vunpack.c.h.b16 %v2303
  %v2363 = vunpack.c.l.b16 %v2304
  %v2364 = vunpack.c.h.b16 %v2304
  %v2365 = vunpack.c.l.b16 %v2305
  %v2366 = vunpack.c.h.b16 %v2305
  %v2367 = vunpack.c.l.b16 %v2306
  %v2368 = vunpack.c.h.b16 %v2306
  %v2369 = vunpack.c.l.b16 %v2307
  %v2370 = vunpack.c.h.b16 %v2307
  %v2371 = vunpack.c.l.b16 %v2308
  %v2372 = vunpack.c.h.b16 %v2308
  %v2373 = vunpack.c.l.b16 %v2309
  %v2374 = vunpack.c.h.b16 %v2309
  %v2375 = vunpack.c.l.b16 %v2310
  %v2376 = vunpack.c.h.b16 %v2310
  %v2377 = vunpack.c.l.b16 %v2311
  %v2378 = vunpack.c.h.b16 %v2311
  %v2379 = vunpack.c.l.b16 %v2312
  %v2380 = vunpack.c.h.b16 %v2312
  %v2381 = vunpack.c.l.b16 %v2313
  %v2382 = vunpack.c.h.b16 %v2313
  %v2383 = vunpack.c.l.b16 %v2314
  %v2384 = vunpack.c.h.b16 %v2314
  %v2385 = vunpack.c.l.b16 %v2315
  %v2386 = vunpack.c.h.b16 %v2315
  %v2387 = vunpack.c.l.b16 %v2316
  %v2388 = vunpack.c.h.b16 %v2316
  %v2389 = vunpack.c.l.b16 %v2317
  %v2390 = vunpack.c.h.b16 %v2317
  %v2391 = vpack.c.b16 %v2361, %v2359
  %v2392 = vpack.c.b16 %v2362, %v2360
  %v2393 = vpack.c.b16 %v2365, %v2363
  %v2394 = vpack.c.b16 %v2366, %v2364
  %v2395 = vpack.c.b16 %v2369, %v2367
  %v2396 = vpack.c.b16 %v2370, %v2368
  %v2397 = vpack.c.b16 %v2373, %v2371
  %v2398 = vpack.c.b16 %v2374, %v2372
  %v2399 = vpack.c.b16 %v2377, %v2375
  %v2400 = vpack.c.b16 %v2378, %v2376
  %v2401 = vpack.c.b16 %v2381, %v2379
  %v2402 = vpack.c.b16 %v2382, %v2380
  %v2403 = vpack.c.b16 %v2385, %v2383
  %v2404 = vpack.c.b16 %v2386, %v2384
  %v2405 = vpack.c.b16 %v2389, %v2387
  %v2406 = vpack.c.b16 %v2390, %v2388
  %v2433 = vunpack.c.l.b16 %v2318
  %v2434 = vunpack.c.l.b16 %v2319
  %v2435 = vunpack.c.l.b16 %v2320
  %v2436 = vunpack.c.l.b16 %v2321
  %v2437 = vunpack.c.l.b16 %v2322
  %v2438 = vunpack.c.l.b16 %v2323
  %v2439 = vunpack.c.l.b16 %v2324
  %v2440 = vunpack.c.l.b16 %v2325
  %v2441 = vunpack.c.l.b16 %v2326
  %v2442 = vunpack.c.l.b16 %v2327
  %v2443 = vunpack.c.l.b16 %v2328
  %v2444 = vunpack.c.l.b16 %v2329
  %v2445 = vunpack.c.l.b16 %v2330
  %v2446 = vunpack.c.l.b16 %v2331
  %v2447 = vunpack.c.l.b16 %v2332
  %v2448 = vunpack.c.l.b16 %v2333
  %v2449 = vunpack.c.l.b16 %v2334
  %v2450 = vunpack.c.l.b16 %v2335
  %v2451 = vpack.c.b16 %v2434, %v2433
  %v2452 = vpack.c.b16 %v2436, %v2435
  %v2453 = vpack.c.b16 %v2438, %v2437
  %v2454 = vpack.c.b16 %v2440, %v2439
  %v2455 = vpack.c.b16 %v2442, %v2441
  %v2456 = vpack.c.b16 %v2444, %v2443
  %v2457 = vpack.c.b16 %v2446, %v2445
  %v2458 = vpack.c.b16 %v2448, %v2447
  %v2459 = vpack.c.b16 %v2450, %v2449
  %vm2469 = vcmask 130048
  %v2471 = vsel %vm2469, %v2392, 0
  %v2474 = vsel %vm2469, %v2394, 0
  %v2477 = vsel %vm2469, %v2396, 0
  %v2480 = vsel %vm2469, %v2398, 0
  %v2483 = vsel %vm2469, %v2400, 0
  %v2486 = vsel %vm2469, %v2402, 0
  %v2489 = vsel %vm2469, %v2404, 0
  %v2492 = vsel %vm2469, %v2406, 0
  %2494 = vmatprep.subr.bf16.mxu0 0
  %2495 = vmatpush1.bf16.msra.mxu0 %v2458
  %2496 = vmatprep.subr.bf16.mxu0 0
  %2497 = vmatpush1.bf16.msra.mxu0 %v2457
  %2498 = vmatprep.subr.bf16.mxu0 0
  %2499 = vmatpush1.bf16.msra.mxu0 %v2456
  %2500 = vmatprep.subr.bf16.mxu0 0
  %2501 = vmatpush1.bf16.msra.mxu0 %v2455
  %2502 = vmatprep.subr.bf16.mxu0 0
  %2503 = vmatpush1.bf16.msra.mxu0 %v2454
  %2504 = vmatprep.subr.bf16.mxu0 0
  %2505 = vmatpush1.bf16.msra.mxu0 %v2453
  %2506 = vmatprep.subr.bf16.mxu0 0
  %2507 = vmatpush1.bf16.msra.mxu0 %v2452
  %2508 = vmatprep.subr.bf16.mxu0 0
  %2509 = vmatpush1.bf16.msra.mxu0 %v2451
  %2510 = vmatprep.subr.bf16.mxu0 0
  %2511 = vmatpush2.bf16.msra.mxu0 0
  %2512 = vmatprep.subr.bf16.mxu0 0
  %2513 = vmatpush2.bf16.msra.mxu0 0
  %2514 = vmatprep.subr.bf16.mxu0 0
  %2515 = vmatpush2.bf16.msra.mxu0 0
  %2516 = vmatprep.subr.bf16.mxu0 0
  %2517 = vmatpush2.bf16.msra.mxu0 0
  %2518 = vmatprep.subr.bf16.mxu0 0
  %2519 = vmatpush2.bf16.msra.mxu0 0
  %2520 = vmatprep.subr.bf16.mxu0 0
  %2521 = vmatpush2.bf16.msra.mxu0 0
  %2522 = vmatprep.subr.bf16.mxu0 0
  %2523 = vmatpush2.bf16.msra.mxu0 0
  %2524 = vmatprep.subr.bf16.mxu0 0
  %2525 = vmatpush2.bf16.msra.mxu0 %v2459
  %2526 = vmatprep.mubr.bf16.mxu0 %v2471
  %2527 = vmatmul.mubr.bf16.gmra.mxu0 %v2391
  %v2528 = vpop.f32.mrf.mxu0
  %v2529 = vadd.f32 %v2341, %v2528
  %v2530 = vpop.f32.mrf.mxu0
  %v2531 = vpop.f32.mrf.mxu0
  %v2532 = vadd.f32 %v2341, %v2531
  %v2533 = vpop.f32.mrf.mxu0
  %2534 = vmatprep.mubr.bf16.mxu0 %v2474
  %2535 = vmatmul.mubr.bf16.gmra.mxu0 %v2393
  %v2536 = vpop.f32.mrf.mxu0
  %v2537 = vadd.f32 %v2341, %v2536
  %v2538 = vpop.f32.mrf.mxu0
  %v2539 = vpop.f32.mrf.mxu0
  %v2540 = vadd.f32 %v2341, %v2539
  %v2541 = vpop.f32.mrf.mxu0
  %2542 = vmatprep.mubr.bf16.mxu0 %v2477
  %2543 = vmatmul.mubr.bf16.gmra.mxu0 %v2395
  %v2544 = vpop.f32.mrf.mxu0
  %v2545 = vadd.f32 %v2341, %v2544
  %v2546 = vpop.f32.mrf.mxu0
  %v2547 = vpop.f32.mrf.mxu0
  %v2548 = vadd.f32 %v2341, %v2547
  %v2549 = vpop.f32.mrf.mxu0
  %2550 = vmatprep.mubr.bf16.mxu0 %v2480
  %2551 = vmatmul.mubr.bf16.gmra.mxu0 %v2397
  %v2552 = vpop.f32.mrf.mxu0
  %v2553 = vadd.f32 %v2341, %v2552
  %v2554 = vpop.f32.mrf.mxu0
  %v2555 = vpop.f32.mrf.mxu0
  %v2556 = vadd.f32 %v2341, %v2555
  %v2557 = vpop.f32.mrf.mxu0
  %2558 = vmatprep.mubr.bf16.mxu0 %v2483
  %2559 = vmatmul.mubr.bf16.gmra.mxu0 %v2399
  %v2560 = vpop.f32.mrf.mxu0
  %v2561 = vadd.f32 %v2341, %v2560
  %v2562 = vpop.f32.mrf.mxu0
  %v2563 = vpop.f32.mrf.mxu0
  %v2564 = vadd.f32 %v2341, %v2563
  %v2565 = vpop.f32.mrf.mxu0
  %2566 = vmatprep.mubr.bf16.mxu0 %v2486
  %2567 = vmatmul.mubr.bf16.gmra.mxu0 %v2401
  %v2568 = vpop.f32.mrf.mxu0
  %v2569 = vadd.f32 %v2341, %v2568
  %v2570 = vpop.f32.mrf.mxu0
  %v2571 = vpop.f32.mrf.mxu0
  %v2572 = vadd.f32 %v2341, %v2571
  %v2573 = vpop.f32.mrf.mxu0
  %2574 = vmatprep.mubr.bf16.mxu0 %v2489
  %2575 = vmatmul.mubr.bf16.gmra.mxu0 %v2403
  %v2576 = vpop.f32.mrf.mxu0
  %v2577 = vadd.f32 %v2341, %v2576
  %v2578 = vpop.f32.mrf.mxu0
  %v2579 = vpop.f32.mrf.mxu0
  %v2580 = vadd.f32 %v2341, %v2579
  %v2581 = vpop.f32.mrf.mxu0
  %2582 = vmatprep.mubr.bf16.mxu0 %v2492
  %2583 = vmatmul.mubr.bf16.gmra.mxu0 %v2405
  %v2584 = vpop.f32.mrf.mxu0
  %v2585 = vadd.f32 %v2341, %v2584
  %v2586 = vpop.f32.mrf.mxu0
  %v2587 = vpop.f32.mrf.mxu0
  %v2588 = vadd.f32 %v2341, %v2587
  %v2589 = vpop.f32.mrf.mxu0
  %2590 = vdwg.mxu0
  %v2591 = vmax.f32 %v2529, 0.0
  %v2592 = vmax.f32 %v2532, 0.0
  %v2593 = vmax.f32 %v2537, 0.0
  %v2594 = vmax.f32 %v2540, 0.0
  %v2595 = vmax.f32 %v2545, 0.0
  %v2596 = vmax.f32 %v2548, 0.0
  %v2597 = vmax.f32 %v2553, 0.0
  %v2598 = vmax.f32 %v2556, 0.0
  %v2599 = vmax.f32 %v2561, 0.0
  %v2600 = vmax.f32 %v2564, 0.0
  %v2601 = vmax.f32 %v2569, 0.0
  %v2602 = vmax.f32 %v2572, 0.0
  %v2603 = vmax.f32 %v2577, 0.0
  %v2604 = vmax.f32 %v2580, 0.0
  %v2605 = vmax.f32 %v2585, 0.0
  %v2606 = vmax.f32 %v2588, 0.0
  %2615 = vrot.lane.b32.xlu0 %v2591, 116
  %v2616 = vpop.permute.xlu0 %2615
  %2617 = vrot.lane.b32.xlu0 %v2592, 116
  %v2618 = vpop.permute.xlu0 %2617
  %2619 = vrot.lane.b32.xlu0 %v2593, 116
  %v2620 = vpop.permute.xlu0 %2619
  %2621 = vrot.lane.b32.xlu0 %v2594, 116
  %v2622 = vpop.permute.xlu0 %2621
  %2623 = vrot.lane.b32.xlu0 %v2595, 116
  %v2624 = vpop.permute.xlu0 %2623
  %2625 = vrot.lane.b32.xlu0 %v2596, 116
  %v2626 = vpop.permute.xlu0 %2625
  %2627 = vrot.lane.b32.xlu0 %v2597, 116
  %v2628 = vpop.permute.xlu0 %2627
  %2629 = vrot.lane.b32.xlu0 %v2598, 116
  %v2630 = vpop.permute.xlu0 %2629
  %v2639 = vmax.f32 %v2591, %v2616
  %v2640 = vmax.f32 %v2592, %v2618
  %v2641 = vmax.f32 %v2593, %v2620
  %v2642 = vmax.f32 %v2594, %v2622
  %v2643 = vmax.f32 %v2595, %v2624
  %v2644 = vmax.f32 %v2596, %v2626
  %v2645 = vmax.f32 %v2597, %v2628
  %v2646 = vmax.f32 %v2598, %v2630
  %2655 = vrot.lane.b32.xlu0 %v2599, 116
  %v2656 = vpop.permute.xlu0 %2655
  %2657 = vrot.lane.b32.xlu0 %v2600, 116
  %v2658 = vpop.permute.xlu0 %2657
  %2659 = vrot.lane.b32.xlu0 %v2601, 116
  %v2660 = vpop.permute.xlu0 %2659
  %2661 = vrot.lane.b32.xlu0 %v2602, 116
  %v2662 = vpop.permute.xlu0 %2661
  %2663 = vrot.lane.b32.xlu0 %v2603, 116
  %v2664 = vpop.permute.xlu0 %2663
  %2665 = vrot.lane.b32.xlu0 %v2604, 116
  %v2666 = vpop.permute.xlu0 %2665
  %2667 = vrot.lane.b32.xlu0 %v2605, 116
  %v2668 = vpop.permute.xlu0 %2667
  %2669 = vrot.lane.b32.xlu0 %v2606, 116
  %v2670 = vpop.permute.xlu0 %2669
  %v2679 = vmax.f32 %v2599, %v2656
  %v2680 = vmax.f32 %v2600, %v2658
  %v2681 = vmax.f32 %v2601, %v2660
  %v2682 = vmax.f32 %v2602, %v2662
  %v2683 = vmax.f32 %v2603, %v2664
  %v2684 = vmax.f32 %v2604, %v2666
  %v2685 = vmax.f32 %v2605, %v2668
  %v2686 = vmax.f32 %v2606, %v2670
  %v2687 = vmax.f32 %v2639, %v2679
  %v2688 = vmax.f32 %v2640, %v2680
  %v2689 = vmax.f32 %v2641, %v2681
  %v2690 = vmax.f32 %v2642, %v2682
  %v2691 = vmax.f32 %v2643, %v2683
  %v2692 = vmax.f32 %v2644, %v2684
  %v2693 = vmax.f32 %v2645, %v2685
  %v2694 = vmax.f32 %v2646, %v2686
  %v2695 = vpack.c.bf16 %v2688, %v2687
  %v2696 = vpack.c.bf16 %v2690, %v2689
  %v2697 = vpack.c.bf16 %v2692, %v2691
  %v2698 = vpack.c.bf16 %v2694, %v2693
  %v2700 = vunpack.c.l.b16 %v2695
  %v2701 = vunpack.c.h.b16 %v2695
  %v2702 = vpack.c.b16 %v2700, %v2700
  %v2703 = vpack.c.b16 %v2701, %v2701
  %vm2706 = vcmask 93184
  %2707 = vst.msk [vmem:[#allocation4] sm:$0xf] %vm2706, %v2702
  %2708 = vst.msk [vmem:[#allocation4 + $0x4] sm:$0xf] %vm2706, %v2703
  %v2710 = vunpack.c.l.b16 %v2696
  %v2711 = vunpack.c.h.b16 %v2696
  %v2712 = vpack.c.b16 %v2710, %v2710
  %v2713 = vpack.c.b16 %v2711, %v2711
  %2714 = vrot.lane.b32.xlu0 %v2712, 12
  %v2715 = vpop.permute.xlu0 %2714
  %2716 = vrot.lane.b32.xlu0 %v2713, 12
  %v2717 = vpop.permute.xlu0 %2716
  %vm2720 = vcmask 191584
  %2721 = vst.msk [vmem:[#allocation4] sm:$0xf] %vm2720, %v2715
  %2722 = vst.msk [vmem:[#allocation4 + $0x4] sm:$0xf] %vm2720, %v2717
  %v2724 = vunpack.c.l.b16 %v2697
  %v2725 = vunpack.c.h.b16 %v2697
  %v2726 = vpack.c.b16 %v2724, %v2724
  %v2727 = vpack.c.b16 %v2725, %v2725
  %2728 = vrot.lane.b32.xlu0 %v2726, 24
  %v2729 = vpop.permute.xlu0 %2728
  %2730 = vrot.lane.b32.xlu0 %v2727, 24
  %v2731 = vpop.permute.xlu0 %2730
  %vm2734 = vcmask 289984
  %2735 = vst.msk [vmem:[#allocation4] sm:$0xf] %vm2734, %v2729
  %2736 = vst.msk [vmem:[#allocation4 + $0x4] sm:$0xf] %vm2734, %v2731
  %v2738 = vunpack.c.l.b16 %v2698
  %v2739 = vunpack.c.h.b16 %v2698
  %v2740 = vpack.c.b16 %v2738, %v2738
  %v2741 = vpack.c.b16 %v2739, %v2739
  %2742 = vrot.lane.b32.xlu0 %v2740, 36
  %v2743 = vpop.permute.xlu0 %2742
  %2744 = vrot.lane.b32.xlu0 %v2741, 36
  %v2745 = vpop.permute.xlu0 %2744
  %vm2748 = vcmask 388384
  %2749 = vst.msk [vmem:[#allocation4] sm:$0xf] %vm2748, %v2743
  %2750 = vst.msk [vmem:[#allocation4 + $0x4] sm:$0xf] %vm2748, %v2745
  %v2751 = vld [vmem:[#allocation4] sm:$0xf]
  %v2752 = vld [vmem:[#allocation4 + $0x4] sm:$0xf]
  %v2753 = vld [vmem:[%s5] sm:$0xf]
  %v2754 = vld [vmem:[%s5 + $0x4] sm:$0xf]
  %v2755 = vld [vmem:[%s5 + $0x8] sm:$0xf]
  %v2756 = vld [vmem:[%s5 + $0xc] sm:$0xf]
  %v2757 = vld [vmem:[%s5 + $0x10] sm:$0xf]
  %v2758 = vld [vmem:[%s5 + $0x14] sm:$0xf]
  %v2759 = vld [vmem:[%s6] sm:$0x1]
  %v2761 = vlaneseq
  %v2762 = vshrl.u32 %v2761, 7
  %v2763 = vsub.s32 0, %v2762
  %v2764 = vrot.slane %v2759, %v2763
  %v2768 = vunpack.c.l.b16 %v2751
  %v2769 = vunpack.c.l.b16 %v2752
  %v2770 = vpack.c.b16 %v2769, %v2768
  %v2777 = vunpack.c.l.b16 %v2753
  %v2778 = vunpack.c.l.b16 %v2754
  %v2779 = vunpack.c.l.b16 %v2755
  %v2780 = vunpack.c.l.b16 %v2756
  %v2781 = vunpack.c.l.b16 %v2757
  %v2782 = vunpack.c.l.b16 %v2758
  %v2783 = vpack.c.b16 %v2778, %v2777
  %v2784 = vpack.c.b16 %v2780, %v2779
  %v2785 = vpack.c.b16 %v2782, %v2781
  %vm2789 = vcmask 392192
  %v2791 = vsel %vm2789, %v2770, 0
  %2793 = vmatprep.subr.bf16.mxu0 0
  %2794 = vmatpush1.bf16.msra.mxu0 0
  %2795 = vmatprep.subr.bf16.mxu0 0
  %2796 = vmatpush1.bf16.msra.mxu0 0
  %2797 = vmatprep.subr.bf16.mxu0 0
  %2798 = vmatpush1.bf16.msra.mxu0 0
  %2799 = vmatprep.subr.bf16.mxu0 0
  %2800 = vmatpush1.bf16.msra.mxu0 0
  %2801 = vmatprep.subr.bf16.mxu0 0
  %2802 = vmatpush1.bf16.msra.mxu0 0
  %2803 = vmatprep.subr.bf16.mxu0 0
  %2804 = vmatpush1.bf16.msra.mxu0 %v2785
  %2805 = vmatprep.subr.bf16.mxu0 0
  %2806 = vmatpush1.bf16.msra.mxu0 %v2784
  %2807 = vmatprep.subr.bf16.mxu0 0
  %2808 = vmatpush1.bf16.msra.mxu0 %v2783
  %2809 = vmatprep.subr.bf16.mxu0 0
  %2810 = vmatpush2.bf16.msra.mxu0 0
  %2811 = vmatprep.subr.bf16.mxu0 0
  %2812 = vmatpush2.bf16.msra.mxu0 0
  %2813 = vmatprep.subr.bf16.mxu0 0
  %2814 = vmatpush2.bf16.msra.mxu0 0
  %2815 = vmatprep.subr.bf16.mxu0 0
  %2816 = vmatpush2.bf16.msra.mxu0 0
  %2817 = vmatprep.subr.bf16.mxu0 0
  %2818 = vmatpush2.bf16.msra.mxu0 0
  %2819 = vmatprep.subr.bf16.mxu0 0
  %2820 = vmatpush2.bf16.msra.mxu0 0
  %2821 = vmatprep.subr.bf16.mxu0 0
  %2822 = vmatpush2.bf16.msra.mxu0 0
  %2823 = vmatprep.subr.bf16.mxu0 0
  %2824 = vmatpush2.bf16.msra.mxu0 0
  %2825 = vmatprep.mubr.bf16.mxu0 0
  %2826 = vmatmul.mubr.bf16.gmra.mxu0 %v2791
  %v2827 = vpop.f32.mrf.mxu0
  %v2828 = vadd.f32 %v2764, %v2827
  %v2829 = vpop.f32.mrf.mxu0
  %v2830 = vpop.f32.mrf.mxu0
  %v2831 = vadd.f32 %v2764, %v2830
  %v2832 = vpop.f32.mrf.mxu0
  %2833 = vdwg.mxu0
  %v2834 = vmax.f32 %v2828, 0.0
  %v2835 = vmax.f32 %v2831, 0.0
  %v2836 = vpack.c.bf16 %v2835, %v2834
  %v2837 = vld [vmem:[%s7] sm:$0xf]
  %v2838 = vld [vmem:[%s7 + $0x4] sm:$0xf]
  %v2839 = vld [vmem:[%s7 + $0x8] sm:$0xf]
  %v2840 = vld [vmem:[%s7 + $0xc] sm:$0xf]
  %v2841 = vld [vmem:[%s7 + $0x10] sm:$0xf]
  %v2842 = vld [vmem:[%s7 + $0x14] sm:$0xf]
  %v2843 = vld [vmem:[%s7 + $0x18] sm:$0xf]
  %v2844 = vld [vmem:[%s7 + $0x1c] sm:$0xf]
  %v2845 = vld [vmem:[%s7 + $0x20] sm:$0xf]
  %v2846 = vld [vmem:[%s7 + $0x24] sm:$0xf]
  %v2847 = vld [vmem:[%s7 + $0x28] sm:$0xf]
  %v2848 = vld [vmem:[%s7 + $0x2c] sm:$0xf]
  %v2849 = vld [vmem:[%s7 + $0x30] sm:$0xf]
  %v2850 = vld [vmem:[%s7 + $0x34] sm:$0xf]
  %v2851 = vld [vmem:[%s7 + $0x38] sm:$0xf]
  %v2852 = vld [vmem:[%s7 + $0x3c] sm:$0xf]
  %v2853 = vld [vmem:[%s8] sm:$0x1]
  %v2855 = vlaneseq
  %v2856 = vshrl.u32 %v2855, 7
  %v2857 = vsub.s32 0, %v2856
  %v2858 = vrot.slane %v2853, %v2857
  %v2876 = vunpack.c.l.b16 %v2837
  %v2877 = vunpack.c.l.b16 %v2838
  %v2878 = vunpack.c.l.b16 %v2839
  %v2879 = vunpack.c.l.b16 %v2840
  %v2880 = vunpack.c.l.b16 %v2841
  %v2881 = vunpack.c.l.b16 %v2842
  %v2882 = vunpack.c.l.b16 %v2843
  %v2883 = vunpack.c.l.b16 %v2844
  %v2884 = vunpack.c.l.b16 %v2845
  %v2885 = vunpack.c.l.b16 %v2846
  %v2886 = vunpack.c.l.b16 %v2847
  %v2887 = vunpack.c.l.b16 %v2848
  %v2888 = vunpack.c.l.b16 %v2849
  %v2889 = vunpack.c.l.b16 %v2850
  %v2890 = vunpack.c.l.b16 %v2851
  %v2891 = vunpack.c.l.b16 %v2852
  %v2892 = vpack.c.b16 %v2877, %v2876
  %v2893 = vpack.c.b16 %v2879, %v2878
  %v2894 = vpack.c.b16 %v2881, %v2880
  %v2895 = vpack.c.b16 %v2883, %v2882
  %v2896 = vpack.c.b16 %v2885, %v2884
  %v2897 = vpack.c.b16 %v2887, %v2886
  %v2898 = vpack.c.b16 %v2889, %v2888
  %v2899 = vpack.c.b16 %v2891, %v2890
  %2908 = vmatprep.subr.bf16.mxu0 0
  %2909 = vmatpush1.bf16.msra.mxu0 %v2899
  %2910 = vmatprep.subr.bf16.mxu0 0
  %2911 = vmatpush1.bf16.msra.mxu0 %v2898
  %2912 = vmatprep.subr.bf16.mxu0 0
  %2913 = vmatpush1.bf16.msra.mxu0 %v2897
  %2914 = vmatprep.subr.bf16.mxu0 0
  %2915 = vmatpush1.bf16.msra.mxu0 %v2896
  %2916 = vmatprep.subr.bf16.mxu0 0
  %2917 = vmatpush1.bf16.msra.mxu0 %v2895
  %2918 = vmatprep.subr.bf16.mxu0 0
  %2919 = vmatpush1.bf16.msra.mxu0 %v2894
  %2920 = vmatprep.subr.bf16.mxu0 0
  %2921 = vmatpush1.bf16.msra.mxu0 %v2893
  %2922 = vmatprep.subr.bf16.mxu0 0
  %2923 = vmatpush1.bf16.msra.mxu0 %v2892
  %2924 = vmatprep.subr.bf16.mxu0 0
  %2925 = vmatpush2.bf16.msra.mxu0 0
  %2926 = vmatprep.subr.bf16.mxu0 0
  %2927 = vmatpush2.bf16.msra.mxu0 0
  %2928 = vmatprep.subr.bf16.mxu0 0
  %2929 = vmatpush2.bf16.msra.mxu0 0
  %2930 = vmatprep.subr.bf16.mxu0 0
  %2931 = vmatpush2.bf16.msra.mxu0 0
  %2932 = vmatprep.subr.bf16.mxu0 0
  %2933 = vmatpush2.bf16.msra.mxu0 0
  %2934 = vmatprep.subr.bf16.mxu0 0
  %2935 = vmatpush2.bf16.msra.mxu0 0
  %2936 = vmatprep.subr.bf16.mxu0 0
  %2937 = vmatpush2.bf16.msra.mxu0 0
  %2938 = vmatprep.subr.bf16.mxu0 0
  %2939 = vmatpush2.bf16.msra.mxu0 0
  %2940 = vmatprep.mubr.bf16.mxu0 0
  %2941 = vmatmul.mubr.bf16.gmra.mxu0 %v2836
  %v2942 = vpop.f32.mrf.mxu0
  %v2943 = vadd.f32 %v2858, %v2942
  %v2944 = vpop.f32.mrf.mxu0
  %v2945 = vpop.f32.mrf.mxu0
  %v2946 = vadd.f32 %v2858, %v2945
  %v2947 = vpop.f32.mrf.mxu0
  %2948 = vdwg.mxu0
  %v2949 = vmax.f32 %v2943, 0.0
  %v2950 = vmax.f32 %v2946, 0.0
  %v2951 = vpack.c.bf16 %v2950, %v2949
  %v2952 = vld [vmem:[%s9] sm:$0xf]
  %v2953 = vld [vmem:[%s9 + $0x4] sm:$0xf]
  %v2954 = vld [vmem:[%s9 + $0x8] sm:$0xf]
  %v2955 = vld [vmem:[%s9 + $0xc] sm:$0xf]
  %v2956 = vld [vmem:[%s10] sm:$0x1]
  %v2958 = vlaneseq
  %v2959 = vshrl.u32 %v2958, 7
  %v2960 = vsub.s32 0, %v2959
  %v2961 = vrot.slane %v2956, %v2960
  %v2967 = vunpack.c.l.b16 %v2952
  %v2968 = vunpack.c.l.b16 %v2953
  %v2969 = vunpack.c.l.b16 %v2954
  %v2970 = vunpack.c.l.b16 %v2955
  %v2971 = vpack.c.b16 %v2968, %v2967
  %v2972 = vpack.c.b16 %v2970, %v2969
  %vm2975 = vcmask 261120
  %v2977 = vsel %vm2975, %v2951, 0
  %2979 = vmatprep.subr.bf16.mxu0 0
  %2980 = vmatpush1.bf16.msra.mxu0 0
  %2981 = vmatprep.subr.bf16.mxu0 0
  %2982 = vmatpush1.bf16.msra.mxu0 0
  %2983 = vmatprep.subr.bf16.mxu0 0
  %2984 = vmatpush1.bf16.msra.mxu0 0
  %2985 = vmatprep.subr.bf16.mxu0 0
  %2986 = vmatpush1.bf16.msra.mxu0 0
  %2987 = vmatprep.subr.bf16.mxu0 0
  %2988 = vmatpush1.bf16.msra.mxu0 0
  %2989 = vmatprep.subr.bf16.mxu0 0
  %2990 = vmatpush1.bf16.msra.mxu0 0
  %2991 = vmatprep.subr.bf16.mxu0 0
  %2992 = vmatpush1.bf16.msra.mxu0 %v2972
  %2993 = vmatprep.subr.bf16.mxu0 0
  %2994 = vmatpush1.bf16.msra.mxu0 %v2971
  %2995 = vmatprep.subr.bf16.mxu0 0
  %2996 = vmatpush2.bf16.msra.mxu0 0
  %2997 = vmatprep.subr.bf16.mxu0 0
  %2998 = vmatpush2.bf16.msra.mxu0 0
  %2999 = vmatprep.subr.bf16.mxu0 0
  %3000 = vmatpush2.bf16.msra.mxu0 0
  %3001 = vmatprep.subr.bf16.mxu0 0
  %3002 = vmatpush2.bf16.msra.mxu0 0
  %3003 = vmatprep.subr.bf16.mxu0 0
  %3004 = vmatpush2.bf16.msra.mxu0 0
  %3005 = vmatprep.subr.bf16.mxu0 0
  %3006 = vmatpush2.bf16.msra.mxu0 0
  %3007 = vmatprep.subr.bf16.mxu0 0
  %3008 = vmatpush2.bf16.msra.mxu0 0
  %3009 = vmatprep.subr.bf16.mxu0 0
  %3010 = vmatpush2.bf16.msra.mxu0 0
  %3011 = vmatprep.mubr.bf16.mxu0 0
  %3012 = vmatmul.mubr.bf16.gmra.mxu0 %v2977
  %v3013 = vpop.f32.mrf.mxu0
  %v3014 = vadd.f32 %v2961, %v3013
  %v3015 = vpop.f32.mrf.mxu0
  %v3016 = vpop.f32.mrf.mxu0
  %v3017 = vadd.f32 %v2961, %v3016
  %v3018 = vpop.f32.mrf.mxu0
  %3019 = vdwg.mxu0
  %v3020 = vand.u32 2147483647, %v3014
  %v3021 = vand.u32 2147483647, %v3017
  %v3022 = vsub.f32 0.0, %v3020
  %v3023 = vsub.f32 0.0, %v3021
  %v3024 = vmul.f32 %v3022, 1.442695
  %v3025 = vpow.pop %v3024
  %v3026 = vmul.f32 %v3023, 1.442695
  %v3027 = vpow.pop %v3026
  %v3028 = vadd.f32 %v3025, 1.0
  %v3029 = vadd.f32 %v3027, 1.0
  %v3030 = vrcp.pop %v3028
  %v3031 = vrcp.pop %v3029
  %vm3032 = vcmp.ge.f32.partialorder %v3014, 0.0
  %vm3033 = vcmp.ge.f32.partialorder %v3017, 0.0
  %v3034 = vmul.f32 %v3025, %v3030
  %v3035 = vmul.f32 %v3027, %v3031
  %v3036 = vsel %vm3032, %v3030, %v3034
  %v3037 = vsel %vm3033, %v3031, %v3035
  %v3038 = vmax.f32 %v3036, 0.0
  %v3039 = vmax.f32 %v3037, 0.0
  %v3040 = vmin.f32 %v3038, 1.0
  %v3041 = vmin.f32 %v3039, 1.0
  %vm3042 = vcmask 15360
  %3043 = vst.msk [vmem:[%s11] sm:$0xff] %vm3042, %v3040
  %3044 = vst.msk [vmem:[%s11 + $0x8] sm:$0xff] %vm3042, %v3041
  // Predicated region
  $region46: #{cnn_forward.1} parent=0 // pred_check
    _
  $region47: #{cnn_forward.1} parent=0 // pred_check_branch
    %3046 = sbr.rel (0) target = $region49
  $region48: #{cnn_forward.1} parent=0 // pred_region
    _
  $region49: #{cnn_forward.1} parent=0 // pred_fallthru
    _
  // Predicated region
  $region50: #{cnn_forward.1} parent=0 // pred_check
    _
  $region51: #{cnn_forward.1} parent=0 // pred_check_branch
    %3048 = sbr.rel (0) target = $region53
  $region52: #{cnn_forward.1} parent=0 // pred_region
    _
  $region53: #{cnn_forward.1} parent=0 // pred_fallthru
    _

</llo_original>
